<compile_context>
chip_gen: v7x
topology: tpu7x:2x2x1
jax: 0.10.0
libtpu: 0.0.40
codegen_flags: <defaults>
</compile_context>

<pallas_src>
import math
import functools

import jax
import jax.numpy as jnp
from jax.experimental import pallas as pl
from jax.experimental.pallas import tpu as pltpu


def _cross_attn_kernel(x_ref, y_ref,
                       wq_ref, bq_ref,
                       wkv_ref, bkv_ref,
                       wo_ref, bo_ref,
                       o_ref,
                       q_s, k_s, v_s, attn_s,
                       *, n_heads: int, lk_block: int,
                       exp_in_cdt: bool, exact_recip: bool):
    bt, lq, de = x_ref.shape
    _, lk, dc = y_ref.shape
    dh = de // n_heads
    cdt = x_ref.dtype                       # compute dtype (bf16 fast path if inputs are bf16)
    n_lk = lk // lk_block

    # --- Projections: single large (bt*L, D) x (D, D') MXU matmuls, f32 accumulation.
    x2 = x_ref[...].reshape(bt * lq, de)
    y2 = y_ref[...].reshape(bt * lk, dc)
    q2 = jnp.dot(x2, wq_ref[...], preferred_element_type=jnp.float32) + bq_ref[...]
    kv2 = jnp.dot(y2, wkv_ref[...], preferred_element_type=jnp.float32) + bkv_ref[...]

    # Stage q/k/v into VMEM scratch: the head loop then re-loads only one head's tiles
    # at a time instead of keeping the full projection slabs live across all heads.
    q_s[...] = q2.astype(cdt).reshape(bt, lq, de)           # pre-scaled by 1/sqrt(d_head)
    k_s[...] = kv2[:, :dc].astype(cdt).reshape(bt, lk, dc)
    v_s[...] = kv2[:, dc:].astype(cdt).reshape(bt, lk, dc)

    # --- Per-head attention, flash-style online softmax tiled over Lk.
    # Static loops: n_heads and the Lk block count are small trace-time constants, and
    # static head slices keep lane offsets constant (no dynamic lane indexing).
    for h in range(n_heads):
        sl = slice(h * dh, (h + 1) * dh)
        qh = q_s[:, :, sl]                                   # (bt, lq, dh)

        m_i = jnp.full((bt, lq, 1), -jnp.inf, jnp.float32)
        l_i = jnp.zeros((bt, lq, 1), jnp.float32)
        acc = jnp.zeros((bt, lq, dh), jnp.float32)

        for t in range(n_lk):
            ks = k_s[:, t * lk_block:(t + 1) * lk_block, sl]   # (bt, blk, dh)
            vs = v_s[:, t * lk_block:(t + 1) * lk_block, sl]
            s = jnp.einsum('bqd,bkd->bqk', qh, ks,
                           preferred_element_type=jnp.float32)  # (bt, lq, blk), pre-scaled
            m_new = jnp.maximum(m_i, jnp.max(s, axis=-1, keepdims=True))
            alpha = jnp.exp(m_i - m_new)
            s = s - m_new
            if exp_in_cdt:
                # bf16 exp path (v6e/v7x bf16 EUP): relieves the single EUP slot and
                # drops a full-panel f32->bf16 cast.  Row-sum still accumulates in f32.
                p = jnp.exp(s.astype(cdt))
                row = jnp.sum(p, axis=-1, keepdims=True, dtype=jnp.float32)
            else:
                p = jnp.exp(s)
                row = jnp.sum(p, axis=-1, keepdims=True)
            l_i = alpha * l_i + row
            acc = alpha * acc + jnp.einsum('bqk,bkd->bqd', p.astype(cdt), vs,
                                           preferred_element_type=jnp.float32)
            m_i = m_new

        # Fold 1/sum into the small (lq, dh) head output, not the (lq, lk) score panel.
        inv = (1.0 / l_i) if exact_recip else pl.reciprocal(l_i, approx=True)
        attn_s[:, :, sl] = (acc * inv).astype(cdt)

    # --- Output projection from the assembled slab as one full-width matmul.
    attn2 = attn_s[...].reshape(bt * lq, de)
    out2 = jnp.dot(attn2, wo_ref[...], preferred_element_type=jnp.float32) + bo_ref[...]
    o_ref[...] = out2.reshape(bt, lq, de).astype(o_ref.dtype)


def _tpu_hw_info():
    """Best-effort (physical_vmem_bytes, tensorcores_per_chip, bf16_vpu_eup)."""
    vmem = None
    try:
        info = pltpu.get_tpu_info()
        vmem = int(getattr(info, "vmem_capacity_bytes"))
    except Exception:
        vmem = None
    kind = ""
    try:
        kind = jax.devices()[0].device_kind.lower()
    except Exception:
        pass
    compact = kind.replace(" ", "")
    is_v7 = ("v7" in compact) or ("tpu7" in compact)
    num_tc = 2 if is_v7 else 1                    # v5e/v6e: single TensorCore per chip
    if vmem is None or vmem <= 0:
        vmem = (64 if is_v7 else 128) * 1024 * 1024
    bf16_fast = is_v7 or ("v6" in compact)        # bf16 VPU/EUP on v6e/v7x only
    return vmem, num_tc, bf16_fast


def _pick_lk_block(lk: int, max_block: int = 1024) -> int:
    """Largest divisor of lk that is <= max_block, preferring multiples of 128."""
    if lk <= max_block:
        return lk
    best, best128 = 1, 0
    for blk in range(1, max_block + 1):
        if lk % blk == 0:
            best = blk
            if blk % 128 == 0:
                best128 = blk
    blk = best128 if best128 else best
    # Don't shred a ragged Lk into tiny panels; fall back to the full panel instead.
    return blk if blk >= 128 else lk


def cross_attention(x, y, params, *, n_heads: int, block_b=None, lk_block=None,
                    exact_softmax_recip: bool = False):
    """x: (B, Lq, d_embed), y: (B, Lk, d_cross).  Returns (B, Lq, d_embed)."""
    B, Lq, d_embed = x.shape
    By, Lk, d_cross = y.shape
    assert By == B, "batch mismatch between x and y"
    assert d_embed % n_heads == 0, "d_embed must be divisible by n_heads"
    # The module's reshape of k/v into (n_heads, d_embed // n_heads) requires this.
    assert d_cross == d_embed, "CrossAttention reshape semantics require d_cross == d_embed"
    d_head = d_embed // n_heads
    scale = 1.0 / math.sqrt(d_head)
    cdt = x.dtype
    isz = x.dtype.itemsize

    wq, bq, wk, bk, wv, bv, wo, bo = params
    # Pre-transpose weights once in XLA; fold the softmax scale into the Q projection;
    # fuse K|V into a single weight; weights in the compute dtype, biases in f32 (added
    # to the f32 accumulator); biases as (1, D) rows for a clean 2-D VMEM layout.
    wq_t = (wq.T * scale).astype(cdt)                                   # (De, De)
    bq_s = (bq * scale).astype(jnp.float32).reshape(1, d_embed)
    wkv_t = jnp.concatenate([wk.T, wv.T], axis=1).astype(cdt)           # (Dc, 2*Dc)
    bkv = jnp.concatenate([bk, bv]).astype(jnp.float32).reshape(1, 2 * d_cross)
    wo_t = wo.T.astype(cdt)                                             # (De, De)
    bo_2 = bo.astype(jnp.float32).reshape(1, d_embed)

    # ---- Generation-aware VMEM budget (v7x: 64 MiB physical -> ~48 MiB budget;
    # v5e/v6e: 128 MiB physical -> ~96 MiB budget).
    vmem_phys, num_tc, bf16_fast = _tpu_hw_info()
    budget = max(min(vmem_phys * 3 // 4, 100 * 1024 * 1024), 32 * 1024 * 1024)

    # ---- Lk tiling for the flash-style online softmax (bounds the f32 score panel).
    if lk_block is None:
        lk_block = _pick_lk_block(Lk)
    lk_block = max(1, min(int(lk_block), Lk))
    while Lk % lk_block:
        lk_block -= 1

    # ---- Batch-tile size, accounting for everything resident per grid step:
    # 2x pipelined x/y/out blocks, q/k/v/attn VMEM scratch, f32 projection accumulators,
    # the per-head f32 score/prob panels, and the resident weights (conservatively
    # counted as double-buffered in case pl.Buffered(1) is not honored).
    per_b = (2 * Lq * d_embed * isz                       # x block (double-buffered)
             + 2 * Lk * d_cross * isz                     # y block (double-buffered)
             + 2 * Lq * d_embed * isz                     # out block (double-buffered)
             + (2 * Lq * d_embed + 2 * Lk * d_cross) * isz  # q/k/v/attn scratch
             + (Lq * d_embed + 2 * Lk * d_cross) * 4        # f32 projection accumulators
             + 3 * Lq * lk_block * 4)                       # score/prob panels + stats
    w_bytes = 2 * ((2 * d_embed * d_embed + 2 * d_cross * d_cross) * isz
                   + (2 * d_embed + 2 * d_cross) * 4)
    if block_b is None:
        avail = max(budget - w_bytes, per_b)
        block_b = max(1, min(B, avail // per_b))
        if num_tc > 1 and B >= num_tc:
            # Keep >= num_tc grid steps so the "parallel" batch axis can shard across
            # TensorCores (v7x).  Single-TC chips (v5e/v6e) take the full batch tile.
            block_b = min(block_b, max(1, B // num_tc))
    block_b = max(1, min(int(block_b), B))
    while B % block_b:
        block_b -= 1
    nb = B // block_b

    exp_in_cdt = bool(bf16_fast and cdt == jnp.bfloat16)

    kernel = functools.partial(_cross_attn_kernel, n_heads=n_heads,
                               lk_block=lk_block, exp_in_cdt=exp_in_cdt,
                               exact_recip=exact_softmax_recip)

    def _batched(seq, feat):
        return pl.BlockSpec((block_b, seq, feat), lambda b: (b, 0, 0))

    def _build(single_buffer_weights: bool):
        def resident(a):
            nd = a.ndim
            idx = lambda b, _nd=nd: (0,) * _nd
            if single_buffer_weights:
                # Constant block index: one VMEM buffer is enough; default 2-deep
                # pipelining would only double the weights' VMEM footprint.
                return pl.BlockSpec(a.shape, idx, pipeline_mode=pl.Buffered(1))
            return pl.BlockSpec(a.shape, idx)

        return pl.pallas_call(
            kernel,
            out_shape=jax.ShapeDtypeStruct((B, Lq, d_embed), x.dtype),
            grid_spec=pltpu.PrefetchScalarGridSpec(
                num_scalar_prefetch=0,
                grid=(nb,),
                in_specs=[
                    _batched(Lq, d_embed),                 # x
                    _batched(Lk, d_cross),                 # y
                    resident(wq_t), resident(bq_s),
                    resident(wkv_t), resident(bkv),
                    resident(wo_t), resident(bo_2),
                ],
                out_specs=_batched(Lq, d_embed),
                scratch_shapes=[
                    pltpu.VMEM((block_b, Lq, d_embed), cdt),   # q (head-sliced reads)
                    pltpu.VMEM((block_b, Lk, d_cross), cdt),   # k
                    pltpu.VMEM((block_b, Lk, d_cross), cdt),   # v
                    pltpu.VMEM((block_b, Lq, d_embed), cdt),   # per-head output slab
                ]),
            compiler_params=pltpu.CompilerParams(
                dimension_semantics=("parallel",),
                vmem_limit_bytes=int(budget),
            ),
        )

    args = (x, y, wq_t, bq_s, wkv_t, bkv, wo_t, bo_2)
    try:
        return _build(True)(*args)
    except Exception:
        # pipeline_mode=pl.Buffered(1) not supported by this JAX/Mosaic build; fall back
        # to the default double-buffered resident weights (correctness unchanged).
        return _build(False)(*args)


def _reference(x, y, params, *, n_heads: int):
    """Pure-JAX reference mirroring the PyTorch forward."""
    wq, bq, wk, bk, wv, bv, wo, bo = params
    B, Lq, D = x.shape
    _, Lk, Dc = y.shape
    d_head = D // n_heads
    q = x @ wq.T + bq
    k = y @ wk.T + bk
    v = y @ wv.T + bv
    q = q.reshape(B, Lq, n_heads, d_head).transpose(0, 2, 1, 3)
    k = k.reshape(B, Lk, n_heads, d_head).transpose(0, 2, 1, 3)
    v = v.reshape(B, Lk, n_heads, d_head).transpose(0, 2, 1, 3)
    w = jnp.einsum("bhqd,bhkd->bhqk", q, k) / math.sqrt(d_head)
    w = jax.nn.softmax(w, axis=-1)
    o = jnp.einsum("bhqk,bhkd->bhqd", w, v)
    o = o.transpose(0, 2, 1, 3).reshape(B, Lq, D)
    return o @ wo.T + bo


def _init_params(key, d_embed, d_cross):
    ks = jax.random.split(key, 8)
    def lin(kw, kb, out_f, in_f):
        bound = 1.0 / math.sqrt(in_f)
        w = jax.random.uniform(kw, (out_f, in_f), jnp.float32, -bound, bound)
        b = jax.random.uniform(kb, (out_f,), jnp.float32, -bound, bound)
        return w, b
    wq, bq = lin(ks[0], ks[1], d_embed, d_embed)
    wk, bk = lin(ks[2], ks[3], d_cross, d_cross)
    wv, bv = lin(ks[4], ks[5], d_cross, d_cross)
    wo, bo = lin(ks[6], ks[7], d_embed, d_embed)
    return (wq, bq, wk, bk, wv, bv, wo, bo)


if __name__ == "__main__":
    B, Lq, Lk = 2, 16, 8
    n_heads, d_embed = 4, 32
    d_cross = d_embed  # required by the module's reshape semantics

    key = jax.random.PRNGKey(0)
    kx, ky, kp = jax.random.split(key, 3)
    x = jax.random.normal(kx, (B, Lq, d_embed), jnp.float32)
    y = jax.random.normal(ky, (B, Lk, d_cross), jnp.float32)
    params = _init_params(kp, d_embed, d_cross)

    out = cross_attention(x, y, params, n_heads=n_heads)
    out = jax.block_until_ready(out)

    ref = _reference(x, y, params, n_heads=n_heads)
    assert out.shape == (B, Lq, d_embed)
    # Slightly relaxed tolerance: softmax normalization uses the EUP approximate reciprocal
    # by default (pass exact_softmax_recip=True for exact parity with the PyTorch module).
    assert jnp.allclose(out, ref, atol=2e-3, rtol=2e-3), "mismatch vs reference"
    print("KERNEL_OK")
</pallas_src>

<mosaic_0001>
module attributes {stable_mosaic.version = 11 : i64} {
  func.func @_cross_attn_kernel(%arg0: i32, %arg1: memref<2x16x32xf32, #tpu.memory_space<vmem>>, %arg2: memref<2x8x32xf32, #tpu.memory_space<vmem>>, %arg3: memref<32x32xf32, #tpu.memory_space<vmem>>, %arg4: memref<1x32xf32, #tpu.memory_space<vmem>>, %arg5: memref<32x64xf32, #tpu.memory_space<vmem>>, %arg6: memref<1x64xf32, #tpu.memory_space<vmem>>, %arg7: memref<32x32xf32, #tpu.memory_space<vmem>>, %arg8: memref<1x32xf32, #tpu.memory_space<vmem>>, %arg9: memref<2x16x32xf32, #tpu.memory_space<vmem>>, %arg10: memref<2x16x32xf32, #tpu.memory_space<vmem>>, %arg11: memref<2x8x32xf32, #tpu.memory_space<vmem>>, %arg12: memref<2x8x32xf32, #tpu.memory_space<vmem>>, %arg13: memref<2x16x32xf32, #tpu.memory_space<vmem>>) attributes {dimension_semantics = [#tpu.dimension_semantics<parallel>], iteration_bounds = array<i64: 1>, scalar_prefetch = 0 : i64, scratch_operands = 4 : i64, tpu.core_type = #tpu.core_type<tc>, window_params = [{transform_indices = @transform_0, window_bounds = array<i64: 2, 16, 32>}, {transform_indices = @transform_1, window_bounds = array<i64: 2, 8, 32>}, {pipeline_mode = #tpu.pipeline_mode<synchronous>, transform_indices = @transform_2, window_bounds = array<i64: 32, 32>}, {pipeline_mode = #tpu.pipeline_mode<synchronous>, transform_indices = @transform_3, window_bounds = array<i64: 1, 32>}, {pipeline_mode = #tpu.pipeline_mode<synchronous>, transform_indices = @transform_4, window_bounds = array<i64: 32, 64>}, {pipeline_mode = #tpu.pipeline_mode<synchronous>, transform_indices = @transform_5, window_bounds = array<i64: 1, 64>}, {pipeline_mode = #tpu.pipeline_mode<synchronous>, transform_indices = @transform_6, window_bounds = array<i64: 32, 32>}, {pipeline_mode = #tpu.pipeline_mode<synchronous>, transform_indices = @transform_7, window_bounds = array<i64: 1, 32>}, {transform_indices = @transform_8, window_bounds = array<i64: 2, 16, 32>}]} {
    %c0 = arith.constant 0 : index
    %c0_0 = arith.constant 0 : index
    %c0_1 = arith.constant 0 : index
    %0 = vector.load %arg1[%c0, %c0_0, %c0_1] : memref<2x16x32xf32, #tpu.memory_space<vmem>>, vector<2x16x32xf32>
    %1 = vector.shape_cast %0 : vector<2x16x32xf32> to vector<32x32xf32>
    %c0_2 = arith.constant 0 : index
    %c0_3 = arith.constant 0 : index
    %c0_4 = arith.constant 0 : index
    %2 = vector.load %arg2[%c0_2, %c0_3, %c0_4] : memref<2x8x32xf32, #tpu.memory_space<vmem>>, vector<2x8x32xf32>
    %3 = vector.shape_cast %2 : vector<2x8x32xf32> to vector<16x32xf32>
    %c0_5 = arith.constant 0 : index
    %c0_6 = arith.constant 0 : index
    %4 = vector.load %arg3[%c0_5, %c0_6] : memref<32x32xf32, #tpu.memory_space<vmem>>, vector<32x32xf32>
    %cst = arith.constant dense<0.000000e+00> : vector<32x32xf32>
    %5 = tpu.matmul %1, %4, %cst {dimension_numbers = #tpu.dot_dimension_numbers<[1], [0], [0], [1], [0, 0, 1, 1], [], []>} : vector<32x32xf32>, vector<32x32xf32>, vector<32x32xf32> -> vector<32x32xf32>
    %c0_7 = arith.constant 0 : index
    %c0_8 = arith.constant 0 : index
    %6 = vector.load %arg4[%c0_7, %c0_8] : memref<1x32xf32, #tpu.memory_space<vmem>>, vector<1x32xf32>
    %7 = vector.broadcast %6 : vector<1x32xf32> to vector<32x32xf32>
    %8 = arith.addf %5, %7 : vector<32x32xf32>
    %c0_9 = arith.constant 0 : index
    %c0_10 = arith.constant 0 : index
    %9 = vector.load %arg5[%c0_9, %c0_10] : memref<32x64xf32, #tpu.memory_space<vmem>>, vector<32x64xf32>
    %cst_11 = arith.constant dense<0.000000e+00> : vector<16x64xf32>
    %10 = tpu.matmul %3, %9, %cst_11 {dimension_numbers = #tpu.dot_dimension_numbers<[1], [0], [0], [1], [0, 0, 1, 1], [], []>} : vector<16x32xf32>, vector<32x64xf32>, vector<16x64xf32> -> vector<16x64xf32>
    %c0_12 = arith.constant 0 : index
    %c0_13 = arith.constant 0 : index
    %11 = vector.load %arg6[%c0_12, %c0_13] : memref<1x64xf32, #tpu.memory_space<vmem>>, vector<1x64xf32>
    %12 = vector.broadcast %11 : vector<1x64xf32> to vector<16x64xf32>
    %13 = arith.addf %10, %12 : vector<16x64xf32>
    %14 = vector.shape_cast %8 : vector<32x32xf32> to vector<2x16x32xf32>
    %c0_14 = arith.constant 0 : index
    %c0_15 = arith.constant 0 : index
    %c0_16 = arith.constant 0 : index
    %15 = vector.load %arg10[%c0_14, %c0_15, %c0_16] : memref<2x16x32xf32, #tpu.memory_space<vmem>>, vector<2x16x32xf32>
    tpu.vector_store %arg10[%c0_14, %c0_15, %c0_16], %14 {strides = array<i32>} : memref<2x16x32xf32, #tpu.memory_space<vmem>>, vector<2x16x32xf32>,
    %16 = vector.extract_strided_slice %13 {offsets = [0, 0], sizes = [16, 32], strides = [1, 1]} : vector<16x64xf32> to vector<16x32xf32>
    %17 = vector.shape_cast %16 : vector<16x32xf32> to vector<2x8x32xf32>
    %c0_17 = arith.constant 0 : index
    %c0_18 = arith.constant 0 : index
    %c0_19 = arith.constant 0 : index
    %18 = vector.load %arg11[%c0_17, %c0_18, %c0_19] : memref<2x8x32xf32, #tpu.memory_space<vmem>>, vector<2x8x32xf32>
    tpu.vector_store %arg11[%c0_17, %c0_18, %c0_19], %17 {strides = array<i32>} : memref<2x8x32xf32, #tpu.memory_space<vmem>>, vector<2x8x32xf32>,
    %19 = vector.extract_strided_slice %13 {offsets = [0, 32], sizes = [16, 32], strides = [1, 1]} : vector<16x64xf32> to vector<16x32xf32>
    %20 = vector.shape_cast %19 : vector<16x32xf32> to vector<2x8x32xf32>
    %c0_20 = arith.constant 0 : index
    %c0_21 = arith.constant 0 : index
    %c0_22 = arith.constant 0 : index
    %21 = vector.load %arg12[%c0_20, %c0_21, %c0_22] : memref<2x8x32xf32, #tpu.memory_space<vmem>>, vector<2x8x32xf32>
    tpu.vector_store %arg12[%c0_20, %c0_21, %c0_22], %20 {strides = array<i32>} : memref<2x8x32xf32, #tpu.memory_space<vmem>>, vector<2x8x32xf32>,
    %c0_23 = arith.constant 0 : index
    %c0_24 = arith.constant 0 : index
    %c0_25 = arith.constant 0 : index
    %22 = vector.load %arg10[%c0_23, %c0_24, %c0_25] : memref<2x16x32xf32, #tpu.memory_space<vmem>>, vector<2x16x8xf32>
    %cst_26 = arith.constant 0xFF800000 : f32
    %23 = vector.broadcast %cst_26 : f32 to vector<2x16x1xf32>
    %cst_27 = arith.constant 0.000000e+00 : f32
    %24 = vector.broadcast %cst_27 : f32 to vector<2x16x1xf32>
    %cst_28 = arith.constant 0.000000e+00 : f32
    %25 = vector.broadcast %cst_28 : f32 to vector<2x16x8xf32>
    %c0_29 = arith.constant 0 : index
    %c0_30 = arith.constant 0 : index
    %c0_31 = arith.constant 0 : index
    %26 = vector.load %arg11[%c0_29, %c0_30, %c0_31] : memref<2x8x32xf32, #tpu.memory_space<vmem>>, vector<2x8x8xf32>
    %c0_32 = arith.constant 0 : index
    %c0_33 = arith.constant 0 : index
    %c0_34 = arith.constant 0 : index
    %27 = vector.load %arg12[%c0_32, %c0_33, %c0_34] : memref<2x8x32xf32, #tpu.memory_space<vmem>>, vector<2x8x8xf32>
    "tpu.trace_start"() <{level = 10 : i32, message = "bqd,bkd->bqk"}> : () -> ()
    %cst_35 = arith.constant dense<0.000000e+00> : vector<2x16x8xf32>
    %28 = tpu.matmul %22, %26, %cst_35 {dimension_numbers = #tpu.dot_dimension_numbers<[2], [2], [1], [1], [0, 0, 0, 1, 1, 1], [0], [0]>} : vector<2x16x8xf32>, vector<2x8x8xf32>, vector<2x16x8xf32> -> vector<2x16x8xf32>
    "tpu.trace_stop"() : () -> ()
    %cst_36 = arith.constant dense<0xFF800000> : vector<2x16xf32>
    %29 = vector.multi_reduction <maximumf>, %28, %cst_36 [2] : vector<2x16x8xf32> to vector<2x16xf32>
    %30 = vector.shape_cast %29 : vector<2x16xf32> to vector<2x16x1xf32>
    %31 = arith.maximumf %23, %30 : vector<2x16x1xf32>
    %32 = arith.subf %23, %31 : vector<2x16x1xf32>
    %33 = math.exp %32 : vector<2x16x1xf32>
    %34 = vector.broadcast %31 : vector<2x16x1xf32> to vector<2x16x8xf32>
    %35 = arith.subf %28, %34 : vector<2x16x8xf32>
    %36 = math.exp %35 : vector<2x16x8xf32>
    %cst_37 = arith.constant dense<0.000000e+00> : vector<2x16xf32>
    %37 = vector.multi_reduction <add>, %36, %cst_37 [2] : vector<2x16x8xf32> to vector<2x16xf32>
    %38 = vector.shape_cast %37 : vector<2x16xf32> to vector<2x16x1xf32>
    %39 = arith.mulf %33, %24 : vector<2x16x1xf32>
    %40 = arith.addf %39, %38 : vector<2x16x1xf32>
    %41 = vector.broadcast %33 : vector<2x16x1xf32> to vector<2x16x8xf32>
    %42 = arith.mulf %41, %25 : vector<2x16x8xf32>
    "tpu.trace_start"() <{level = 10 : i32, message = "bqk,bkd->bqd"}> : () -> ()
    %cst_38 = arith.constant dense<0.000000e+00> : vector<2x16x8xf32>
    %43 = tpu.matmul %36, %27, %cst_38 {dimension_numbers = #tpu.dot_dimension_numbers<[2], [1], [1], [2], [0, 0, 0, 1, 1, 2], [0], [0]>} : vector<2x16x8xf32>, vector<2x8x8xf32>, vector<2x16x8xf32> -> vector<2x16x8xf32>
    "tpu.trace_stop"() : () -> ()
    %44 = arith.addf %42, %43 : vector<2x16x8xf32>
    %45 = tpu.reciprocal %40 {approx = true} : vector<2x16x1xf32> -> vector<2x16x1xf32>
    %46 = vector.broadcast %45 : vector<2x16x1xf32> to vector<2x16x8xf32>
    %47 = arith.mulf %44, %46 : vector<2x16x8xf32>
    %c0_39 = arith.constant 0 : index
    %c0_40 = arith.constant 0 : index
    %c0_41 = arith.constant 0 : index
    %48 = vector.load %arg13[%c0_39, %c0_40, %c0_41] : memref<2x16x32xf32, #tpu.memory_space<vmem>>, vector<2x16x8xf32>
    tpu.vector_store %arg13[%c0_39, %c0_40, %c0_41], %47 {strides = array<i32>} : memref<2x16x32xf32, #tpu.memory_space<vmem>>, vector<2x16x8xf32>,
    %c0_42 = arith.constant 0 : index
    %c0_43 = arith.constant 0 : index
    %c8 = arith.constant 8 : index
    %49 = vector.load %arg10[%c0_42, %c0_43, %c8] : memref<2x16x32xf32, #tpu.memory_space<vmem>>, vector<2x16x8xf32>
    %cst_44 = arith.constant 0xFF800000 : f32
    %50 = vector.broadcast %cst_44 : f32 to vector<2x16x1xf32>
    %cst_45 = arith.constant 0.000000e+00 : f32
    %51 = vector.broadcast %cst_45 : f32 to vector<2x16x1xf32>
    %cst_46 = arith.constant 0.000000e+00 : f32
    %52 = vector.broadcast %cst_46 : f32 to vector<2x16x8xf32>
    %c0_47 = arith.constant 0 : index
    %c0_48 = arith.constant 0 : index
    %c8_49 = arith.constant 8 : index
    %53 = vector.load %arg11[%c0_47, %c0_48, %c8_49] : memref<2x8x32xf32, #tpu.memory_space<vmem>>, vector<2x8x8xf32>
    %c0_50 = arith.constant 0 : index
    %c0_51 = arith.constant 0 : index
    %c8_52 = arith.constant 8 : index
    %54 = vector.load %arg12[%c0_50, %c0_51, %c8_52] : memref<2x8x32xf32, #tpu.memory_space<vmem>>, vector<2x8x8xf32>
    "tpu.trace_start"() <{level = 10 : i32, message = "bqd,bkd->bqk"}> : () -> ()
    %cst_53 = arith.constant dense<0.000000e+00> : vector<2x16x8xf32>
    %55 = tpu.matmul %49, %53, %cst_53 {dimension_numbers = #tpu.dot_dimension_numbers<[2], [2], [1], [1], [0, 0, 0, 1, 1, 1], [0], [0]>} : vector<2x16x8xf32>, vector<2x8x8xf32>, vector<2x16x8xf32> -> vector<2x16x8xf32>
    "tpu.trace_stop"() : () -> ()
    %cst_54 = arith.constant dense<0xFF800000> : vector<2x16xf32>
    %56 = vector.multi_reduction <maximumf>, %55, %cst_54 [2] : vector<2x16x8xf32> to vector<2x16xf32>
    %57 = vector.shape_cast %56 : vector<2x16xf32> to vector<2x16x1xf32>
    %58 = arith.maximumf %50, %57 : vector<2x16x1xf32>
    %59 = arith.subf %50, %58 : vector<2x16x1xf32>
    %60 = math.exp %59 : vector<2x16x1xf32>
    %61 = vector.broadcast %58 : vector<2x16x1xf32> to vector<2x16x8xf32>
    %62 = arith.subf %55, %61 : vector<2x16x8xf32>
    %63 = math.exp %62 : vector<2x16x8xf32>
    %cst_55 = arith.constant dense<0.000000e+00> : vector<2x16xf32>
    %64 = vector.multi_reduction <add>, %63, %cst_55 [2] : vector<2x16x8xf32> to vector<2x16xf32>
    %65 = vector.shape_cast %64 : vector<2x16xf32> to vector<2x16x1xf32>
    %66 = arith.mulf %60, %51 : vector<2x16x1xf32>
    %67 = arith.addf %66, %65 : vector<2x16x1xf32>
    %68 = vector.broadcast %60 : vector<2x16x1xf32> to vector<2x16x8xf32>
    %69 = arith.mulf %68, %52 : vector<2x16x8xf32>
    "tpu.trace_start"() <{level = 10 : i32, message = "bqk,bkd->bqd"}> : () -> ()
    %cst_56 = arith.constant dense<0.000000e+00> : vector<2x16x8xf32>
    %70 = tpu.matmul %63, %54, %cst_56 {dimension_numbers = #tpu.dot_dimension_numbers<[2], [1], [1], [2], [0, 0, 0, 1, 1, 2], [0], [0]>} : vector<2x16x8xf32>, vector<2x8x8xf32>, vector<2x16x8xf32> -> vector<2x16x8xf32>
    "tpu.trace_stop"() : () -> ()
    %71 = arith.addf %69, %70 : vector<2x16x8xf32>
    %72 = tpu.reciprocal %67 {approx = true} : vector<2x16x1xf32> -> vector<2x16x1xf32>
    %73 = vector.broadcast %72 : vector<2x16x1xf32> to vector<2x16x8xf32>
    %74 = arith.mulf %71, %73 : vector<2x16x8xf32>
    %c0_57 = arith.constant 0 : index
    %c0_58 = arith.constant 0 : index
    %c8_59 = arith.constant 8 : index
    %75 = vector.load %arg13[%c0_57, %c0_58, %c8_59] : memref<2x16x32xf32, #tpu.memory_space<vmem>>, vector<2x16x8xf32>
    tpu.vector_store %arg13[%c0_57, %c0_58, %c8_59], %74 {strides = array<i32>} : memref<2x16x32xf32, #tpu.memory_space<vmem>>, vector<2x16x8xf32>,
    %c0_60 = arith.constant 0 : index
    %c0_61 = arith.constant 0 : index
    %c16 = arith.constant 16 : index
    %76 = vector.load %arg10[%c0_60, %c0_61, %c16] : memref<2x16x32xf32, #tpu.memory_space<vmem>>, vector<2x16x8xf32>
    %cst_62 = arith.constant 0xFF800000 : f32
    %77 = vector.broadcast %cst_62 : f32 to vector<2x16x1xf32>
    %cst_63 = arith.constant 0.000000e+00 : f32
    %78 = vector.broadcast %cst_63 : f32 to vector<2x16x1xf32>
    %cst_64 = arith.constant 0.000000e+00 : f32
    %79 = vector.broadcast %cst_64 : f32 to vector<2x16x8xf32>
    %c0_65 = arith.constant 0 : index
    %c0_66 = arith.constant 0 : index
    %c16_67 = arith.constant 16 : index
    %80 = vector.load %arg11[%c0_65, %c0_66, %c16_67] : memref<2x8x32xf32, #tpu.memory_space<vmem>>, vector<2x8x8xf32>
    %c0_68 = arith.constant 0 : index
    %c0_69 = arith.constant 0 : index
    %c16_70 = arith.constant 16 : index
    %81 = vector.load %arg12[%c0_68, %c0_69, %c16_70] : memref<2x8x32xf32, #tpu.memory_space<vmem>>, vector<2x8x8xf32>
    "tpu.trace_start"() <{level = 10 : i32, message = "bqd,bkd->bqk"}> : () -> ()
    %cst_71 = arith.constant dense<0.000000e+00> : vector<2x16x8xf32>
    %82 = tpu.matmul %76, %80, %cst_71 {dimension_numbers = #tpu.dot_dimension_numbers<[2], [2], [1], [1], [0, 0, 0, 1, 1, 1], [0], [0]>} : vector<2x16x8xf32>, vector<2x8x8xf32>, vector<2x16x8xf32> -> vector<2x16x8xf32>
    "tpu.trace_stop"() : () -> ()
    %cst_72 = arith.constant dense<0xFF800000> : vector<2x16xf32>
    %83 = vector.multi_reduction <maximumf>, %82, %cst_72 [2] : vector<2x16x8xf32> to vector<2x16xf32>
    %84 = vector.shape_cast %83 : vector<2x16xf32> to vector<2x16x1xf32>
    %85 = arith.maximumf %77, %84 : vector<2x16x1xf32>
    %86 = arith.subf %77, %85 : vector<2x16x1xf32>
    %87 = math.exp %86 : vector<2x16x1xf32>
    %88 = vector.broadcast %85 : vector<2x16x1xf32> to vector<2x16x8xf32>
    %89 = arith.subf %82, %88 : vector<2x16x8xf32>
    %90 = math.exp %89 : vector<2x16x8xf32>
    %cst_73 = arith.constant dense<0.000000e+00> : vector<2x16xf32>
    %91 = vector.multi_reduction <add>, %90, %cst_73 [2] : vector<2x16x8xf32> to vector<2x16xf32>
    %92 = vector.shape_cast %91 : vector<2x16xf32> to vector<2x16x1xf32>
    %93 = arith.mulf %87, %78 : vector<2x16x1xf32>
    %94 = arith.addf %93, %92 : vector<2x16x1xf32>
    %95 = vector.broadcast %87 : vector<2x16x1xf32> to vector<2x16x8xf32>
    %96 = arith.mulf %95, %79 : vector<2x16x8xf32>
    "tpu.trace_start"() <{level = 10 : i32, message = "bqk,bkd->bqd"}> : () -> ()
    %cst_74 = arith.constant dense<0.000000e+00> : vector<2x16x8xf32>
    %97 = tpu.matmul %90, %81, %cst_74 {dimension_numbers = #tpu.dot_dimension_numbers<[2], [1], [1], [2], [0, 0, 0, 1, 1, 2], [0], [0]>} : vector<2x16x8xf32>, vector<2x8x8xf32>, vector<2x16x8xf32> -> vector<2x16x8xf32>
    "tpu.trace_stop"() : () -> ()
    %98 = arith.addf %96, %97 : vector<2x16x8xf32>
    %99 = tpu.reciprocal %94 {approx = true} : vector<2x16x1xf32> -> vector<2x16x1xf32>
    %100 = vector.broadcast %99 : vector<2x16x1xf32> to vector<2x16x8xf32>
    %101 = arith.mulf %98, %100 : vector<2x16x8xf32>
    %c0_75 = arith.constant 0 : index
    %c0_76 = arith.constant 0 : index
    %c16_77 = arith.constant 16 : index
    %102 = vector.load %arg13[%c0_75, %c0_76, %c16_77] : memref<2x16x32xf32, #tpu.memory_space<vmem>>, vector<2x16x8xf32>
    tpu.vector_store %arg13[%c0_75, %c0_76, %c16_77], %101 {strides = array<i32>} : memref<2x16x32xf32, #tpu.memory_space<vmem>>, vector<2x16x8xf32>,
    %c0_78 = arith.constant 0 : index
    %c0_79 = arith.constant 0 : index
    %c24 = arith.constant 24 : index
    %103 = vector.load %arg10[%c0_78, %c0_79, %c24] : memref<2x16x32xf32, #tpu.memory_space<vmem>>, vector<2x16x8xf32>
    %cst_80 = arith.constant 0xFF800000 : f32
    %104 = vector.broadcast %cst_80 : f32 to vector<2x16x1xf32>
    %cst_81 = arith.constant 0.000000e+00 : f32
    %105 = vector.broadcast %cst_81 : f32 to vector<2x16x1xf32>
    %cst_82 = arith.constant 0.000000e+00 : f32
    %106 = vector.broadcast %cst_82 : f32 to vector<2x16x8xf32>
    %c0_83 = arith.constant 0 : index
    %c0_84 = arith.constant 0 : index
    %c24_85 = arith.constant 24 : index
    %107 = vector.load %arg11[%c0_83, %c0_84, %c24_85] : memref<2x8x32xf32, #tpu.memory_space<vmem>>, vector<2x8x8xf32>
    %c0_86 = arith.constant 0 : index
    %c0_87 = arith.constant 0 : index
    %c24_88 = arith.constant 24 : index
    %108 = vector.load %arg12[%c0_86, %c0_87, %c24_88] : memref<2x8x32xf32, #tpu.memory_space<vmem>>, vector<2x8x8xf32>
    "tpu.trace_start"() <{level = 10 : i32, message = "bqd,bkd->bqk"}> : () -> ()
    %cst_89 = arith.constant dense<0.000000e+00> : vector<2x16x8xf32>
    %109 = tpu.matmul %103, %107, %cst_89 {dimension_numbers = #tpu.dot_dimension_numbers<[2], [2], [1], [1], [0, 0, 0, 1, 1, 1], [0], [0]>} : vector<2x16x8xf32>, vector<2x8x8xf32>, vector<2x16x8xf32> -> vector<2x16x8xf32>
    "tpu.trace_stop"() : () -> ()
    %cst_90 = arith.constant dense<0xFF800000> : vector<2x16xf32>
    %110 = vector.multi_reduction <maximumf>, %109, %cst_90 [2] : vector<2x16x8xf32> to vector<2x16xf32>
    %111 = vector.shape_cast %110 : vector<2x16xf32> to vector<2x16x1xf32>
    %112 = arith.maximumf %104, %111 : vector<2x16x1xf32>
    %113 = arith.subf %104, %112 : vector<2x16x1xf32>
    %114 = math.exp %113 : vector<2x16x1xf32>
    %115 = vector.broadcast %112 : vector<2x16x1xf32> to vector<2x16x8xf32>
    %116 = arith.subf %109, %115 : vector<2x16x8xf32>
    %117 = math.exp %116 : vector<2x16x8xf32>
    %cst_91 = arith.constant dense<0.000000e+00> : vector<2x16xf32>
    %118 = vector.multi_reduction <add>, %117, %cst_91 [2] : vector<2x16x8xf32> to vector<2x16xf32>
    %119 = vector.shape_cast %118 : vector<2x16xf32> to vector<2x16x1xf32>
    %120 = arith.mulf %114, %105 : vector<2x16x1xf32>
    %121 = arith.addf %120, %119 : vector<2x16x1xf32>
    %122 = vector.broadcast %114 : vector<2x16x1xf32> to vector<2x16x8xf32>
    %123 = arith.mulf %122, %106 : vector<2x16x8xf32>
    "tpu.trace_start"() <{level = 10 : i32, message = "bqk,bkd->bqd"}> : () -> ()
    %cst_92 = arith.constant dense<0.000000e+00> : vector<2x16x8xf32>
    %124 = tpu.matmul %117, %108, %cst_92 {dimension_numbers = #tpu.dot_dimension_numbers<[2], [1], [1], [2], [0, 0, 0, 1, 1, 2], [0], [0]>} : vector<2x16x8xf32>, vector<2x8x8xf32>, vector<2x16x8xf32> -> vector<2x16x8xf32>
    "tpu.trace_stop"() : () -> ()
    %125 = arith.addf %123, %124 : vector<2x16x8xf32>
    %126 = tpu.reciprocal %121 {approx = true} : vector<2x16x1xf32> -> vector<2x16x1xf32>
    %127 = vector.broadcast %126 : vector<2x16x1xf32> to vector<2x16x8xf32>
    %128 = arith.mulf %125, %127 : vector<2x16x8xf32>
    %c0_93 = arith.constant 0 : index
    %c0_94 = arith.constant 0 : index
    %c24_95 = arith.constant 24 : index
    %129 = vector.load %arg13[%c0_93, %c0_94, %c24_95] : memref<2x16x32xf32, #tpu.memory_space<vmem>>, vector<2x16x8xf32>
    tpu.vector_store %arg13[%c0_93, %c0_94, %c24_95], %128 {strides = array<i32>} : memref<2x16x32xf32, #tpu.memory_space<vmem>>, vector<2x16x8xf32>,
    %c0_96 = arith.constant 0 : index
    %c0_97 = arith.constant 0 : index
    %c0_98 = arith.constant 0 : index
    %130 = vector.load %arg13[%c0_96, %c0_97, %c0_98] : memref<2x16x32xf32, #tpu.memory_space<vmem>>, vector<2x16x32xf32>
    %131 = vector.shape_cast %130 : vector<2x16x32xf32> to vector<32x32xf32>
    %c0_99 = arith.constant 0 : index
    %c0_100 = arith.constant 0 : index
    %132 = vector.load %arg7[%c0_99, %c0_100] : memref<32x32xf32, #tpu.memory_space<vmem>>, vector<32x32xf32>
    %cst_101 = arith.constant dense<0.000000e+00> : vector<32x32xf32>
    %133 = tpu.matmul %131, %132, %cst_101 {dimension_numbers = #tpu.dot_dimension_numbers<[1], [0], [0], [1], [0, 0, 1, 1], [], []>} : vector<32x32xf32>, vector<32x32xf32>, vector<32x32xf32> -> vector<32x32xf32>
    %c0_102 = arith.constant 0 : index
    %c0_103 = arith.constant 0 : index
    %134 = vector.load %arg8[%c0_102, %c0_103] : memref<1x32xf32, #tpu.memory_space<vmem>>, vector<1x32xf32>
    %135 = vector.broadcast %134 : vector<1x32xf32> to vector<32x32xf32>
    %136 = arith.addf %133, %135 : vector<32x32xf32>
    %137 = vector.shape_cast %136 : vector<32x32xf32> to vector<2x16x32xf32>
    %c0_104 = arith.constant 0 : index
    %c0_105 = arith.constant 0 : index
    %c0_106 = arith.constant 0 : index
    %138 = vector.load %arg9[%c0_104, %c0_105, %c0_106] : memref<2x16x32xf32, #tpu.memory_space<vmem>>, vector<2x16x32xf32>
    tpu.vector_store %arg9[%c0_104, %c0_105, %c0_106], %137 {strides = array<i32>} : memref<2x16x32xf32, #tpu.memory_space<vmem>>, vector<2x16x32xf32>,
    return
  }
  func.func @transform_0(%arg0: i32) -> (i32, i32, i32) {
    %c0_i32 = arith.constant 0 : i32
    %c0_i32_0 = arith.constant 0 : i32
    %c0_i32_1 = arith.constant 0 : i32
    return %arg0, %c0_i32, %c0_i32_0 : i32, i32, i32
  }
  func.func @transform_1(%arg0: i32) -> (i32, i32, i32) {
    %c0_i32 = arith.constant 0 : i32
    %c0_i32_0 = arith.constant 0 : i32
    %c0_i32_1 = arith.constant 0 : i32
    return %arg0, %c0_i32, %c0_i32_0 : i32, i32, i32
  }
  func.func @transform_2(%arg0: i32) -> (i32, i32) {
    %c0_i32 = arith.constant 0 : i32
    %c0_i32_0 = arith.constant 0 : i32
    %c0_i32_1 = arith.constant 0 : i32
    return %c0_i32, %c0_i32_0 : i32, i32
  }
  func.func @transform_3(%arg0: i32) -> (i32, i32) {
    %c0_i32 = arith.constant 0 : i32
    %c0_i32_0 = arith.constant 0 : i32
    %c0_i32_1 = arith.constant 0 : i32
    return %c0_i32, %c0_i32_0 : i32, i32
  }
  func.func @transform_4(%arg0: i32) -> (i32, i32) {
    %c0_i32 = arith.constant 0 : i32
    %c0_i32_0 = arith.constant 0 : i32
    %c0_i32_1 = arith.constant 0 : i32
    return %c0_i32, %c0_i32_0 : i32, i32
  }
  func.func @transform_5(%arg0: i32) -> (i32, i32) {
    %c0_i32 = arith.constant 0 : i32
    %c0_i32_0 = arith.constant 0 : i32
    %c0_i32_1 = arith.constant 0 : i32
    return %c0_i32, %c0_i32_0 : i32, i32
  }
  func.func @transform_6(%arg0: i32) -> (i32, i32) {
    %c0_i32 = arith.constant 0 : i32
    %c0_i32_0 = arith.constant 0 : i32
    %c0_i32_1 = arith.constant 0 : i32
    return %c0_i32, %c0_i32_0 : i32, i32
  }
  func.func @transform_7(%arg0: i32) -> (i32, i32) {
    %c0_i32 = arith.constant 0 : i32
    %c0_i32_0 = arith.constant 0 : i32
    %c0_i32_1 = arith.constant 0 : i32
    return %c0_i32, %c0_i32_0 : i32, i32
  }
  func.func @transform_8(%arg0: i32) -> (i32, i32, i32) {
    %c0_i32 = arith.constant 0 : i32
    %c0_i32_0 = arith.constant 0 : i32
    %c0_i32_1 = arith.constant 0 : i32
    return %arg0, %c0_i32, %c0_i32_0 : i32, i32, i32
  }
}

module attributes {stable_mosaic.version = 11 : i64} {
  func.func @_cross_attn_kernel(%arg0: i32, %arg1: memref<2x16x32xf32, #tpu.memory_space<vmem>>, %arg2: memref<2x8x32xf32, #tpu.memory_space<vmem>>, %arg3: memref<32x32xf32, #tpu.memory_space<vmem>>, %arg4: memref<1x32xf32, #tpu.memory_space<vmem>>, %arg5: memref<32x64xf32, #tpu.memory_space<vmem>>, %arg6: memref<1x64xf32, #tpu.memory_space<vmem>>, %arg7: memref<32x32xf32, #tpu.memory_space<vmem>>, %arg8: memref<1x32xf32, #tpu.memory_space<vmem>>, %arg9: memref<2x16x32xf32, #tpu.memory_space<vmem>>, %arg10: memref<2x16x32xf32, #tpu.memory_space<vmem>>, %arg11: memref<2x8x32xf32, #tpu.memory_space<vmem>>, %arg12: memref<2x8x32xf32, #tpu.memory_space<vmem>>, %arg13: memref<2x16x32xf32, #tpu.memory_space<vmem>>) attributes {dimension_semantics = [#tpu.dimension_semantics<parallel>], iteration_bounds = array<i64: 1>, scalar_prefetch = 0 : i64, scratch_operands = 4 : i64, tpu.core_type = #tpu.core_type<tc>, window_params = [{transform_indices = @transform_0, window_bounds = array<i64: 2, 16, 32>}, {transform_indices = @transform_1, window_bounds = array<i64: 2, 8, 32>}, {pipeline_mode = #tpu.pipeline_mode<synchronous>, transform_indices = @transform_2, window_bounds = array<i64: 32, 32>}, {pipeline_mode = #tpu.pipeline_mode<synchronous>, transform_indices = @transform_3, window_bounds = array<i64: 1, 32>}, {pipeline_mode = #tpu.pipeline_mode<synchronous>, transform_indices = @transform_4, window_bounds = array<i64: 32, 64>}, {pipeline_mode = #tpu.pipeline_mode<synchronous>, transform_indices = @transform_5, window_bounds = array<i64: 1, 64>}, {pipeline_mode = #tpu.pipeline_mode<synchronous>, transform_indices = @transform_6, window_bounds = array<i64: 32, 32>}, {pipeline_mode = #tpu.pipeline_mode<synchronous>, transform_indices = @transform_7, window_bounds = array<i64: 1, 32>}, {transform_indices = @transform_8, window_bounds = array<i64: 2, 16, 32>}]} {
    %c0 = arith.constant 0 : index
    %c0_0 = arith.constant 0 : index
    %c0_1 = arith.constant 0 : index
    %0 = vector.load %arg1[%c0, %c0_0, %c0_1] : memref<2x16x32xf32, #tpu.memory_space<vmem>>, vector<2x16x32xf32>
    %1 = vector.shape_cast %0 : vector<2x16x32xf32> to vector<32x32xf32>
    %c0_2 = arith.constant 0 : index
    %c0_3 = arith.constant 0 : index
    %c0_4 = arith.constant 0 : index
    %2 = vector.load %arg2[%c0_2, %c0_3, %c0_4] : memref<2x8x32xf32, #tpu.memory_space<vmem>>, vector<2x8x32xf32>
    %3 = vector.shape_cast %2 : vector<2x8x32xf32> to vector<16x32xf32>
    %c0_5 = arith.constant 0 : index
    %c0_6 = arith.constant 0 : index
    %4 = vector.load %arg3[%c0_5, %c0_6] : memref<32x32xf32, #tpu.memory_space<vmem>>, vector<32x32xf32>
    %cst = arith.constant dense<0.000000e+00> : vector<32x32xf32>
    %5 = tpu.matmul %1, %4, %cst {dimension_numbers = #tpu.dot_dimension_numbers<[1], [0], [0], [1], [0, 0, 1, 1], [], []>} : vector<32x32xf32>, vector<32x32xf32>, vector<32x32xf32> -> vector<32x32xf32>
    %c0_7 = arith.constant 0 : index
    %c0_8 = arith.constant 0 : index
    %6 = vector.load %arg4[%c0_7, %c0_8] : memref<1x32xf32, #tpu.memory_space<vmem>>, vector<1x32xf32>
    %7 = vector.broadcast %6 : vector<1x32xf32> to vector<32x32xf32>
    %8 = arith.addf %5, %7 : vector<32x32xf32>
    %c0_9 = arith.constant 0 : index
    %c0_10 = arith.constant 0 : index
    %9 = vector.load %arg5[%c0_9, %c0_10] : memref<32x64xf32, #tpu.memory_space<vmem>>, vector<32x64xf32>
    %cst_11 = arith.constant dense<0.000000e+00> : vector<16x64xf32>
    %10 = tpu.matmul %3, %9, %cst_11 {dimension_numbers = #tpu.dot_dimension_numbers<[1], [0], [0], [1], [0, 0, 1, 1], [], []>} : vector<16x32xf32>, vector<32x64xf32>, vector<16x64xf32> -> vector<16x64xf32>
    %c0_12 = arith.constant 0 : index
    %c0_13 = arith.constant 0 : index
    %11 = vector.load %arg6[%c0_12, %c0_13] : memref<1x64xf32, #tpu.memory_space<vmem>>, vector<1x64xf32>
    %12 = vector.broadcast %11 : vector<1x64xf32> to vector<16x64xf32>
    %13 = arith.addf %10, %12 : vector<16x64xf32>
    %14 = vector.shape_cast %8 : vector<32x32xf32> to vector<2x16x32xf32>
    %c0_14 = arith.constant 0 : index
    %c0_15 = arith.constant 0 : index
    %c0_16 = arith.constant 0 : index
    %15 = vector.load %arg10[%c0_14, %c0_15, %c0_16] : memref<2x16x32xf32, #tpu.memory_space<vmem>>, vector<2x16x32xf32>
    tpu.vector_store %arg10[%c0_14, %c0_15, %c0_16], %14 {strides = array<i32>} : memref<2x16x32xf32, #tpu.memory_space<vmem>>, vector<2x16x32xf32>,
    %16 = vector.extract_strided_slice %13 {offsets = [0, 0], sizes = [16, 32], strides = [1, 1]} : vector<16x64xf32> to vector<16x32xf32>
    %17 = vector.shape_cast %16 : vector<16x32xf32> to vector<2x8x32xf32>
    %c0_17 = arith.constant 0 : index
    %c0_18 = arith.constant 0 : index
    %c0_19 = arith.constant 0 : index
    %18 = vector.load %arg11[%c0_17, %c0_18, %c0_19] : memref<2x8x32xf32, #tpu.memory_space<vmem>>, vector<2x8x32xf32>
    tpu.vector_store %arg11[%c0_17, %c0_18, %c0_19], %17 {strides = array<i32>} : memref<2x8x32xf32, #tpu.memory_space<vmem>>, vector<2x8x32xf32>,
    %19 = vector.extract_strided_slice %13 {offsets = [0, 32], sizes = [16, 32], strides = [1, 1]} : vector<16x64xf32> to vector<16x32xf32>
    %20 = vector.shape_cast %19 : vector<16x32xf32> to vector<2x8x32xf32>
    %c0_20 = arith.constant 0 : index
    %c0_21 = arith.constant 0 : index
    %c0_22 = arith.constant 0 : index
    %21 = vector.load %arg12[%c0_20, %c0_21, %c0_22] : memref<2x8x32xf32, #tpu.memory_space<vmem>>, vector<2x8x32xf32>
    tpu.vector_store %arg12[%c0_20, %c0_21, %c0_22], %20 {strides = array<i32>} : memref<2x8x32xf32, #tpu.memory_space<vmem>>, vector<2x8x32xf32>,
    %c0_23 = arith.constant 0 : index
    %c0_24 = arith.constant 0 : index
    %c0_25 = arith.constant 0 : index
    %22 = vector.load %arg10[%c0_23, %c0_24, %c0_25] : memref<2x16x32xf32, #tpu.memory_space<vmem>>, vector<2x16x8xf32>
    %cst_26 = arith.constant 0xFF800000 : f32
    %23 = vector.broadcast %cst_26 : f32 to vector<2x16x1xf32>
    %cst_27 = arith.constant 0.000000e+00 : f32
    %24 = vector.broadcast %cst_27 : f32 to vector<2x16x1xf32>
    %cst_28 = arith.constant 0.000000e+00 : f32
    %25 = vector.broadcast %cst_28 : f32 to vector<2x16x8xf32>
    %c0_29 = arith.constant 0 : index
    %c0_30 = arith.constant 0 : index
    %c0_31 = arith.constant 0 : index
    %26 = vector.load %arg11[%c0_29, %c0_30, %c0_31] : memref<2x8x32xf32, #tpu.memory_space<vmem>>, vector<2x8x8xf32>
    %c0_32 = arith.constant 0 : index
    %c0_33 = arith.constant 0 : index
    %c0_34 = arith.constant 0 : index
    %27 = vector.load %arg12[%c0_32, %c0_33, %c0_34] : memref<2x8x32xf32, #tpu.memory_space<vmem>>, vector<2x8x8xf32>
    "tpu.trace_start"() <{level = 10 : i32, message = "bqd,bkd->bqk"}> : () -> ()
    %cst_35 = arith.constant dense<0.000000e+00> : vector<2x16x8xf32>
    %28 = tpu.matmul %22, %26, %cst_35 {dimension_numbers = #tpu.dot_dimension_numbers<[2], [2], [1], [1], [0, 0, 0, 1, 1, 1], [0], [0]>} : vector<2x16x8xf32>, vector<2x8x8xf32>, vector<2x16x8xf32> -> vector<2x16x8xf32>
    "tpu.trace_stop"() : () -> ()
    %cst_36 = arith.constant dense<0xFF800000> : vector<2x16xf32>
    %29 = vector.multi_reduction <maximumf>, %28, %cst_36 [2] : vector<2x16x8xf32> to vector<2x16xf32>
    %30 = vector.shape_cast %29 : vector<2x16xf32> to vector<2x16x1xf32>
    %31 = arith.maximumf %23, %30 : vector<2x16x1xf32>
    %32 = arith.subf %23, %31 : vector<2x16x1xf32>
    %33 = math.exp %32 : vector<2x16x1xf32>
    %34 = vector.broadcast %31 : vector<2x16x1xf32> to vector<2x16x8xf32>
    %35 = arith.subf %28, %34 : vector<2x16x8xf32>
    %36 = math.exp %35 : vector<2x16x8xf32>
    %cst_37 = arith.constant dense<0.000000e+00> : vector<2x16xf32>
    %37 = vector.multi_reduction <add>, %36, %cst_37 [2] : vector<2x16x8xf32> to vector<2x16xf32>
    %38 = vector.shape_cast %37 : vector<2x16xf32> to vector<2x16x1xf32>
    %39 = arith.mulf %33, %24 : vector<2x16x1xf32>
    %40 = arith.addf %39, %38 : vector<2x16x1xf32>
    %41 = vector.broadcast %33 : vector<2x16x1xf32> to vector<2x16x8xf32>
    %42 = arith.mulf %41, %25 : vector<2x16x8xf32>
    "tpu.trace_start"() <{level = 10 : i32, message = "bqk,bkd->bqd"}> : () -> ()
    %cst_38 = arith.constant dense<0.000000e+00> : vector<2x16x8xf32>
    %43 = tpu.matmul %36, %27, %cst_38 {dimension_numbers = #tpu.dot_dimension_numbers<[2], [1], [1], [2], [0, 0, 0, 1, 1, 2], [0], [0]>} : vector<2x16x8xf32>, vector<2x8x8xf32>, vector<2x16x8xf32> -> vector<2x16x8xf32>
    "tpu.trace_stop"() : () -> ()
    %44 = arith.addf %42, %43 : vector<2x16x8xf32>
    %45 = tpu.reciprocal %40 {approx = true} : vector<2x16x1xf32> -> vector<2x16x1xf32>
    %46 = vector.broadcast %45 : vector<2x16x1xf32> to vector<2x16x8xf32>
    %47 = arith.mulf %44, %46 : vector<2x16x8xf32>
    %c0_39 = arith.constant 0 : index
    %c0_40 = arith.constant 0 : index
    %c0_41 = arith.constant 0 : index
    %48 = vector.load %arg13[%c0_39, %c0_40, %c0_41] : memref<2x16x32xf32, #tpu.memory_space<vmem>>, vector<2x16x8xf32>
    tpu.vector_store %arg13[%c0_39, %c0_40, %c0_41], %47 {strides = array<i32>} : memref<2x16x32xf32, #tpu.memory_space<vmem>>, vector<2x16x8xf32>,
    %c0_42 = arith.constant 0 : index
    %c0_43 = arith.constant 0 : index
    %c8 = arith.constant 8 : index
    %49 = vector.load %arg10[%c0_42, %c0_43, %c8] : memref<2x16x32xf32, #tpu.memory_space<vmem>>, vector<2x16x8xf32>
    %cst_44 = arith.constant 0xFF800000 : f32
    %50 = vector.broadcast %cst_44 : f32 to vector<2x16x1xf32>
    %cst_45 = arith.constant 0.000000e+00 : f32
    %51 = vector.broadcast %cst_45 : f32 to vector<2x16x1xf32>
    %cst_46 = arith.constant 0.000000e+00 : f32
    %52 = vector.broadcast %cst_46 : f32 to vector<2x16x8xf32>
    %c0_47 = arith.constant 0 : index
    %c0_48 = arith.constant 0 : index
    %c8_49 = arith.constant 8 : index
    %53 = vector.load %arg11[%c0_47, %c0_48, %c8_49] : memref<2x8x32xf32, #tpu.memory_space<vmem>>, vector<2x8x8xf32>
    %c0_50 = arith.constant 0 : index
    %c0_51 = arith.constant 0 : index
    %c8_52 = arith.constant 8 : index
    %54 = vector.load %arg12[%c0_50, %c0_51, %c8_52] : memref<2x8x32xf32, #tpu.memory_space<vmem>>, vector<2x8x8xf32>
    "tpu.trace_start"() <{level = 10 : i32, message = "bqd,bkd->bqk"}> : () -> ()
    %cst_53 = arith.constant dense<0.000000e+00> : vector<2x16x8xf32>
    %55 = tpu.matmul %49, %53, %cst_53 {dimension_numbers = #tpu.dot_dimension_numbers<[2], [2], [1], [1], [0, 0, 0, 1, 1, 1], [0], [0]>} : vector<2x16x8xf32>, vector<2x8x8xf32>, vector<2x16x8xf32> -> vector<2x16x8xf32>
    "tpu.trace_stop"() : () -> ()
    %cst_54 = arith.constant dense<0xFF800000> : vector<2x16xf32>
    %56 = vector.multi_reduction <maximumf>, %55, %cst_54 [2] : vector<2x16x8xf32> to vector<2x16xf32>
    %57 = vector.shape_cast %56 : vector<2x16xf32> to vector<2x16x1xf32>
    %58 = arith.maximumf %50, %57 : vector<2x16x1xf32>
    %59 = arith.subf %50, %58 : vector<2x16x1xf32>
    %60 = math.exp %59 : vector<2x16x1xf32>
    %61 = vector.broadcast %58 : vector<2x16x1xf32> to vector<2x16x8xf32>
    %62 = arith.subf %55, %61 : vector<2x16x8xf32>
    %63 = math.exp %62 : vector<2x16x8xf32>
    %cst_55 = arith.constant dense<0.000000e+00> : vector<2x16xf32>
    %64 = vector.multi_reduction <add>, %63, %cst_55 [2] : vector<2x16x8xf32> to vector<2x16xf32>
    %65 = vector.shape_cast %64 : vector<2x16xf32> to vector<2x16x1xf32>
    %66 = arith.mulf %60, %51 : vector<2x16x1xf32>
    %67 = arith.addf %66, %65 : vector<2x16x1xf32>
    %68 = vector.broadcast %60 : vector<2x16x1xf32> to vector<2x16x8xf32>
    %69 = arith.mulf %68, %52 : vector<2x16x8xf32>
    "tpu.trace_start"() <{level = 10 : i32, message = "bqk,bkd->bqd"}> : () -> ()
    %cst_56 = arith.constant dense<0.000000e+00> : vector<2x16x8xf32>
    %70 = tpu.matmul %63, %54, %cst_56 {dimension_numbers = #tpu.dot_dimension_numbers<[2], [1], [1], [2], [0, 0, 0, 1, 1, 2], [0], [0]>} : vector<2x16x8xf32>, vector<2x8x8xf32>, vector<2x16x8xf32> -> vector<2x16x8xf32>
    "tpu.trace_stop"() : () -> ()
    %71 = arith.addf %69, %70 : vector<2x16x8xf32>
    %72 = tpu.reciprocal %67 {approx = true} : vector<2x16x1xf32> -> vector<2x16x1xf32>
    %73 = vector.broadcast %72 : vector<2x16x1xf32> to vector<2x16x8xf32>
    %74 = arith.mulf %71, %73 : vector<2x16x8xf32>
    %c0_57 = arith.constant 0 : index
    %c0_58 = arith.constant 0 : index
    %c8_59 = arith.constant 8 : index
    %75 = vector.load %arg13[%c0_57, %c0_58, %c8_59] : memref<2x16x32xf32, #tpu.memory_space<vmem>>, vector<2x16x8xf32>
    tpu.vector_store %arg13[%c0_57, %c0_58, %c8_59], %74 {strides = array<i32>} : memref<2x16x32xf32, #tpu.memory_space<vmem>>, vector<2x16x8xf32>,
    %c0_60 = arith.constant 0 : index
    %c0_61 = arith.constant 0 : index
    %c16 = arith.constant 16 : index
    %76 = vector.load %arg10[%c0_60, %c0_61, %c16] : memref<2x16x32xf32, #tpu.memory_space<vmem>>, vector<2x16x8xf32>
    %cst_62 = arith.constant 0xFF800000 : f32
    %77 = vector.broadcast %cst_62 : f32 to vector<2x16x1xf32>
    %cst_63 = arith.constant 0.000000e+00 : f32
    %78 = vector.broadcast %cst_63 : f32 to vector<2x16x1xf32>
    %cst_64 = arith.constant 0.000000e+00 : f32
    %79 = vector.broadcast %cst_64 : f32 to vector<2x16x8xf32>
    %c0_65 = arith.constant 0 : index
    %c0_66 = arith.constant 0 : index
    %c16_67 = arith.constant 16 : index
    %80 = vector.load %arg11[%c0_65, %c0_66, %c16_67] : memref<2x8x32xf32, #tpu.memory_space<vmem>>, vector<2x8x8xf32>
    %c0_68 = arith.constant 0 : index
    %c0_69 = arith.constant 0 : index
    %c16_70 = arith.constant 16 : index
    %81 = vector.load %arg12[%c0_68, %c0_69, %c16_70] : memref<2x8x32xf32, #tpu.memory_space<vmem>>, vector<2x8x8xf32>
    "tpu.trace_start"() <{level = 10 : i32, message = "bqd,bkd->bqk"}> : () -> ()
    %cst_71 = arith.constant dense<0.000000e+00> : vector<2x16x8xf32>
    %82 = tpu.matmul %76, %80, %cst_71 {dimension_numbers = #tpu.dot_dimension_numbers<[2], [2], [1], [1], [0, 0, 0, 1, 1, 1], [0], [0]>} : vector<2x16x8xf32>, vector<2x8x8xf32>, vector<2x16x8xf32> -> vector<2x16x8xf32>
    "tpu.trace_stop"() : () -> ()
    %cst_72 = arith.constant dense<0xFF800000> : vector<2x16xf32>
    %83 = vector.multi_reduction <maximumf>, %82, %cst_72 [2] : vector<2x16x8xf32> to vector<2x16xf32>
    %84 = vector.shape_cast %83 : vector<2x16xf32> to vector<2x16x1xf32>
    %85 = arith.maximumf %77, %84 : vector<2x16x1xf32>
    %86 = arith.subf %77, %85 : vector<2x16x1xf32>
    %87 = math.exp %86 : vector<2x16x1xf32>
    %88 = vector.broadcast %85 : vector<2x16x1xf32> to vector<2x16x8xf32>
    %89 = arith.subf %82, %88 : vector<2x16x8xf32>
    %90 = math.exp %89 : vector<2x16x8xf32>
    %cst_73 = arith.constant dense<0.000000e+00> : vector<2x16xf32>
    %91 = vector.multi_reduction <add>, %90, %cst_73 [2] : vector<2x16x8xf32> to vector<2x16xf32>
    %92 = vector.shape_cast %91 : vector<2x16xf32> to vector<2x16x1xf32>
    %93 = arith.mulf %87, %78 : vector<2x16x1xf32>
    %94 = arith.addf %93, %92 : vector<2x16x1xf32>
    %95 = vector.broadcast %87 : vector<2x16x1xf32> to vector<2x16x8xf32>
    %96 = arith.mulf %95, %79 : vector<2x16x8xf32>
    "tpu.trace_start"() <{level = 10 : i32, message = "bqk,bkd->bqd"}> : () -> ()
    %cst_74 = arith.constant dense<0.000000e+00> : vector<2x16x8xf32>
    %97 = tpu.matmul %90, %81, %cst_74 {dimension_numbers = #tpu.dot_dimension_numbers<[2], [1], [1], [2], [0, 0, 0, 1, 1, 2], [0], [0]>} : vector<2x16x8xf32>, vector<2x8x8xf32>, vector<2x16x8xf32> -> vector<2x16x8xf32>
    "tpu.trace_stop"() : () -> ()
    %98 = arith.addf %96, %97 : vector<2x16x8xf32>
    %99 = tpu.reciprocal %94 {approx = true} : vector<2x16x1xf32> -> vector<2x16x1xf32>
    %100 = vector.broadcast %99 : vector<2x16x1xf32> to vector<2x16x8xf32>
    %101 = arith.mulf %98, %100 : vector<2x16x8xf32>
    %c0_75 = arith.constant 0 : index
    %c0_76 = arith.constant 0 : index
    %c16_77 = arith.constant 16 : index
    %102 = vector.load %arg13[%c0_75, %c0_76, %c16_77] : memref<2x16x32xf32, #tpu.memory_space<vmem>>, vector<2x16x8xf32>
    tpu.vector_store %arg13[%c0_75, %c0_76, %c16_77], %101 {strides = array<i32>} : memref<2x16x32xf32, #tpu.memory_space<vmem>>, vector<2x16x8xf32>,
    %c0_78 = arith.constant 0 : index
    %c0_79 = arith.constant 0 : index
    %c24 = arith.constant 24 : index
    %103 = vector.load %arg10[%c0_78, %c0_79, %c24] : memref<2x16x32xf32, #tpu.memory_space<vmem>>, vector<2x16x8xf32>
    %cst_80 = arith.constant 0xFF800000 : f32
    %104 = vector.broadcast %cst_80 : f32 to vector<2x16x1xf32>
    %cst_81 = arith.constant 0.000000e+00 : f32
    %105 = vector.broadcast %cst_81 : f32 to vector<2x16x1xf32>
    %cst_82 = arith.constant 0.000000e+00 : f32
    %106 = vector.broadcast %cst_82 : f32 to vector<2x16x8xf32>
    %c0_83 = arith.constant 0 : index
    %c0_84 = arith.constant 0 : index
    %c24_85 = arith.constant 24 : index
    %107 = vector.load %arg11[%c0_83, %c0_84, %c24_85] : memref<2x8x32xf32, #tpu.memory_space<vmem>>, vector<2x8x8xf32>
    %c0_86 = arith.constant 0 : index
    %c0_87 = arith.constant 0 : index
    %c24_88 = arith.constant 24 : index
    %108 = vector.load %arg12[%c0_86, %c0_87, %c24_88] : memref<2x8x32xf32, #tpu.memory_space<vmem>>, vector<2x8x8xf32>
    "tpu.trace_start"() <{level = 10 : i32, message = "bqd,bkd->bqk"}> : () -> ()
    %cst_89 = arith.constant dense<0.000000e+00> : vector<2x16x8xf32>
    %109 = tpu.matmul %103, %107, %cst_89 {dimension_numbers = #tpu.dot_dimension_numbers<[2], [2], [1], [1], [0, 0, 0, 1, 1, 1], [0], [0]>} : vector<2x16x8xf32>, vector<2x8x8xf32>, vector<2x16x8xf32> -> vector<2x16x8xf32>
    "tpu.trace_stop"() : () -> ()
    %cst_90 = arith.constant dense<0xFF800000> : vector<2x16xf32>
    %110 = vector.multi_reduction <maximumf>, %109, %cst_90 [2] : vector<2x16x8xf32> to vector<2x16xf32>
    %111 = vector.shape_cast %110 : vector<2x16xf32> to vector<2x16x1xf32>
    %112 = arith.maximumf %104, %111 : vector<2x16x1xf32>
    %113 = arith.subf %104, %112 : vector<2x16x1xf32>
    %114 = math.exp %113 : vector<2x16x1xf32>
    %115 = vector.broadcast %112 : vector<2x16x1xf32> to vector<2x16x8xf32>
    %116 = arith.subf %109, %115 : vector<2x16x8xf32>
    %117 = math.exp %116 : vector<2x16x8xf32>
    %cst_91 = arith.constant dense<0.000000e+00> : vector<2x16xf32>
    %118 = vector.multi_reduction <add>, %117, %cst_91 [2] : vector<2x16x8xf32> to vector<2x16xf32>
    %119 = vector.shape_cast %118 : vector<2x16xf32> to vector<2x16x1xf32>
    %120 = arith.mulf %114, %105 : vector<2x16x1xf32>
    %121 = arith.addf %120, %119 : vector<2x16x1xf32>
    %122 = vector.broadcast %114 : vector<2x16x1xf32> to vector<2x16x8xf32>
    %123 = arith.mulf %122, %106 : vector<2x16x8xf32>
    "tpu.trace_start"() <{level = 10 : i32, message = "bqk,bkd->bqd"}> : () -> ()
    %cst_92 = arith.constant dense<0.000000e+00> : vector<2x16x8xf32>
    %124 = tpu.matmul %117, %108, %cst_92 {dimension_numbers = #tpu.dot_dimension_numbers<[2], [1], [1], [2], [0, 0, 0, 1, 1, 2], [0], [0]>} : vector<2x16x8xf32>, vector<2x8x8xf32>, vector<2x16x8xf32> -> vector<2x16x8xf32>
    "tpu.trace_stop"() : () -> ()
    %125 = arith.addf %123, %124 : vector<2x16x8xf32>
    %126 = tpu.reciprocal %121 {approx = true} : vector<2x16x1xf32> -> vector<2x16x1xf32>
    %127 = vector.broadcast %126 : vector<2x16x1xf32> to vector<2x16x8xf32>
    %128 = arith.mulf %125, %127 : vector<2x16x8xf32>
    %c0_93 = arith.constant 0 : index
    %c0_94 = arith.constant 0 : index
    %c24_95 = arith.constant 24 : index
    %129 = vector.load %arg13[%c0_93, %c0_94, %c24_95] : memref<2x16x32xf32, #tpu.memory_space<vmem>>, vector<2x16x8xf32>
    tpu.vector_store %arg13[%c0_93, %c0_94, %c24_95], %128 {strides = array<i32>} : memref<2x16x32xf32, #tpu.memory_space<vmem>>, vector<2x16x8xf32>,
    %c0_96 = arith.constant 0 : index
    %c0_97 = arith.constant 0 : index
    %c0_98 = arith.constant 0 : index
    %130 = vector.load %arg13[%c0_96, %c0_97, %c0_98] : memref<2x16x32xf32, #tpu.memory_space<vmem>>, vector<2x16x32xf32>
    %131 = vector.shape_cast %130 : vector<2x16x32xf32> to vector<32x32xf32>
    %c0_99 = arith.constant 0 : index
    %c0_100 = arith.constant 0 : index
    %132 = vector.load %arg7[%c0_99, %c0_100] : memref<32x32xf32, #tpu.memory_space<vmem>>, vector<32x32xf32>
    %cst_101 = arith.constant dense<0.000000e+00> : vector<32x32xf32>
    %133 = tpu.matmul %131, %132, %cst_101 {dimension_numbers = #tpu.dot_dimension_numbers<[1], [0], [0], [1], [0, 0, 1, 1], [], []>} : vector<32x32xf32>, vector<32x32xf32>, vector<32x32xf32> -> vector<32x32xf32>
    %c0_102 = arith.constant 0 : index
    %c0_103 = arith.constant 0 : index
    %134 = vector.load %arg8[%c0_102, %c0_103] : memref<1x32xf32, #tpu.memory_space<vmem>>, vector<1x32xf32>
    %135 = vector.broadcast %134 : vector<1x32xf32> to vector<32x32xf32>
    %136 = arith.addf %133, %135 : vector<32x32xf32>
    %137 = vector.shape_cast %136 : vector<32x32xf32> to vector<2x16x32xf32>
    %c0_104 = arith.constant 0 : index
    %c0_105 = arith.constant 0 : index
    %c0_106 = arith.constant 0 : index
    %138 = vector.load %arg9[%c0_104, %c0_105, %c0_106] : memref<2x16x32xf32, #tpu.memory_space<vmem>>, vector<2x16x32xf32>
    tpu.vector_store %arg9[%c0_104, %c0_105, %c0_106], %137 {strides = array<i32>} : memref<2x16x32xf32, #tpu.memory_space<vmem>>, vector<2x16x32xf32>,
    return
  }
  func.func @transform_0(%arg0: i32) -> (i32, i32, i32) {
    %c0_i32 = arith.constant 0 : i32
    %c0_i32_0 = arith.constant 0 : i32
    %c0_i32_1 = arith.constant 0 : i32
    return %arg0, %c0_i32, %c0_i32_0 : i32, i32, i32
  }
  func.func @transform_1(%arg0: i32) -> (i32, i32, i32) {
    %c0_i32 = arith.constant 0 : i32
    %c0_i32_0 = arith.constant 0 : i32
    %c0_i32_1 = arith.constant 0 : i32
    return %arg0, %c0_i32, %c0_i32_0 : i32, i32, i32
  }
  func.func @transform_2(%arg0: i32) -> (i32, i32) {
    %c0_i32 = arith.constant 0 : i32
    %c0_i32_0 = arith.constant 0 : i32
    %c0_i32_1 = arith.constant 0 : i32
    return %c0_i32, %c0_i32_0 : i32, i32
  }
  func.func @transform_3(%arg0: i32) -> (i32, i32) {
    %c0_i32 = arith.constant 0 : i32
    %c0_i32_0 = arith.constant 0 : i32
    %c0_i32_1 = arith.constant 0 : i32
    return %c0_i32, %c0_i32_0 : i32, i32
  }
  func.func @transform_4(%arg0: i32) -> (i32, i32) {
    %c0_i32 = arith.constant 0 : i32
    %c0_i32_0 = arith.constant 0 : i32
    %c0_i32_1 = arith.constant 0 : i32
    return %c0_i32, %c0_i32_0 : i32, i32
  }
  func.func @transform_5(%arg0: i32) -> (i32, i32) {
    %c0_i32 = arith.constant 0 : i32
    %c0_i32_0 = arith.constant 0 : i32
    %c0_i32_1 = arith.constant 0 : i32
    return %c0_i32, %c0_i32_0 : i32, i32
  }
  func.func @transform_6(%arg0: i32) -> (i32, i32) {
    %c0_i32 = arith.constant 0 : i32
    %c0_i32_0 = arith.constant 0 : i32
    %c0_i32_1 = arith.constant 0 : i32
    return %c0_i32, %c0_i32_0 : i32, i32
  }
  func.func @transform_7(%arg0: i32) -> (i32, i32) {
    %c0_i32 = arith.constant 0 : i32
    %c0_i32_0 = arith.constant 0 : i32
    %c0_i32_1 = arith.constant 0 : i32
    return %c0_i32, %c0_i32_0 : i32, i32
  }
  func.func @transform_8(%arg0: i32) -> (i32, i32, i32) {
    %c0_i32 = arith.constant 0 : i32
    %c0_i32_0 = arith.constant 0 : i32
    %c0_i32_1 = arith.constant 0 : i32
    return %arg0, %c0_i32, %c0_i32_0 : i32, i32, i32
  }
}

</mosaic_0001>

<llo_original>
// kernel: tpu_custom_call.1
$region0: #{tpu_custom_call.1}
  #allocation0 [shape = 'u32[]', space=smem, size = 0x4, offset = 0x4, fixed_abs, tag = 'smem constant byte address 0x4 - core index']
  #allocation1 [shape = 'u32[144,128]{1,0:T(1,128)}', space=vmem, size = 0x12000, scoped, tag = 'internal scratch']
  #allocation2 [shape = 'f32[2,16,32]{2,1,0:T(8,128)}', space=vmem, size = 0x4000, scoped, tag = 'scratch operand']
  #allocation3 [shape = 'f32[2,8,32]{2,1,0:T(8,128)}', space=vmem, size = 0x2000, scoped, tag = 'scratch operand']
  #allocation4 [shape = 'f32[2,8,32]{2,1,0:T(8,128)}', space=vmem, size = 0x2000, scoped, tag = 'scratch operand']
  #allocation5 [shape = 'f32[2,16,32]{2,1,0:T(8,128)}', space=vmem, size = 0x4000, scoped, tag = 'scratch operand']
  %s0 = inlined_call_operand.hbm [shape: f32[2,16,32], index: 0, kind: input, shape index: {}]
  %s1 = inlined_call_operand.hbm [shape: f32[2,8,32], index: 1, kind: input, shape index: {}]
  %s2 = inlined_call_operand.hbm [shape: f32[32,32], index: 2, kind: input, shape index: {}]
  %s3 = inlined_call_operand.hbm [shape: f32[1,32], index: 3, kind: input, shape index: {}]
  %s4 = inlined_call_operand.hbm [shape: f32[32,64], index: 4, kind: input, shape index: {}]
  %s5 = inlined_call_operand.hbm [shape: f32[1,64], index: 5, kind: input, shape index: {}]
  %s6 = inlined_call_operand.hbm [shape: f32[32,32], index: 6, kind: input, shape index: {}]
  %s7 = inlined_call_operand.hbm [shape: f32[1,32], index: 7, kind: input, shape index: {}]
  %s8 = inlined_call_operand.hbm [shape: f32[2,16,32], index: 8, kind: output, shape index: {}]
  %s9 = sld [smem:[#allocation0]]
  $region74: #{tpu_custom_call.1} parent=0
    _
  %s11 = ssub.s32 1, %s9
  %s12 = scalar_select 0, %s11, %s9
  $region1: #{tpu_custom_call.1} parent=0
    #allocation6 [shape = 'u8[16384]{0}', space=vmem, size = 0x4000, scoped, tag = 'input window, operand 0, single buffered']
    #allocation7 [shape = 's32[1]{0}', space=sflag, size = 0x4, scoped, tag = 'scoped memory for tpu_custom_call.1']
    #allocation8 [shape = 's32[1]{0}', space=sflag, size = 0x4, scoped, tag = 'scoped memory for tpu_custom_call.1']
    #allocation9 [shape = 'u8[8192]{0}', space=vmem, size = 0x2000, scoped, tag = 'input window, operand 1, single buffered']
    #allocation10 [shape = 's32[1]{0}', space=sflag, size = 0x4, scoped, tag = 'scoped memory for tpu_custom_call.1']
    #allocation11 [shape = 'u8[16384]{0}', space=vmem, size = 0x4000, scoped, tag = 'input window, operand 2, single buffered']
    #allocation12 [shape = 'u8[512]{0}', space=vmem, size = 0x400, scoped, tag = 'input window, operand 3, single buffered']
    #allocation13 [shape = 's32[1]{0}', space=sflag, size = 0x4, scoped, tag = 'scoped memory for tpu_custom_call.1']
    #allocation14 [shape = 'u8[16384]{0}', space=vmem, size = 0x4000, scoped, tag = 'input window, operand 4, single buffered']
    #allocation15 [shape = 'u8[512]{0}', space=vmem, size = 0x400, scoped, tag = 'input window, operand 5, single buffered']
    #allocation16 [shape = 's32[1]{0}', space=sflag, size = 0x4, scoped, tag = 'scoped memory for tpu_custom_call.1']
    #allocation17 [shape = 'u8[16384]{0}', space=vmem, size = 0x4000, scoped, tag = 'input window, operand 6, single buffered']
    #allocation18 [shape = 'u8[512]{0}', space=vmem, size = 0x400, scoped, tag = 'input window, operand 7, single buffered']
    #allocation19 [shape = 's32[1]{0}', space=sflag, size = 0x4, scoped, tag = 'scoped memory for tpu_custom_call.1']
    #allocation20 [shape = 'u8[16384]{0}', space=vmem, size = 0x4000, scoped, tag = 'output window, operand 0, single buffered']
    %13 = vsyncpa [#allocation7], 0
    %14 = vsyncpa [#allocation10], 0
    %15 = vsyncpa [#allocation13], 0
    %16 = vsyncpa [#allocation16], 0
    %17 = vsyncpa [#allocation19], 0
    %18 = vsyncpa [#allocation8], 0
    // Predicated region
    $region2: #{tpu_custom_call.1} parent=1 // pred_check
      _
    $region3: #{tpu_custom_call.1} parent=1 // pred_check_branch
      %20 = sbr.rel (0) target = $region5
    $region4: #{tpu_custom_call.1} parent=1 // pred_region
      %s22 = ssub.s32 512, 512
      %23 = vsyncadd [#allocation7], %s22
      %s24 = sshll.u32 [#allocation6], 4
      %s25 = int_to_ptr.vmem [resolvable:$true] %s24
      %30 = dma.hbm_to_vmem [thread:$0]  %s0, 512, %s25, [#allocation7], 128, 128, 8
    $region5: #{tpu_custom_call.1} parent=1 // pred_fallthru
      _
    // Predicated region
    $region6: #{tpu_custom_call.1} parent=1 // pred_check
      _
    $region7: #{tpu_custom_call.1} parent=1 // pred_check_branch
      %32 = sbr.rel (0) target = $region9
    $region8: #{tpu_custom_call.1} parent=1 // pred_region
      %s34 = ssub.s32 256, 256
      %35 = vsyncadd [#allocation10], %s34
      %s36 = sshll.u32 [#allocation9], 4
      %s37 = int_to_ptr.vmem [resolvable:$true] %s36
      %42 = dma.hbm_to_vmem [thread:$0]  %s1, 256, %s37, [#allocation10], 128, 128, 8
    $region9: #{tpu_custom_call.1} parent=1 // pred_fallthru
      _
    // Predicated region
    $region10: #{tpu_custom_call.1} parent=1 // pred_check
      _
    $region11: #{tpu_custom_call.1} parent=1 // pred_check_branch
      %44 = sbr.rel (0) target = $region13
    $region12: #{tpu_custom_call.1} parent=1 // pred_region
      %s46 = ssub.s32 512, 512
      %47 = vsyncadd [#allocation10], %s46
      %s48 = sshll.u32 [#allocation11], 4
      %s49 = int_to_ptr.vmem [resolvable:$true] %s48
      %54 = dma.hbm_to_vmem [thread:$0]  %s2, 512, %s49, [#allocation10], 128, 128, 8
    $region13: #{tpu_custom_call.1} parent=1 // pred_fallthru
      _
    // Predicated region
    $region14: #{tpu_custom_call.1} parent=1 // pred_check
      _
    $region15: #{tpu_custom_call.1} parent=1 // pred_check_branch
      %56 = sbr.rel (0) target = $region17
    $region16: #{tpu_custom_call.1} parent=1 // pred_region
      %s58 = ssub.s32 16, 16
      %59 = vsyncadd [#allocation13], %s58
      %s61 = sshll.u32 [#allocation12], 4
      %s62 = int_to_ptr.vmem [resolvable:$true] %s61
      %64 = dma.hbm_to_vmem [thread:$0]  %s3, 16, %s62, [#allocation13]
    $region17: #{tpu_custom_call.1} parent=1 // pred_fallthru
      _
    // Predicated region
    $region18: #{tpu_custom_call.1} parent=1 // pred_check
      _
    $region19: #{tpu_custom_call.1} parent=1 // pred_check_branch
      %66 = sbr.rel (0) target = $region21
    $region20: #{tpu_custom_call.1} parent=1 // pred_region
      %s68 = ssub.s32 512, 512
      %69 = vsyncadd [#allocation13], %s68
      %s70 = sshll.u32 [#allocation14], 4
      %s71 = int_to_ptr.vmem [resolvable:$true] %s70
      %76 = dma.hbm_to_vmem [thread:$0]  %s4, 512, %s71, [#allocation13], 128, 128, 8
    $region21: #{tpu_custom_call.1} parent=1 // pred_fallthru
      _
    // Predicated region
    $region22: #{tpu_custom_call.1} parent=1 // pred_check
      _
    $region23: #{tpu_custom_call.1} parent=1 // pred_check_branch
      %78 = sbr.rel (0) target = $region25
    $region24: #{tpu_custom_call.1} parent=1 // pred_region
      %s80 = ssub.s32 16, 16
      %81 = vsyncadd [#allocation16], %s80
      %s83 = sshll.u32 [#allocation15], 4
      %s84 = int_to_ptr.vmem [resolvable:$true] %s83
      %86 = dma.hbm_to_vmem [thread:$0]  %s5, 16, %s84, [#allocation16]
    $region25: #{tpu_custom_call.1} parent=1 // pred_fallthru
      _
    // Predicated region
    $region26: #{tpu_custom_call.1} parent=1 // pred_check
      _
    $region27: #{tpu_custom_call.1} parent=1 // pred_check_branch
      %88 = sbr.rel (0) target = $region29
    $region28: #{tpu_custom_call.1} parent=1 // pred_region
      %s90 = ssub.s32 512, 512
      %91 = vsyncadd [#allocation16], %s90
      %s92 = sshll.u32 [#allocation17], 4
      %s93 = int_to_ptr.vmem [resolvable:$true] %s92
      %98 = dma.hbm_to_vmem [thread:$0]  %s6, 512, %s93, [#allocation16], 128, 128, 8
    $region29: #{tpu_custom_call.1} parent=1 // pred_fallthru
      _
    // Predicated region
    $region30: #{tpu_custom_call.1} parent=1 // pred_check
      _
    $region31: #{tpu_custom_call.1} parent=1 // pred_check_branch
      %100 = sbr.rel (0) target = $region33
    $region32: #{tpu_custom_call.1} parent=1 // pred_region
      %s102 = ssub.s32 16, 16
      %103 = vsyncadd [#allocation19], %s102
      %s105 = sshll.u32 [#allocation18], 4
      %s106 = int_to_ptr.vmem [resolvable:$true] %s105
      %108 = dma.hbm_to_vmem [thread:$0]  %s7, 16, %s106, [#allocation19]
    $region33: #{tpu_custom_call.1} parent=1 // pred_fallthru
      _
    // Predicated region
    $region34: #{tpu_custom_call.1} parent=1 // pred_check
      _
    $region35: #{tpu_custom_call.1} parent=1 // pred_check_branch
      %110 = sbr.rel (0) target = $region37
    $region36: #{tpu_custom_call.1} parent=1 // pred_region
      %111 = dma.done [#allocation7], 512
    $region37: #{tpu_custom_call.1} parent=1 // pred_fallthru
      _
    // Predicated region
    $region38: #{tpu_custom_call.1} parent=1 // pred_check
      _
    $region39: #{tpu_custom_call.1} parent=1 // pred_check_branch
      %113 = sbr.rel (0) target = $region41
    $region40: #{tpu_custom_call.1} parent=1 // pred_region
      %114 = dma.done [#allocation10], 256
    $region41: #{tpu_custom_call.1} parent=1 // pred_fallthru
      _
    // Predicated region
    $region42: #{tpu_custom_call.1} parent=1 // pred_check
      _
    $region43: #{tpu_custom_call.1} parent=1 // pred_check_branch
      %116 = sbr.rel (0) target = $region45
    $region44: #{tpu_custom_call.1} parent=1 // pred_region
      %117 = dma.done [#allocation10], 512
    $region45: #{tpu_custom_call.1} parent=1 // pred_fallthru
      _
    // Predicated region
    $region46: #{tpu_custom_call.1} parent=1 // pred_check
      _
    $region47: #{tpu_custom_call.1} parent=1 // pred_check_branch
      %119 = sbr.rel (0) target = $region49
    $region48: #{tpu_custom_call.1} parent=1 // pred_region
      %120 = dma.done [#allocation13], 16
    $region49: #{tpu_custom_call.1} parent=1 // pred_fallthru
      _
    // Predicated region
    $region50: #{tpu_custom_call.1} parent=1 // pred_check
      _
    $region51: #{tpu_custom_call.1} parent=1 // pred_check_branch
      %122 = sbr.rel (0) target = $region53
    $region52: #{tpu_custom_call.1} parent=1 // pred_region
      %123 = dma.done [#allocation13], 512
    $region53: #{tpu_custom_call.1} parent=1 // pred_fallthru
      _
    // Predicated region
    $region54: #{tpu_custom_call.1} parent=1 // pred_check
      _
    $region55: #{tpu_custom_call.1} parent=1 // pred_check_branch
      %125 = sbr.rel (0) target = $region57
    $region56: #{tpu_custom_call.1} parent=1 // pred_region
      %126 = dma.done [#allocation16], 16
    $region57: #{tpu_custom_call.1} parent=1 // pred_fallthru
      _
    // Predicated region
    $region58: #{tpu_custom_call.1} parent=1 // pred_check
      _
    $region59: #{tpu_custom_call.1} parent=1 // pred_check_branch
      %128 = sbr.rel (0) target = $region61
    $region60: #{tpu_custom_call.1} parent=1 // pred_region
      %129 = dma.done [#allocation16], 512
    $region61: #{tpu_custom_call.1} parent=1 // pred_fallthru
      _
    // Predicated region
    $region62: #{tpu_custom_call.1} parent=1 // pred_check
      _
    $region63: #{tpu_custom_call.1} parent=1 // pred_check_branch
      %131 = sbr.rel (0) target = $region65
    $region64: #{tpu_custom_call.1} parent=1 // pred_region
      %132 = dma.done [#allocation19], 16
    $region65: #{tpu_custom_call.1} parent=1 // pred_fallthru
      _
    %v133 = vld [vmem:[#allocation6] sm:$0xff]
    %v134 = vld [vmem:[#allocation6 + $0x8] sm:$0xff]
    %v135 = vld [vmem:[#allocation6 + $0x10] sm:$0xff]
    %v136 = vld [vmem:[#allocation6 + $0x18] sm:$0xff]
    %v137 = vld [vmem:[#allocation9] sm:$0xff]
    %v138 = vld [vmem:[#allocation9 + $0x8] sm:$0xff]
    %v139 = vld [vmem:[#allocation11] sm:$0xff]
    %v140 = vld [vmem:[#allocation11 + $0x8] sm:$0xff]
    %v141 = vld [vmem:[#allocation11 + $0x10] sm:$0xff]
    %v142 = vld [vmem:[#allocation11 + $0x18] sm:$0xff]
    %v143 = vld [vmem:[#allocation12] sm:$0x1]
    %v145 = vlaneseq
    %v146 = vshrl.u32 %v145, 7
    %v147 = vsub.s32 0, %v146
    %v148 = vrot.slane %v143, %v147
    %vm150 = vcmask 261120
    %v152 = vsel %vm150, %v133, 0
    %v155 = vsel %vm150, %v134, 0
    %v158 = vsel %vm150, %v135, 0
    %v161 = vsel %vm150, %v136, 0
    %163 = vmatprep.subr.mxu0 0.0
    %164 = vmatpush1.msra.mxu0 %v139
    %165 = vmatprep.subr.mxu0 0.0
    %166 = vmatpush1.msra.mxu0 %v140
    %167 = vmatprep.subr.mxu0 0.0
    %168 = vmatpush1.msra.mxu0 %v141
    %169 = vmatprep.subr.mxu0 0.0
    %170 = vmatpush1.msra.mxu0 %v142
    %171 = vmatprep.subr.mxu0 0.0
    %172 = vmatpush1.msra.mxu0 0.0
    %173 = vmatprep.subr.mxu0 0.0
    %174 = vmatpush1.msra.mxu0 0.0
    %175 = vmatprep.subr.mxu0 0.0
    %176 = vmatpush1.msra.mxu0 0.0
    %177 = vmatprep.subr.mxu0 0.0
    %178 = vmatpush1.msra.mxu0 0.0
    %179 = vmatprep.subr.mxu0 0.0
    %180 = vmatpush1.msra.mxu0 0.0
    %181 = vmatprep.subr.mxu0 0.0
    %182 = vmatpush1.msra.mxu0 0.0
    %183 = vmatprep.subr.mxu0 0.0
    %184 = vmatpush1.msra.mxu0 0.0
    %185 = vmatprep.subr.mxu0 0.0
    %186 = vmatpush1.msra.mxu0 0.0
    %187 = vmatprep.subr.mxu0 0.0
    %188 = vmatpush1.msra.mxu0 0.0
    %189 = vmatprep.subr.mxu0 0.0
    %190 = vmatpush1.msra.mxu0 0.0
    %191 = vmatprep.subr.mxu0 0.0
    %192 = vmatpush1.msra.mxu0 0.0
    %193 = vmatprep.subr.mxu0 0.0
    %194 = vmatpush1.msra.mxu0 0.0
    %195 = vmatprep.subr.mxu0 0.0
    %196 = vmatpush1.msra.mxu0 0.0
    %197 = vmatprep.subr.mxu0 0.0
    %198 = vmatpush1.msra.mxu0 0.0
    %199 = vmatprep.subr.mxu0 0.0
    %200 = vmatpush1.msra.mxu0 0.0
    %201 = vmatprep.subr.mxu0 0.0
    %202 = vmatpush1.msra.mxu0 0.0
    %203 = vmatprep.subr.mxu0 0.0
    %204 = vmatpush1.msra.mxu0 0.0
    %205 = vmatprep.subr.mxu0 0.0
    %206 = vmatpush1.msra.mxu0 0.0
    %207 = vmatprep.subr.mxu0 0.0
    %208 = vmatpush1.msra.mxu0 0.0
    %209 = vmatprep.subr.mxu0 0.0
    %210 = vmatpush1.msra.mxu0 0.0
    %211 = vmatprep.subr.mxu0 0.0
    %212 = vmatpush1.msra.mxu0 0.0
    %213 = vmatprep.subr.mxu0 0.0
    %214 = vmatpush1.msra.mxu0 0.0
    %215 = vmatprep.subr.mxu0 0.0
    %216 = vmatpush1.msra.mxu0 0.0
    %217 = vmatprep.subr.mxu0 0.0
    %218 = vmatpush1.msra.mxu0 0.0
    %219 = vmatprep.subr.mxu0 0.0
    %220 = vmatpush1.msra.mxu0 0.0
    %221 = vmatprep.subr.mxu0 0.0
    %222 = vmatpush1.msra.mxu0 0.0
    %223 = vmatprep.subr.mxu0 0.0
    %224 = vmatpush1.msra.mxu0 0.0
    %225 = vmatprep.subr.mxu0 0.0
    %226 = vmatpush1.msra.mxu0 0.0
    %227 = vmatprep.mubr.f32.mxu0 0.0
    %228 = vmatmul.mubr.f32.gmra.mrb[0].mxu0 %v152
    %v229 = vpop.f32.mrb[0].mxu0
    %v230 = vadd.f32 %v148, %v229
    %v231 = vpop.f32.mrb[0].mxu0
    %232 = vmatprep.mubr.f32.mxu0 0.0
    %233 = vmatmul.mubr.f32.gmra.mrb[0].mxu0 %v155
    %v234 = vpop.f32.mrb[0].mxu0
    %v235 = vadd.f32 %v148, %v234
    %v236 = vpop.f32.mrb[0].mxu0
    %237 = vmatprep.mubr.f32.mxu0 0.0
    %238 = vmatmul.mubr.f32.gmra.mrb[0].mxu0 %v158
    %v239 = vpop.f32.mrb[0].mxu0
    %v240 = vadd.f32 %v148, %v239
    %v241 = vpop.f32.mrb[0].mxu0
    %242 = vmatprep.mubr.f32.mxu0 0.0
    %243 = vmatmul.mubr.f32.gmra.mrb[0].mxu0 %v161
    %v244 = vpop.f32.mrb[0].mxu0
    %v245 = vadd.f32 %v148, %v244
    %v246 = vpop.f32.mrb[0].mxu0
    %247 = vdwg.mxu0
    %v248 = vld [vmem:[#allocation14] sm:$0xff]
    %v249 = vld [vmem:[#allocation14 + $0x8] sm:$0xff]
    %v250 = vld [vmem:[#allocation14 + $0x10] sm:$0xff]
    %v251 = vld [vmem:[#allocation14 + $0x18] sm:$0xff]
    %v252 = vld [vmem:[#allocation15] sm:$0x1]
    %v254 = vlaneseq
    %v255 = vshrl.u32 %v254, 7
    %v256 = vsub.s32 0, %v255
    %v257 = vrot.slane %v252, %v256
    %v260 = vsel %vm150, %v137, 0
    %v263 = vsel %vm150, %v138, 0
    %265 = vmatprep.subr.mxu0 0.0
    %266 = vmatpush1.msra.mxu0 %v248
    %267 = vmatprep.subr.mxu0 0.0
    %268 = vmatpush1.msra.mxu0 %v249
    %269 = vmatprep.subr.mxu0 0.0
    %270 = vmatpush1.msra.mxu0 %v250
    %271 = vmatprep.subr.mxu0 0.0
    %272 = vmatpush1.msra.mxu0 %v251
    %273 = vmatprep.subr.mxu0 0.0
    %274 = vmatpush1.msra.mxu0 0.0
    %275 = vmatprep.subr.mxu0 0.0
    %276 = vmatpush1.msra.mxu0 0.0
    %277 = vmatprep.subr.mxu0 0.0
    %278 = vmatpush1.msra.mxu0 0.0
    %279 = vmatprep.subr.mxu0 0.0
    %280 = vmatpush1.msra.mxu0 0.0
    %281 = vmatprep.subr.mxu0 0.0
    %282 = vmatpush1.msra.mxu0 0.0
    %283 = vmatprep.subr.mxu0 0.0
    %284 = vmatpush1.msra.mxu0 0.0
    %285 = vmatprep.subr.mxu0 0.0
    %286 = vmatpush1.msra.mxu0 0.0
    %287 = vmatprep.subr.mxu0 0.0
    %288 = vmatpush1.msra.mxu0 0.0
    %289 = vmatprep.subr.mxu0 0.0
    %290 = vmatpush1.msra.mxu0 0.0
    %291 = vmatprep.subr.mxu0 0.0
    %292 = vmatpush1.msra.mxu0 0.0
    %293 = vmatprep.subr.mxu0 0.0
    %294 = vmatpush1.msra.mxu0 0.0
    %295 = vmatprep.subr.mxu0 0.0
    %296 = vmatpush1.msra.mxu0 0.0
    %297 = vmatprep.subr.mxu0 0.0
    %298 = vmatpush1.msra.mxu0 0.0
    %299 = vmatprep.subr.mxu0 0.0
    %300 = vmatpush1.msra.mxu0 0.0
    %301 = vmatprep.subr.mxu0 0.0
    %302 = vmatpush1.msra.mxu0 0.0
    %303 = vmatprep.subr.mxu0 0.0
    %304 = vmatpush1.msra.mxu0 0.0
    %305 = vmatprep.subr.mxu0 0.0
    %306 = vmatpush1.msra.mxu0 0.0
    %307 = vmatprep.subr.mxu0 0.0
    %308 = vmatpush1.msra.mxu0 0.0
    %309 = vmatprep.subr.mxu0 0.0
    %310 = vmatpush1.msra.mxu0 0.0
    %311 = vmatprep.subr.mxu0 0.0
    %312 = vmatpush1.msra.mxu0 0.0
    %313 = vmatprep.subr.mxu0 0.0
    %314 = vmatpush1.msra.mxu0 0.0
    %315 = vmatprep.subr.mxu0 0.0
    %316 = vmatpush1.msra.mxu0 0.0
    %317 = vmatprep.subr.mxu0 0.0
    %318 = vmatpush1.msra.mxu0 0.0
    %319 = vmatprep.subr.mxu0 0.0
    %320 = vmatpush1.msra.mxu0 0.0
    %321 = vmatprep.subr.mxu0 0.0
    %322 = vmatpush1.msra.mxu0 0.0
    %323 = vmatprep.subr.mxu0 0.0
    %324 = vmatpush1.msra.mxu0 0.0
    %325 = vmatprep.subr.mxu0 0.0
    %326 = vmatpush1.msra.mxu0 0.0
    %327 = vmatprep.subr.mxu0 0.0
    %328 = vmatpush1.msra.mxu0 0.0
    %329 = vmatprep.mubr.f32.mxu0 0.0
    %330 = vmatmul.mubr.f32.gmra.mrb[0].mxu0 %v260
    %v331 = vpop.f32.mrb[0].mxu0
    %v332 = vadd.f32 %v257, %v331
    %v333 = vpop.f32.mrb[0].mxu0
    %334 = vmatprep.mubr.f32.mxu0 0.0
    %335 = vmatmul.mubr.f32.gmra.mrb[0].mxu0 %v263
    %v336 = vpop.f32.mrb[0].mxu0
    %v337 = vadd.f32 %v257, %v336
    %v338 = vpop.f32.mrb[0].mxu0
    %339 = vdwg.mxu0
    %340 = vst.msk [vmem:[#allocation2] sm:$0xff] %vm150, %v230
    %341 = vst.msk [vmem:[#allocation2 + $0x8] sm:$0xff] %vm150, %v235
    %342 = vst.msk [vmem:[#allocation2 + $0x10] sm:$0xff] %vm150, %v240
    %343 = vst.msk [vmem:[#allocation2 + $0x18] sm:$0xff] %vm150, %v245
    %344 = vst.msk [vmem:[#allocation3] sm:$0xff] %vm150, %v332
    %345 = vst.msk [vmem:[#allocation3 + $0x8] sm:$0xff] %vm150, %v337
    %348 = vrot.lane.b32.xlu0 %v332, 96
    %v349 = vpop.permute.xlu0 %348
    %350 = vrot.lane.b32.xlu0 %v337, 96
    %v351 = vpop.permute.xlu0 %350
    %354 = vst.msk [vmem:[#allocation4] sm:$0xff] %vm150, %v349
    %355 = vst.msk [vmem:[#allocation4 + $0x8] sm:$0xff] %vm150, %v351
    %v356 = vld [vmem:[#allocation2] sm:$0xff]
    %v357 = vld [vmem:[#allocation2 + $0x8] sm:$0xff]
    %v358 = vld [vmem:[#allocation2 + $0x10] sm:$0xff]
    %v359 = vld [vmem:[#allocation2 + $0x18] sm:$0xff]
    %v360 = vld [vmem:[#allocation3] sm:$0xff]
    %v361 = vld [vmem:[#allocation3 + $0x8] sm:$0xff]
    %v362 = vld [vmem:[#allocation4] sm:$0xff]
    %v363 = vld [vmem:[#allocation4 + $0x8] sm:$0xff]
    %vm364 = vcmask 64512
    %v366 = vsel %vm364, %v356, 0
    %v369 = vsel %vm364, %v357, 0
    %v372 = vsel %vm364, %v360, 0
    %374 = vmatprep.subr.mxu0 0.0
    %375 = vmatpush1.xpose.msra.mxu0 %v372
    %376 = vmatprep.subr.mxu0 0.0
    %377 = vmatpush1.xpose.msra.mxu0 0.0
    %378 = vmatprep.subr.mxu0 0.0
    %379 = vmatpush1.xpose.msra.mxu0 0.0
    %380 = vmatprep.subr.mxu0 0.0
    %381 = vmatpush1.xpose.msra.mxu0 0.0
    %382 = vmatprep.subr.mxu0 0.0
    %383 = vmatpush1.xpose.msra.mxu0 0.0
    %384 = vmatprep.subr.mxu0 0.0
    %385 = vmatpush1.xpose.msra.mxu0 0.0
    %386 = vmatprep.subr.mxu0 0.0
    %387 = vmatpush1.xpose.msra.mxu0 0.0
    %388 = vmatprep.subr.mxu0 0.0
    %389 = vmatpush1.xpose.msra.mxu0 0.0
    %390 = vmatprep.subr.mxu0 0.0
    %391 = vmatpush1.xpose.msra.mxu0 0.0
    %392 = vmatprep.subr.mxu0 0.0
    %393 = vmatpush1.xpose.msra.mxu0 0.0
    %394 = vmatprep.subr.mxu0 0.0
    %395 = vmatpush1.xpose.msra.mxu0 0.0
    %396 = vmatprep.subr.mxu0 0.0
    %397 = vmatpush1.xpose.msra.mxu0 0.0
    %398 = vmatprep.subr.mxu0 0.0
    %399 = vmatpush1.xpose.msra.mxu0 0.0
    %400 = vmatprep.subr.mxu0 0.0
    %401 = vmatpush1.xpose.msra.mxu0 0.0
    %402 = vmatprep.subr.mxu0 0.0
    %403 = vmatpush1.xpose.msra.mxu0 0.0
    %404 = vmatprep.subr.mxu0 0.0
    %405 = vmatpush1.xpose.msra.mxu0 0.0
    %406 = vmatprep.subr.mxu0 0.0
    %407 = vmatpush1.xpose.msra.mxu0 0.0
    %408 = vmatprep.subr.mxu0 0.0
    %409 = vmatpush1.xpose.msra.mxu0 0.0
    %410 = vmatprep.subr.mxu0 0.0
    %411 = vmatpush1.xpose.msra.mxu0 0.0
    %412 = vmatprep.subr.mxu0 0.0
    %413 = vmatpush1.xpose.msra.mxu0 0.0
    %414 = vmatprep.subr.mxu0 0.0
    %415 = vmatpush1.xpose.msra.mxu0 0.0
    %416 = vmatprep.subr.mxu0 0.0
    %417 = vmatpush1.xpose.msra.mxu0 0.0
    %418 = vmatprep.subr.mxu0 0.0
    %419 = vmatpush1.xpose.msra.mxu0 0.0
    %420 = vmatprep.subr.mxu0 0.0
    %421 = vmatpush1.xpose.msra.mxu0 0.0
    %422 = vmatprep.subr.mxu0 0.0
    %423 = vmatpush1.xpose.msra.mxu0 0.0
    %424 = vmatprep.subr.mxu0 0.0
    %425 = vmatpush1.xpose.msra.mxu0 0.0
    %426 = vmatprep.subr.mxu0 0.0
    %427 = vmatpush1.xpose.msra.mxu0 0.0
    %428 = vmatprep.subr.mxu0 0.0
    %429 = vmatpush1.xpose.msra.mxu0 0.0
    %430 = vmatprep.subr.mxu0 0.0
    %431 = vmatpush1.xpose.msra.mxu0 0.0
    %432 = vmatprep.subr.mxu0 0.0
    %433 = vmatpush1.xpose.msra.mxu0 0.0
    %434 = vmatprep.subr.mxu0 0.0
    %435 = vmatpush1.xpose.msra.mxu0 0.0
    %436 = vmatprep.subr.mxu0 0.0
    %437 = vmatpush1.xpose.msra.mxu0 0.0
    %438 = vmatprep.mubr.f32.mxu0 0.0
    %439 = vmatmul.mubr.f32.gmra.mrb[0].mxu0 %v366
    %v440 = vpop.f32.mrb[0].mxu0
    %v441 = vadd.f32 0.0, %v440
    %v442 = vpop.f32.mrb[0].mxu0
    %443 = vmatprep.mubr.f32.mxu0 0.0
    %444 = vmatmul.mubr.f32.gmra.mrb[0].mxu0 %v369
    %v445 = vpop.f32.mrb[0].mxu0
    %v446 = vadd.f32 0.0, %v445
    %v447 = vpop.f32.mrb[0].mxu0
    %448 = vdwg.mxu0
    %v450 = vsel %vm364, %v358, 0
    %v453 = vsel %vm364, %v359, 0
    %v456 = vsel %vm364, %v361, 0
    %458 = vmatprep.subr.mxu0 0.0
    %459 = vmatpush1.xpose.msra.mxu0 %v456
    %460 = vmatprep.subr.mxu0 0.0
    %461 = vmatpush1.xpose.msra.mxu0 0.0
    %462 = vmatprep.subr.mxu0 0.0
    %463 = vmatpush1.xpose.msra.mxu0 0.0
    %464 = vmatprep.subr.mxu0 0.0
    %465 = vmatpush1.xpose.msra.mxu0 0.0
    %466 = vmatprep.subr.mxu0 0.0
    %467 = vmatpush1.xpose.msra.mxu0 0.0
    %468 = vmatprep.subr.mxu0 0.0
    %469 = vmatpush1.xpose.msra.mxu0 0.0
    %470 = vmatprep.subr.mxu0 0.0
    %471 = vmatpush1.xpose.msra.mxu0 0.0
    %472 = vmatprep.subr.mxu0 0.0
    %473 = vmatpush1.xpose.msra.mxu0 0.0
    %474 = vmatprep.subr.mxu0 0.0
    %475 = vmatpush1.xpose.msra.mxu0 0.0
    %476 = vmatprep.subr.mxu0 0.0
    %477 = vmatpush1.xpose.msra.mxu0 0.0
    %478 = vmatprep.subr.mxu0 0.0
    %479 = vmatpush1.xpose.msra.mxu0 0.0
    %480 = vmatprep.subr.mxu0 0.0
    %481 = vmatpush1.xpose.msra.mxu0 0.0
    %482 = vmatprep.subr.mxu0 0.0
    %483 = vmatpush1.xpose.msra.mxu0 0.0
    %484 = vmatprep.subr.mxu0 0.0
    %485 = vmatpush1.xpose.msra.mxu0 0.0
    %486 = vmatprep.subr.mxu0 0.0
    %487 = vmatpush1.xpose.msra.mxu0 0.0
    %488 = vmatprep.subr.mxu0 0.0
    %489 = vmatpush1.xpose.msra.mxu0 0.0
    %490 = vmatprep.subr.mxu0 0.0
    %491 = vmatpush1.xpose.msra.mxu0 0.0
    %492 = vmatprep.subr.mxu0 0.0
    %493 = vmatpush1.xpose.msra.mxu0 0.0
    %494 = vmatprep.subr.mxu0 0.0
    %495 = vmatpush1.xpose.msra.mxu0 0.0
    %496 = vmatprep.subr.mxu0 0.0
    %497 = vmatpush1.xpose.msra.mxu0 0.0
    %498 = vmatprep.subr.mxu0 0.0
    %499 = vmatpush1.xpose.msra.mxu0 0.0
    %500 = vmatprep.subr.mxu0 0.0
    %501 = vmatpush1.xpose.msra.mxu0 0.0
    %502 = vmatprep.subr.mxu0 0.0
    %503 = vmatpush1.xpose.msra.mxu0 0.0
    %504 = vmatprep.subr.mxu0 0.0
    %505 = vmatpush1.xpose.msra.mxu0 0.0
    %506 = vmatprep.subr.mxu0 0.0
    %507 = vmatpush1.xpose.msra.mxu0 0.0
    %508 = vmatprep.subr.mxu0 0.0
    %509 = vmatpush1.xpose.msra.mxu0 0.0
    %510 = vmatprep.subr.mxu0 0.0
    %511 = vmatpush1.xpose.msra.mxu0 0.0
    %512 = vmatprep.subr.mxu0 0.0
    %513 = vmatpush1.xpose.msra.mxu0 0.0
    %514 = vmatprep.subr.mxu0 0.0
    %515 = vmatpush1.xpose.msra.mxu0 0.0
    %516 = vmatprep.subr.mxu0 0.0
    %517 = vmatpush1.xpose.msra.mxu0 0.0
    %518 = vmatprep.subr.mxu0 0.0
    %519 = vmatpush1.xpose.msra.mxu0 0.0
    %520 = vmatprep.subr.mxu0 0.0
    %521 = vmatpush1.xpose.msra.mxu0 0.0
    %522 = vmatprep.mubr.f32.mxu0 0.0
    %523 = vmatmul.mubr.f32.gmra.mrb[0].mxu0 %v450
    %v524 = vpop.f32.mrb[0].mxu0
    %v525 = vadd.f32 0.0, %v524
    %v526 = vpop.f32.mrb[0].mxu0
    %527 = vmatprep.mubr.f32.mxu0 0.0
    %528 = vmatmul.mubr.f32.gmra.mrb[0].mxu0 %v453
    %v529 = vpop.f32.mrb[0].mxu0
    %v530 = vadd.f32 0.0, %v529
    %v531 = vpop.f32.mrb[0].mxu0
    %532 = vdwg.mxu0
    %v533 = vsel %vm364, %v441, -inf
    %534 = vmax.xlane.f32.xlu0 %v533
    %v535 = vpop.xlane.xlu0 %534
    %v536 = vsel %vm364, %v446, -inf
    %537 = vmax.xlane.f32.xlu0 %v536
    %v538 = vpop.xlane.xlu0 %537
    %v539 = vsel %vm364, %v525, -inf
    %540 = vmax.xlane.f32.xlu0 %v539
    %v541 = vpop.xlane.xlu0 %540
    %v542 = vsel %vm364, %v530, -inf
    %543 = vmax.xlane.f32.xlu0 %v542
    %v544 = vpop.xlane.xlu0 %543
    %v545 = vsub.f32 -inf, %v535
    %v546 = vsub.f32 -inf, %v538
    %v547 = vsub.f32 -inf, %v541
    %v548 = vsub.f32 -inf, %v544
    %v549 = vmul.f32 %v545, 1.442695
    %v550 = vpow.pop %v549
    %v551 = vmul.f32 %v546, 1.442695
    %v552 = vpow.pop %v551
    %v553 = vmul.f32 %v547, 1.442695
    %v554 = vpow.pop %v553
    %v555 = vmul.f32 %v548, 1.442695
    %v556 = vpow.pop %v555
    %v557 = vsub.f32 %v441, %v535
    %v558 = vsub.f32 %v446, %v538
    %v559 = vsub.f32 %v525, %v541
    %v560 = vsub.f32 %v530, %v544
    %v561 = vmul.f32 %v557, 1.442695
    %v562 = vpow.pop %v561
    %v563 = vmul.f32 %v558, 1.442695
    %v564 = vpow.pop %v563
    %v565 = vmul.f32 %v559, 1.442695
    %v566 = vpow.pop %v565
    %v567 = vmul.f32 %v560, 1.442695
    %v568 = vpow.pop %v567
    %v569 = vsel %vm364, %v562, 0.0
    %570 = vadd.xlane.f32.xlu0 %v569
    %v571 = vpop.xlane.xlu0 %570
    %v572 = vsel %vm364, %v564, 0.0
    %573 = vadd.xlane.f32.xlu0 %v572
    %v574 = vpop.xlane.xlu0 %573
    %v575 = vsel %vm364, %v566, 0.0
    %576 = vadd.xlane.f32.xlu0 %v575
    %v577 = vpop.xlane.xlu0 %576
    %v578 = vsel %vm364, %v568, 0.0
    %579 = vadd.xlane.f32.xlu0 %v578
    %v580 = vpop.xlane.xlu0 %579
    %v581 = vmul.f32 %v550, 0.0
    %v582 = vmul.f32 %v552, 0.0
    %v583 = vmul.f32 %v554, 0.0
    %v584 = vmul.f32 %v556, 0.0
    %v585 = vadd.f32 %v581, %v571
    %v586 = vadd.f32 %v582, %v574
    %v587 = vadd.f32 %v583, %v577
    %v588 = vadd.f32 %v584, %v580
    %v590 = vsel %vm364, %v562, 0
    %v593 = vsel %vm364, %v564, 0
    %595 = vmatprep.subr.mxu0 0.0
    %596 = vmatpush1.msra.mxu0 %v362
    %597 = vmatprep.subr.mxu0 0.0
    %598 = vmatpush1.msra.mxu0 0.0
    %599 = vmatprep.subr.mxu0 0.0
    %600 = vmatpush1.msra.mxu0 0.0
    %601 = vmatprep.subr.mxu0 0.0
    %602 = vmatpush1.msra.mxu0 0.0
    %603 = vmatprep.subr.mxu0 0.0
    %604 = vmatpush1.msra.mxu0 0.0
    %605 = vmatprep.subr.mxu0 0.0
    %606 = vmatpush1.msra.mxu0 0.0
    %607 = vmatprep.subr.mxu0 0.0
    %608 = vmatpush1.msra.mxu0 0.0
    %609 = vmatprep.subr.mxu0 0.0
    %610 = vmatpush1.msra.mxu0 0.0
    %611 = vmatprep.subr.mxu0 0.0
    %612 = vmatpush1.msra.mxu0 0.0
    %613 = vmatprep.subr.mxu0 0.0
    %614 = vmatpush1.msra.mxu0 0.0
    %615 = vmatprep.subr.mxu0 0.0
    %616 = vmatpush1.msra.mxu0 0.0
    %617 = vmatprep.subr.mxu0 0.0
    %618 = vmatpush1.msra.mxu0 0.0
    %619 = vmatprep.subr.mxu0 0.0
    %620 = vmatpush1.msra.mxu0 0.0
    %621 = vmatprep.subr.mxu0 0.0
    %622 = vmatpush1.msra.mxu0 0.0
    %623 = vmatprep.subr.mxu0 0.0
    %624 = vmatpush1.msra.mxu0 0.0
    %625 = vmatprep.subr.mxu0 0.0
    %626 = vmatpush1.msra.mxu0 0.0
    %627 = vmatprep.subr.mxu0 0.0
    %628 = vmatpush1.msra.mxu0 0.0
    %629 = vmatprep.subr.mxu0 0.0
    %630 = vmatpush1.msra.mxu0 0.0
    %631 = vmatprep.subr.mxu0 0.0
    %632 = vmatpush1.msra.mxu0 0.0
    %633 = vmatprep.subr.mxu0 0.0
    %634 = vmatpush1.msra.mxu0 0.0
    %635 = vmatprep.subr.mxu0 0.0
    %636 = vmatpush1.msra.mxu0 0.0
    %637 = vmatprep.subr.mxu0 0.0
    %638 = vmatpush1.msra.mxu0 0.0
    %639 = vmatprep.subr.mxu0 0.0
    %640 = vmatpush1.msra.mxu0 0.0
    %641 = vmatprep.subr.mxu0 0.0
    %642 = vmatpush1.msra.mxu0 0.0
    %643 = vmatprep.subr.mxu0 0.0
    %644 = vmatpush1.msra.mxu0 0.0
    %645 = vmatprep.subr.mxu0 0.0
    %646 = vmatpush1.msra.mxu0 0.0
    %647 = vmatprep.subr.mxu0 0.0
    %648 = vmatpush1.msra.mxu0 0.0
    %649 = vmatprep.subr.mxu0 0.0
    %650 = vmatpush1.msra.mxu0 0.0
    %651 = vmatprep.subr.mxu0 0.0
    %652 = vmatpush1.msra.mxu0 0.0
    %653 = vmatprep.subr.mxu0 0.0
    %654 = vmatpush1.msra.mxu0 0.0
    %655 = vmatprep.subr.mxu0 0.0
    %656 = vmatpush1.msra.mxu0 0.0
    %657 = vmatprep.subr.mxu0 0.0
    %658 = vmatpush1.msra.mxu0 0.0
    %659 = vmatprep.mubr.f32.mxu0 0.0
    %660 = vmatmul.mubr.f32.gmra.mrb[0].mxu0 %v590
    %v661 = vpop.f32.mrb[0].mxu0
    %v662 = vadd.f32 0.0, %v661
    %v663 = vpop.f32.mrb[0].mxu0
    %664 = vmatprep.mubr.f32.mxu0 0.0
    %665 = vmatmul.mubr.f32.gmra.mrb[0].mxu0 %v593
    %v666 = vpop.f32.mrb[0].mxu0
    %v667 = vadd.f32 0.0, %v666
    %v668 = vpop.f32.mrb[0].mxu0
    %669 = vdwg.mxu0
    %v671 = vsel %vm364, %v566, 0
    %v674 = vsel %vm364, %v568, 0
    %676 = vmatprep.subr.mxu0 0.0
    %677 = vmatpush1.msra.mxu0 %v363
    %678 = vmatprep.subr.mxu0 0.0
    %679 = vmatpush1.msra.mxu0 0.0
    %680 = vmatprep.subr.mxu0 0.0
    %681 = vmatpush1.msra.mxu0 0.0
    %682 = vmatprep.subr.mxu0 0.0
    %683 = vmatpush1.msra.mxu0 0.0
    %684 = vmatprep.subr.mxu0 0.0
    %685 = vmatpush1.msra.mxu0 0.0
    %686 = vmatprep.subr.mxu0 0.0
    %687 = vmatpush1.msra.mxu0 0.0
    %688 = vmatprep.subr.mxu0 0.0
    %689 = vmatpush1.msra.mxu0 0.0
    %690 = vmatprep.subr.mxu0 0.0
    %691 = vmatpush1.msra.mxu0 0.0
    %692 = vmatprep.subr.mxu0 0.0
    %693 = vmatpush1.msra.mxu0 0.0
    %694 = vmatprep.subr.mxu0 0.0
    %695 = vmatpush1.msra.mxu0 0.0
    %696 = vmatprep.subr.mxu0 0.0
    %697 = vmatpush1.msra.mxu0 0.0
    %698 = vmatprep.subr.mxu0 0.0
    %699 = vmatpush1.msra.mxu0 0.0
    %700 = vmatprep.subr.mxu0 0.0
    %701 = vmatpush1.msra.mxu0 0.0
    %702 = vmatprep.subr.mxu0 0.0
    %703 = vmatpush1.msra.mxu0 0.0
    %704 = vmatprep.subr.mxu0 0.0
    %705 = vmatpush1.msra.mxu0 0.0
    %706 = vmatprep.subr.mxu0 0.0
    %707 = vmatpush1.msra.mxu0 0.0
    %708 = vmatprep.subr.mxu0 0.0
    %709 = vmatpush1.msra.mxu0 0.0
    %710 = vmatprep.subr.mxu0 0.0
    %711 = vmatpush1.msra.mxu0 0.0
    %712 = vmatprep.subr.mxu0 0.0
    %713 = vmatpush1.msra.mxu0 0.0
    %714 = vmatprep.subr.mxu0 0.0
    %715 = vmatpush1.msra.mxu0 0.0
    %716 = vmatprep.subr.mxu0 0.0
    %717 = vmatpush1.msra.mxu0 0.0
    %718 = vmatprep.subr.mxu0 0.0
    %719 = vmatpush1.msra.mxu0 0.0
    %720 = vmatprep.subr.mxu0 0.0
    %721 = vmatpush1.msra.mxu0 0.0
    %722 = vmatprep.subr.mxu0 0.0
    %723 = vmatpush1.msra.mxu0 0.0
    %724 = vmatprep.subr.mxu0 0.0
    %725 = vmatpush1.msra.mxu0 0.0
    %726 = vmatprep.subr.mxu0 0.0
    %727 = vmatpush1.msra.mxu0 0.0
    %728 = vmatprep.subr.mxu0 0.0
    %729 = vmatpush1.msra.mxu0 0.0
    %730 = vmatprep.subr.mxu0 0.0
    %731 = vmatpush1.msra.mxu0 0.0
    %732 = vmatprep.subr.mxu0 0.0
    %733 = vmatpush1.msra.mxu0 0.0
    %734 = vmatprep.subr.mxu0 0.0
    %735 = vmatpush1.msra.mxu0 0.0
    %736 = vmatprep.subr.mxu0 0.0
    %737 = vmatpush1.msra.mxu0 0.0
    %738 = vmatprep.subr.mxu0 0.0
    %739 = vmatpush1.msra.mxu0 0.0
    %740 = vmatprep.mubr.f32.mxu0 0.0
    %741 = vmatmul.mubr.f32.gmra.mrb[0].mxu0 %v671
    %v742 = vpop.f32.mrb[0].mxu0
    %v743 = vadd.f32 0.0, %v742
    %v744 = vpop.f32.mrb[0].mxu0
    %745 = vmatprep.mubr.f32.mxu0 0.0
    %746 = vmatmul.mubr.f32.gmra.mrb[0].mxu0 %v674
    %v747 = vpop.f32.mrb[0].mxu0
    %v748 = vadd.f32 0.0, %v747
    %v749 = vpop.f32.mrb[0].mxu0
    %750 = vdwg.mxu0
    %v751 = vadd.f32 %v581, %v662
    %v752 = vadd.f32 %v582, %v667
    %v753 = vadd.f32 %v583, %v743
    %v754 = vadd.f32 %v584, %v748
    %v755 = vrcp.pop %v585
    %v756 = vrcp.pop %v586
    %v757 = vrcp.pop %v587
    %v758 = vrcp.pop %v588
    %v759 = vmul.f32 %v751, %v755
    %v760 = vmul.f32 %v752, %v756
    %v761 = vmul.f32 %v753, %v757
    %v762 = vmul.f32 %v754, %v758
    %763 = vst.msk [vmem:[#allocation5] sm:$0xff] %vm364, %v759
    %764 = vst.msk [vmem:[#allocation5 + $0x8] sm:$0xff] %vm364, %v760
    %765 = vst.msk [vmem:[#allocation5 + $0x10] sm:$0xff] %vm364, %v761
    %766 = vst.msk [vmem:[#allocation5 + $0x18] sm:$0xff] %vm364, %v762
    %v767 = vld [vmem:[#allocation2] sm:$0xff]
    %v768 = vld [vmem:[#allocation2 + $0x8] sm:$0xff]
    %v769 = vld [vmem:[#allocation2 + $0x10] sm:$0xff]
    %v770 = vld [vmem:[#allocation2 + $0x18] sm:$0xff]
    %v771 = vld [vmem:[#allocation3] sm:$0xff]
    %v772 = vld [vmem:[#allocation3 + $0x8] sm:$0xff]
    %v773 = vld [vmem:[#allocation4] sm:$0xff]
    %v774 = vld [vmem:[#allocation4 + $0x8] sm:$0xff]
    %777 = vrot.lane.b32.xlu0 %v767, 120
    %v778 = vpop.permute.xlu0 %777
    %779 = vrot.lane.b32.xlu0 %v768, 120
    %v780 = vpop.permute.xlu0 %779
    %782 = vrot.lane.b32.xlu0 %v771, 120
    %v783 = vpop.permute.xlu0 %782
    %v784 = vsel %vm364, %v778, 0
    %v786 = vsel %vm364, %v780, 0
    %v788 = vsel %vm364, %v783, 0
    %790 = vmatprep.subr.mxu0 0.0
    %791 = vmatpush1.xpose.msra.mxu0 %v788
    %792 = vmatprep.subr.mxu0 0.0
    %793 = vmatpush1.xpose.msra.mxu0 0.0
    %794 = vmatprep.subr.mxu0 0.0
    %795 = vmatpush1.xpose.msra.mxu0 0.0
    %796 = vmatprep.subr.mxu0 0.0
    %797 = vmatpush1.xpose.msra.mxu0 0.0
    %798 = vmatprep.subr.mxu0 0.0
    %799 = vmatpush1.xpose.msra.mxu0 0.0
    %800 = vmatprep.subr.mxu0 0.0
    %801 = vmatpush1.xpose.msra.mxu0 0.0
    %802 = vmatprep.subr.mxu0 0.0
    %803 = vmatpush1.xpose.msra.mxu0 0.0
    %804 = vmatprep.subr.mxu0 0.0
    %805 = vmatpush1.xpose.msra.mxu0 0.0
    %806 = vmatprep.subr.mxu0 0.0
    %807 = vmatpush1.xpose.msra.mxu0 0.0
    %808 = vmatprep.subr.mxu0 0.0
    %809 = vmatpush1.xpose.msra.mxu0 0.0
    %810 = vmatprep.subr.mxu0 0.0
    %811 = vmatpush1.xpose.msra.mxu0 0.0
    %812 = vmatprep.subr.mxu0 0.0
    %813 = vmatpush1.xpose.msra.mxu0 0.0
    %814 = vmatprep.subr.mxu0 0.0
    %815 = vmatpush1.xpose.msra.mxu0 0.0
    %816 = vmatprep.subr.mxu0 0.0
    %817 = vmatpush1.xpose.msra.mxu0 0.0
    %818 = vmatprep.subr.mxu0 0.0
    %819 = vmatpush1.xpose.msra.mxu0 0.0
    %820 = vmatprep.subr.mxu0 0.0
    %821 = vmatpush1.xpose.msra.mxu0 0.0
    %822 = vmatprep.subr.mxu0 0.0
    %823 = vmatpush1.xpose.msra.mxu0 0.0
    %824 = vmatprep.subr.mxu0 0.0
    %825 = vmatpush1.xpose.msra.mxu0 0.0
    %826 = vmatprep.subr.mxu0 0.0
    %827 = vmatpush1.xpose.msra.mxu0 0.0
    %828 = vmatprep.subr.mxu0 0.0
    %829 = vmatpush1.xpose.msra.mxu0 0.0
    %830 = vmatprep.subr.mxu0 0.0
    %831 = vmatpush1.xpose.msra.mxu0 0.0
    %832 = vmatprep.subr.mxu0 0.0
    %833 = vmatpush1.xpose.msra.mxu0 0.0
    %834 = vmatprep.subr.mxu0 0.0
    %835 = vmatpush1.xpose.msra.mxu0 0.0
    %836 = vmatprep.subr.mxu0 0.0
    %837 = vmatpush1.xpose.msra.mxu0 0.0
    %838 = vmatprep.subr.mxu0 0.0
    %839 = vmatpush1.xpose.msra.mxu0 0.0
    %840 = vmatprep.subr.mxu0 0.0
    %841 = vmatpush1.xpose.msra.mxu0 0.0
    %842 = vmatprep.subr.mxu0 0.0
    %843 = vmatpush1.xpose.msra.mxu0 0.0
    %844 = vmatprep.subr.mxu0 0.0
    %845 = vmatpush1.xpose.msra.mxu0 0.0
    %846 = vmatprep.subr.mxu0 0.0
    %847 = vmatpush1.xpose.msra.mxu0 0.0
    %848 = vmatprep.subr.mxu0 0.0
    %849 = vmatpush1.xpose.msra.mxu0 0.0
    %850 = vmatprep.subr.mxu0 0.0
    %851 = vmatpush1.xpose.msra.mxu0 0.0
    %852 = vmatprep.subr.mxu0 0.0
    %853 = vmatpush1.xpose.msra.mxu0 0.0
    %854 = vmatprep.mubr.f32.mxu0 0.0
    %855 = vmatmul.mubr.f32.gmra.mrb[0].mxu0 %v784
    %v856 = vpop.f32.mrb[0].mxu0
    %v857 = vadd.f32 0.0, %v856
    %v858 = vpop.f32.mrb[0].mxu0
    %859 = vmatprep.mubr.f32.mxu0 0.0
    %860 = vmatmul.mubr.f32.gmra.mrb[0].mxu0 %v786
    %v861 = vpop.f32.mrb[0].mxu0
    %v862 = vadd.f32 0.0, %v861
    %v863 = vpop.f32.mrb[0].mxu0
    %864 = vdwg.mxu0
    %867 = vrot.lane.b32.xlu0 %v769, 120
    %v868 = vpop.permute.xlu0 %867
    %869 = vrot.lane.b32.xlu0 %v770, 120
    %v870 = vpop.permute.xlu0 %869
    %872 = vrot.lane.b32.xlu0 %v772, 120
    %v873 = vpop.permute.xlu0 %872
    %v874 = vsel %vm364, %v868, 0
    %v876 = vsel %vm364, %v870, 0
    %v878 = vsel %vm364, %v873, 0
    %880 = vmatprep.subr.mxu0 0.0
    %881 = vmatpush1.xpose.msra.mxu0 %v878
    %882 = vmatprep.subr.mxu0 0.0
    %883 = vmatpush1.xpose.msra.mxu0 0.0
    %884 = vmatprep.subr.mxu0 0.0
    %885 = vmatpush1.xpose.msra.mxu0 0.0
    %886 = vmatprep.subr.mxu0 0.0
    %887 = vmatpush1.xpose.msra.mxu0 0.0
    %888 = vmatprep.subr.mxu0 0.0
    %889 = vmatpush1.xpose.msra.mxu0 0.0
    %890 = vmatprep.subr.mxu0 0.0
    %891 = vmatpush1.xpose.msra.mxu0 0.0
    %892 = vmatprep.subr.mxu0 0.0
    %893 = vmatpush1.xpose.msra.mxu0 0.0
    %894 = vmatprep.subr.mxu0 0.0
    %895 = vmatpush1.xpose.msra.mxu0 0.0
    %896 = vmatprep.subr.mxu0 0.0
    %897 = vmatpush1.xpose.msra.mxu0 0.0
    %898 = vmatprep.subr.mxu0 0.0
    %899 = vmatpush1.xpose.msra.mxu0 0.0
    %900 = vmatprep.subr.mxu0 0.0
    %901 = vmatpush1.xpose.msra.mxu0 0.0
    %902 = vmatprep.subr.mxu0 0.0
    %903 = vmatpush1.xpose.msra.mxu0 0.0
    %904 = vmatprep.subr.mxu0 0.0
    %905 = vmatpush1.xpose.msra.mxu0 0.0
    %906 = vmatprep.subr.mxu0 0.0
    %907 = vmatpush1.xpose.msra.mxu0 0.0
    %908 = vmatprep.subr.mxu0 0.0
    %909 = vmatpush1.xpose.msra.mxu0 0.0
    %910 = vmatprep.subr.mxu0 0.0
    %911 = vmatpush1.xpose.msra.mxu0 0.0
    %912 = vmatprep.subr.mxu0 0.0
    %913 = vmatpush1.xpose.msra.mxu0 0.0
    %914 = vmatprep.subr.mxu0 0.0
    %915 = vmatpush1.xpose.msra.mxu0 0.0
    %916 = vmatprep.subr.mxu0 0.0
    %917 = vmatpush1.xpose.msra.mxu0 0.0
    %918 = vmatprep.subr.mxu0 0.0
    %919 = vmatpush1.xpose.msra.mxu0 0.0
    %920 = vmatprep.subr.mxu0 0.0
    %921 = vmatpush1.xpose.msra.mxu0 0.0
    %922 = vmatprep.subr.mxu0 0.0
    %923 = vmatpush1.xpose.msra.mxu0 0.0
    %924 = vmatprep.subr.mxu0 0.0
    %925 = vmatpush1.xpose.msra.mxu0 0.0
    %926 = vmatprep.subr.mxu0 0.0
    %927 = vmatpush1.xpose.msra.mxu0 0.0
    %928 = vmatprep.subr.mxu0 0.0
    %929 = vmatpush1.xpose.msra.mxu0 0.0
    %930 = vmatprep.subr.mxu0 0.0
    %931 = vmatpush1.xpose.msra.mxu0 0.0
    %932 = vmatprep.subr.mxu0 0.0
    %933 = vmatpush1.xpose.msra.mxu0 0.0
    %934 = vmatprep.subr.mxu0 0.0
    %935 = vmatpush1.xpose.msra.mxu0 0.0
    %936 = vmatprep.subr.mxu0 0.0
    %937 = vmatpush1.xpose.msra.mxu0 0.0
    %938 = vmatprep.subr.mxu0 0.0
    %939 = vmatpush1.xpose.msra.mxu0 0.0
    %940 = vmatprep.subr.mxu0 0.0
    %941 = vmatpush1.xpose.msra.mxu0 0.0
    %942 = vmatprep.subr.mxu0 0.0
    %943 = vmatpush1.xpose.msra.mxu0 0.0
    %944 = vmatprep.mubr.f32.mxu0 0.0
    %945 = vmatmul.mubr.f32.gmra.mrb[0].mxu0 %v874
    %v946 = vpop.f32.mrb[0].mxu0
    %v947 = vadd.f32 0.0, %v946
    %v948 = vpop.f32.mrb[0].mxu0
    %949 = vmatprep.mubr.f32.mxu0 0.0
    %950 = vmatmul.mubr.f32.gmra.mrb[0].mxu0 %v876
    %v951 = vpop.f32.mrb[0].mxu0
    %v952 = vadd.f32 0.0, %v951
    %v953 = vpop.f32.mrb[0].mxu0
    %954 = vdwg.mxu0
    %v955 = vsel %vm364, %v857, -inf
    %956 = vmax.xlane.f32.xlu0 %v955
    %v957 = vpop.xlane.xlu0 %956
    %v958 = vsel %vm364, %v862, -inf
    %959 = vmax.xlane.f32.xlu0 %v958
    %v960 = vpop.xlane.xlu0 %959
    %v961 = vsel %vm364, %v947, -inf
    %962 = vmax.xlane.f32.xlu0 %v961
    %v963 = vpop.xlane.xlu0 %962
    %v964 = vsel %vm364, %v952, -inf
    %965 = vmax.xlane.f32.xlu0 %v964
    %v966 = vpop.xlane.xlu0 %965
    %v967 = vsub.f32 -inf, %v957
    %v968 = vsub.f32 -inf, %v960
    %v969 = vsub.f32 -inf, %v963
    %v970 = vsub.f32 -inf, %v966
    %v971 = vmul.f32 %v967, 1.442695
    %v972 = vpow.pop %v971
    %v973 = vmul.f32 %v968, 1.442695
    %v974 = vpow.pop %v973
    %v975 = vmul.f32 %v969, 1.442695
    %v976 = vpow.pop %v975
    %v977 = vmul.f32 %v970, 1.442695
    %v978 = vpow.pop %v977
    %v979 = vsub.f32 %v857, %v957
    %v980 = vsub.f32 %v862, %v960
    %v981 = vsub.f32 %v947, %v963
    %v982 = vsub.f32 %v952, %v966
    %v983 = vmul.f32 %v979, 1.442695
    %v984 = vpow.pop %v983
    %v985 = vmul.f32 %v980, 1.442695
    %v986 = vpow.pop %v985
    %v987 = vmul.f32 %v981, 1.442695
    %v988 = vpow.pop %v987
    %v989 = vmul.f32 %v982, 1.442695
    %v990 = vpow.pop %v989
    %v991 = vsel %vm364, %v984, 0.0
    %992 = vadd.xlane.f32.xlu0 %v991
    %v993 = vpop.xlane.xlu0 %992
    %v994 = vsel %vm364, %v986, 0.0
    %995 = vadd.xlane.f32.xlu0 %v994
    %v996 = vpop.xlane.xlu0 %995
    %v997 = vsel %vm364, %v988, 0.0
    %998 = vadd.xlane.f32.xlu0 %v997
    %v999 = vpop.xlane.xlu0 %998
    %v1000 = vsel %vm364, %v990, 0.0
    %1001 = vadd.xlane.f32.xlu0 %v1000
    %v1002 = vpop.xlane.xlu0 %1001
    %v1003 = vmul.f32 %v972, 0.0
    %v1004 = vmul.f32 %v974, 0.0
    %v1005 = vmul.f32 %v976, 0.0
    %v1006 = vmul.f32 %v978, 0.0
    %v1007 = vadd.f32 %v1003, %v993
    %v1008 = vadd.f32 %v1004, %v996
    %v1009 = vadd.f32 %v1005, %v999
    %v1010 = vadd.f32 %v1006, %v1002
    %1012 = vrot.lane.b32.xlu0 %v773, 120
    %v1013 = vpop.permute.xlu0 %1012
    %v1016 = vsel %vm364, %v984, 0
    %v1019 = vsel %vm364, %v986, 0
    %1021 = vmatprep.subr.mxu0 0.0
    %1022 = vmatpush1.msra.mxu0 %v1013
    %1023 = vmatprep.subr.mxu0 0.0
    %1024 = vmatpush1.msra.mxu0 0.0
    %1025 = vmatprep.subr.mxu0 0.0
    %1026 = vmatpush1.msra.mxu0 0.0
    %1027 = vmatprep.subr.mxu0 0.0
    %1028 = vmatpush1.msra.mxu0 0.0
    %1029 = vmatprep.subr.mxu0 0.0
    %1030 = vmatpush1.msra.mxu0 0.0
    %1031 = vmatprep.subr.mxu0 0.0
    %1032 = vmatpush1.msra.mxu0 0.0
    %1033 = vmatprep.subr.mxu0 0.0
    %1034 = vmatpush1.msra.mxu0 0.0
    %1035 = vmatprep.subr.mxu0 0.0
    %1036 = vmatpush1.msra.mxu0 0.0
    %1037 = vmatprep.subr.mxu0 0.0
    %1038 = vmatpush1.msra.mxu0 0.0
    %1039 = vmatprep.subr.mxu0 0.0
    %1040 = vmatpush1.msra.mxu0 0.0
    %1041 = vmatprep.subr.mxu0 0.0
    %1042 = vmatpush1.msra.mxu0 0.0
    %1043 = vmatprep.subr.mxu0 0.0
    %1044 = vmatpush1.msra.mxu0 0.0
    %1045 = vmatprep.subr.mxu0 0.0
    %1046 = vmatpush1.msra.mxu0 0.0
    %1047 = vmatprep.subr.mxu0 0.0
    %1048 = vmatpush1.msra.mxu0 0.0
    %1049 = vmatprep.subr.mxu0 0.0
    %1050 = vmatpush1.msra.mxu0 0.0
    %1051 = vmatprep.subr.mxu0 0.0
    %1052 = vmatpush1.msra.mxu0 0.0
    %1053 = vmatprep.subr.mxu0 0.0
    %1054 = vmatpush1.msra.mxu0 0.0
    %1055 = vmatprep.subr.mxu0 0.0
    %1056 = vmatpush1.msra.mxu0 0.0
    %1057 = vmatprep.subr.mxu0 0.0
    %1058 = vmatpush1.msra.mxu0 0.0
    %1059 = vmatprep.subr.mxu0 0.0
    %1060 = vmatpush1.msra.mxu0 0.0
    %1061 = vmatprep.subr.mxu0 0.0
    %1062 = vmatpush1.msra.mxu0 0.0
    %1063 = vmatprep.subr.mxu0 0.0
    %1064 = vmatpush1.msra.mxu0 0.0
    %1065 = vmatprep.subr.mxu0 0.0
    %1066 = vmatpush1.msra.mxu0 0.0
    %1067 = vmatprep.subr.mxu0 0.0
    %1068 = vmatpush1.msra.mxu0 0.0
    %1069 = vmatprep.subr.mxu0 0.0
    %1070 = vmatpush1.msra.mxu0 0.0
    %1071 = vmatprep.subr.mxu0 0.0
    %1072 = vmatpush1.msra.mxu0 0.0
    %1073 = vmatprep.subr.mxu0 0.0
    %1074 = vmatpush1.msra.mxu0 0.0
    %1075 = vmatprep.subr.mxu0 0.0
    %1076 = vmatpush1.msra.mxu0 0.0
    %1077 = vmatprep.subr.mxu0 0.0
    %1078 = vmatpush1.msra.mxu0 0.0
    %1079 = vmatprep.subr.mxu0 0.0
    %1080 = vmatpush1.msra.mxu0 0.0
    %1081 = vmatprep.subr.mxu0 0.0
    %1082 = vmatpush1.msra.mxu0 0.0
    %1083 = vmatprep.subr.mxu0 0.0
    %1084 = vmatpush1.msra.mxu0 0.0
    %1085 = vmatprep.mubr.f32.mxu0 0.0
    %1086 = vmatmul.mubr.f32.gmra.mrb[0].mxu0 %v1016
    %v1087 = vpop.f32.mrb[0].mxu0
    %v1088 = vadd.f32 0.0, %v1087
    %v1089 = vpop.f32.mrb[0].mxu0
    %1090 = vmatprep.mubr.f32.mxu0 0.0
    %1091 = vmatmul.mubr.f32.gmra.mrb[0].mxu0 %v1019
    %v1092 = vpop.f32.mrb[0].mxu0
    %v1093 = vadd.f32 0.0, %v1092
    %v1094 = vpop.f32.mrb[0].mxu0
    %1095 = vdwg.mxu0
    %1097 = vrot.lane.b32.xlu0 %v774, 120
    %v1098 = vpop.permute.xlu0 %1097
    %v1101 = vsel %vm364, %v988, 0
    %v1104 = vsel %vm364, %v990, 0
    %1106 = vmatprep.subr.mxu0 0.0
    %1107 = vmatpush1.msra.mxu0 %v1098
    %1108 = vmatprep.subr.mxu0 0.0
    %1109 = vmatpush1.msra.mxu0 0.0
    %1110 = vmatprep.subr.mxu0 0.0
    %1111 = vmatpush1.msra.mxu0 0.0
    %1112 = vmatprep.subr.mxu0 0.0
    %1113 = vmatpush1.msra.mxu0 0.0
    %1114 = vmatprep.subr.mxu0 0.0
    %1115 = vmatpush1.msra.mxu0 0.0
    %1116 = vmatprep.subr.mxu0 0.0
    %1117 = vmatpush1.msra.mxu0 0.0
    %1118 = vmatprep.subr.mxu0 0.0
    %1119 = vmatpush1.msra.mxu0 0.0
    %1120 = vmatprep.subr.mxu0 0.0
    %1121 = vmatpush1.msra.mxu0 0.0
    %1122 = vmatprep.subr.mxu0 0.0
    %1123 = vmatpush1.msra.mxu0 0.0
    %1124 = vmatprep.subr.mxu0 0.0
    %1125 = vmatpush1.msra.mxu0 0.0
    %1126 = vmatprep.subr.mxu0 0.0
    %1127 = vmatpush1.msra.mxu0 0.0
    %1128 = vmatprep.subr.mxu0 0.0
    %1129 = vmatpush1.msra.mxu0 0.0
    %1130 = vmatprep.subr.mxu0 0.0
    %1131 = vmatpush1.msra.mxu0 0.0
    %1132 = vmatprep.subr.mxu0 0.0
    %1133 = vmatpush1.msra.mxu0 0.0
    %1134 = vmatprep.subr.mxu0 0.0
    %1135 = vmatpush1.msra.mxu0 0.0
    %1136 = vmatprep.subr.mxu0 0.0
    %1137 = vmatpush1.msra.mxu0 0.0
    %1138 = vmatprep.subr.mxu0 0.0
    %1139 = vmatpush1.msra.mxu0 0.0
    %1140 = vmatprep.subr.mxu0 0.0
    %1141 = vmatpush1.msra.mxu0 0.0
    %1142 = vmatprep.subr.mxu0 0.0
    %1143 = vmatpush1.msra.mxu0 0.0
    %1144 = vmatprep.subr.mxu0 0.0
    %1145 = vmatpush1.msra.mxu0 0.0
    %1146 = vmatprep.subr.mxu0 0.0
    %1147 = vmatpush1.msra.mxu0 0.0
    %1148 = vmatprep.subr.mxu0 0.0
    %1149 = vmatpush1.msra.mxu0 0.0
    %1150 = vmatprep.subr.mxu0 0.0
    %1151 = vmatpush1.msra.mxu0 0.0
    %1152 = vmatprep.subr.mxu0 0.0
    %1153 = vmatpush1.msra.mxu0 0.0
    %1154 = vmatprep.subr.mxu0 0.0
    %1155 = vmatpush1.msra.mxu0 0.0
    %1156 = vmatprep.subr.mxu0 0.0
    %1157 = vmatpush1.msra.mxu0 0.0
    %1158 = vmatprep.subr.mxu0 0.0
    %1159 = vmatpush1.msra.mxu0 0.0
    %1160 = vmatprep.subr.mxu0 0.0
    %1161 = vmatpush1.msra.mxu0 0.0
    %1162 = vmatprep.subr.mxu0 0.0
    %1163 = vmatpush1.msra.mxu0 0.0
    %1164 = vmatprep.subr.mxu0 0.0
    %1165 = vmatpush1.msra.mxu0 0.0
    %1166 = vmatprep.subr.mxu0 0.0
    %1167 = vmatpush1.msra.mxu0 0.0
    %1168 = vmatprep.subr.mxu0 0.0
    %1169 = vmatpush1.msra.mxu0 0.0
    %1170 = vmatprep.mubr.f32.mxu0 0.0
    %1171 = vmatmul.mubr.f32.gmra.mrb[0].mxu0 %v1101
    %v1172 = vpop.f32.mrb[0].mxu0
    %v1173 = vadd.f32 0.0, %v1172
    %v1174 = vpop.f32.mrb[0].mxu0
    %1175 = vmatprep.mubr.f32.mxu0 0.0
    %1176 = vmatmul.mubr.f32.gmra.mrb[0].mxu0 %v1104
    %v1177 = vpop.f32.mrb[0].mxu0
    %v1178 = vadd.f32 0.0, %v1177
    %v1179 = vpop.f32.mrb[0].mxu0
    %1180 = vdwg.mxu0
    %v1181 = vadd.f32 %v1003, %v1088
    %v1182 = vadd.f32 %v1004, %v1093
    %v1183 = vadd.f32 %v1005, %v1173
    %v1184 = vadd.f32 %v1006, %v1178
    %v1185 = vrcp.pop %v1007
    %v1186 = vrcp.pop %v1008
    %v1187 = vrcp.pop %v1009
    %v1188 = vrcp.pop %v1010
    %v1189 = vmul.f32 %v1181, %v1185
    %v1190 = vmul.f32 %v1182, %v1186
    %v1191 = vmul.f32 %v1183, %v1187
    %v1192 = vmul.f32 %v1184, %v1188
    %1197 = vrot.lane.b32.xlu0 %v1189, 8
    %v1198 = vpop.permute.xlu0 %1197
    %1199 = vrot.lane.b32.xlu0 %v1190, 8
    %v1200 = vpop.permute.xlu0 %1199
    %1201 = vrot.lane.b32.xlu0 %v1191, 8
    %v1202 = vpop.permute.xlu0 %1201
    %1203 = vrot.lane.b32.xlu0 %v1192, 8
    %v1204 = vpop.permute.xlu0 %1203
    %vm1209 = vcmask 130112
    %1210 = vst.msk [vmem:[#allocation5] sm:$0xff] %vm1209, %v1198
    %1211 = vst.msk [vmem:[#allocation5 + $0x8] sm:$0xff] %vm1209, %v1200
    %1212 = vst.msk [vmem:[#allocation5 + $0x10] sm:$0xff] %vm1209, %v1202
    %1213 = vst.msk [vmem:[#allocation5 + $0x18] sm:$0xff] %vm1209, %v1204
    %v1214 = vld [vmem:[#allocation2] sm:$0xff]
    %v1215 = vld [vmem:[#allocation2 + $0x8] sm:$0xff]
    %v1216 = vld [vmem:[#allocation2 + $0x10] sm:$0xff]
    %v1217 = vld [vmem:[#allocation2 + $0x18] sm:$0xff]
    %v1218 = vld [vmem:[#allocation3] sm:$0xff]
    %v1219 = vld [vmem:[#allocation3 + $0x8] sm:$0xff]
    %v1220 = vld [vmem:[#allocation4] sm:$0xff]
    %v1221 = vld [vmem:[#allocation4 + $0x8] sm:$0xff]
    %1224 = vrot.lane.b32.xlu0 %v1214, 112
    %v1225 = vpop.permute.xlu0 %1224
    %1226 = vrot.lane.b32.xlu0 %v1215, 112
    %v1227 = vpop.permute.xlu0 %1226
    %1229 = vrot.lane.b32.xlu0 %v1218, 112
    %v1230 = vpop.permute.xlu0 %1229
    %v1231 = vsel %vm364, %v1225, 0
    %v1233 = vsel %vm364, %v1227, 0
    %v1235 = vsel %vm364, %v1230, 0
    %1237 = vmatprep.subr.mxu0 0.0
    %1238 = vmatpush1.xpose.msra.mxu0 %v1235
    %1239 = vmatprep.subr.mxu0 0.0
    %1240 = vmatpush1.xpose.msra.mxu0 0.0
    %1241 = vmatprep.subr.mxu0 0.0
    %1242 = vmatpush1.xpose.msra.mxu0 0.0
    %1243 = vmatprep.subr.mxu0 0.0
    %1244 = vmatpush1.xpose.msra.mxu0 0.0
    %1245 = vmatprep.subr.mxu0 0.0
    %1246 = vmatpush1.xpose.msra.mxu0 0.0
    %1247 = vmatprep.subr.mxu0 0.0
    %1248 = vmatpush1.xpose.msra.mxu0 0.0
    %1249 = vmatprep.subr.mxu0 0.0
    %1250 = vmatpush1.xpose.msra.mxu0 0.0
    %1251 = vmatprep.subr.mxu0 0.0
    %1252 = vmatpush1.xpose.msra.mxu0 0.0
    %1253 = vmatprep.subr.mxu0 0.0
    %1254 = vmatpush1.xpose.msra.mxu0 0.0
    %1255 = vmatprep.subr.mxu0 0.0
    %1256 = vmatpush1.xpose.msra.mxu0 0.0
    %1257 = vmatprep.subr.mxu0 0.0
    %1258 = vmatpush1.xpose.msra.mxu0 0.0
    %1259 = vmatprep.subr.mxu0 0.0
    %1260 = vmatpush1.xpose.msra.mxu0 0.0
    %1261 = vmatprep.subr.mxu0 0.0
    %1262 = vmatpush1.xpose.msra.mxu0 0.0
    %1263 = vmatprep.subr.mxu0 0.0
    %1264 = vmatpush1.xpose.msra.mxu0 0.0
    %1265 = vmatprep.subr.mxu0 0.0
    %1266 = vmatpush1.xpose.msra.mxu0 0.0
    %1267 = vmatprep.subr.mxu0 0.0
    %1268 = vmatpush1.xpose.msra.mxu0 0.0
    %1269 = vmatprep.subr.mxu0 0.0
    %1270 = vmatpush1.xpose.msra.mxu0 0.0
    %1271 = vmatprep.subr.mxu0 0.0
    %1272 = vmatpush1.xpose.msra.mxu0 0.0
    %1273 = vmatprep.subr.mxu0 0.0
    %1274 = vmatpush1.xpose.msra.mxu0 0.0
    %1275 = vmatprep.subr.mxu0 0.0
    %1276 = vmatpush1.xpose.msra.mxu0 0.0
    %1277 = vmatprep.subr.mxu0 0.0
    %1278 = vmatpush1.xpose.msra.mxu0 0.0
    %1279 = vmatprep.subr.mxu0 0.0
    %1280 = vmatpush1.xpose.msra.mxu0 0.0
    %1281 = vmatprep.subr.mxu0 0.0
    %1282 = vmatpush1.xpose.msra.mxu0 0.0
    %1283 = vmatprep.subr.mxu0 0.0
    %1284 = vmatpush1.xpose.msra.mxu0 0.0
    %1285 = vmatprep.subr.mxu0 0.0
    %1286 = vmatpush1.xpose.msra.mxu0 0.0
    %1287 = vmatprep.subr.mxu0 0.0
    %1288 = vmatpush1.xpose.msra.mxu0 0.0
    %1289 = vmatprep.subr.mxu0 0.0
    %1290 = vmatpush1.xpose.msra.mxu0 0.0
    %1291 = vmatprep.subr.mxu0 0.0
    %1292 = vmatpush1.xpose.msra.mxu0 0.0
    %1293 = vmatprep.subr.mxu0 0.0
    %1294 = vmatpush1.xpose.msra.mxu0 0.0
    %1295 = vmatprep.subr.mxu0 0.0
    %1296 = vmatpush1.xpose.msra.mxu0 0.0
    %1297 = vmatprep.subr.mxu0 0.0
    %1298 = vmatpush1.xpose.msra.mxu0 0.0
    %1299 = vmatprep.subr.mxu0 0.0
    %1300 = vmatpush1.xpose.msra.mxu0 0.0
    %1301 = vmatprep.mubr.f32.mxu0 0.0
    %1302 = vmatmul.mubr.f32.gmra.mrb[0].mxu0 %v1231
    %v1303 = vpop.f32.mrb[0].mxu0
    %v1304 = vadd.f32 0.0, %v1303
    %v1305 = vpop.f32.mrb[0].mxu0
    %1306 = vmatprep.mubr.f32.mxu0 0.0
    %1307 = vmatmul.mubr.f32.gmra.mrb[0].mxu0 %v1233
    %v1308 = vpop.f32.mrb[0].mxu0
    %v1309 = vadd.f32 0.0, %v1308
    %v1310 = vpop.f32.mrb[0].mxu0
    %1311 = vdwg.mxu0
    %1314 = vrot.lane.b32.xlu0 %v1216, 112
    %v1315 = vpop.permute.xlu0 %1314
    %1316 = vrot.lane.b32.xlu0 %v1217, 112
    %v1317 = vpop.permute.xlu0 %1316
    %1319 = vrot.lane.b32.xlu0 %v1219, 112
    %v1320 = vpop.permute.xlu0 %1319
    %v1321 = vsel %vm364, %v1315, 0
    %v1323 = vsel %vm364, %v1317, 0
    %v1325 = vsel %vm364, %v1320, 0
    %1327 = vmatprep.subr.mxu0 0.0
    %1328 = vmatpush1.xpose.msra.mxu0 %v1325
    %1329 = vmatprep.subr.mxu0 0.0
    %1330 = vmatpush1.xpose.msra.mxu0 0.0
    %1331 = vmatprep.subr.mxu0 0.0
    %1332 = vmatpush1.xpose.msra.mxu0 0.0
    %1333 = vmatprep.subr.mxu0 0.0
    %1334 = vmatpush1.xpose.msra.mxu0 0.0
    %1335 = vmatprep.subr.mxu0 0.0
    %1336 = vmatpush1.xpose.msra.mxu0 0.0
    %1337 = vmatprep.subr.mxu0 0.0
    %1338 = vmatpush1.xpose.msra.mxu0 0.0
    %1339 = vmatprep.subr.mxu0 0.0
    %1340 = vmatpush1.xpose.msra.mxu0 0.0
    %1341 = vmatprep.subr.mxu0 0.0
    %1342 = vmatpush1.xpose.msra.mxu0 0.0
    %1343 = vmatprep.subr.mxu0 0.0
    %1344 = vmatpush1.xpose.msra.mxu0 0.0
    %1345 = vmatprep.subr.mxu0 0.0
    %1346 = vmatpush1.xpose.msra.mxu0 0.0
    %1347 = vmatprep.subr.mxu0 0.0
    %1348 = vmatpush1.xpose.msra.mxu0 0.0
    %1349 = vmatprep.subr.mxu0 0.0
    %1350 = vmatpush1.xpose.msra.mxu0 0.0
    %1351 = vmatprep.subr.mxu0 0.0
    %1352 = vmatpush1.xpose.msra.mxu0 0.0
    %1353 = vmatprep.subr.mxu0 0.0
    %1354 = vmatpush1.xpose.msra.mxu0 0.0
    %1355 = vmatprep.subr.mxu0 0.0
    %1356 = vmatpush1.xpose.msra.mxu0 0.0
    %1357 = vmatprep.subr.mxu0 0.0
    %1358 = vmatpush1.xpose.msra.mxu0 0.0
    %1359 = vmatprep.subr.mxu0 0.0
    %1360 = vmatpush1.xpose.msra.mxu0 0.0
    %1361 = vmatprep.subr.mxu0 0.0
    %1362 = vmatpush1.xpose.msra.mxu0 0.0
    %1363 = vmatprep.subr.mxu0 0.0
    %1364 = vmatpush1.xpose.msra.mxu0 0.0
    %1365 = vmatprep.subr.mxu0 0.0
    %1366 = vmatpush1.xpose.msra.mxu0 0.0
    %1367 = vmatprep.subr.mxu0 0.0
    %1368 = vmatpush1.xpose.msra.mxu0 0.0
    %1369 = vmatprep.subr.mxu0 0.0
    %1370 = vmatpush1.xpose.msra.mxu0 0.0
    %1371 = vmatprep.subr.mxu0 0.0
    %1372 = vmatpush1.xpose.msra.mxu0 0.0
    %1373 = vmatprep.subr.mxu0 0.0
    %1374 = vmatpush1.xpose.msra.mxu0 0.0
    %1375 = vmatprep.subr.mxu0 0.0
    %1376 = vmatpush1.xpose.msra.mxu0 0.0
    %1377 = vmatprep.subr.mxu0 0.0
    %1378 = vmatpush1.xpose.msra.mxu0 0.0
    %1379 = vmatprep.subr.mxu0 0.0
    %1380 = vmatpush1.xpose.msra.mxu0 0.0
    %1381 = vmatprep.subr.mxu0 0.0
    %1382 = vmatpush1.xpose.msra.mxu0 0.0
    %1383 = vmatprep.subr.mxu0 0.0
    %1384 = vmatpush1.xpose.msra.mxu0 0.0
    %1385 = vmatprep.subr.mxu0 0.0
    %1386 = vmatpush1.xpose.msra.mxu0 0.0
    %1387 = vmatprep.subr.mxu0 0.0
    %1388 = vmatpush1.xpose.msra.mxu0 0.0
    %1389 = vmatprep.subr.mxu0 0.0
    %1390 = vmatpush1.xpose.msra.mxu0 0.0
    %1391 = vmatprep.mubr.f32.mxu0 0.0
    %1392 = vmatmul.mubr.f32.gmra.mrb[0].mxu0 %v1321
    %v1393 = vpop.f32.mrb[0].mxu0
    %v1394 = vadd.f32 0.0, %v1393
    %v1395 = vpop.f32.mrb[0].mxu0
    %1396 = vmatprep.mubr.f32.mxu0 0.0
    %1397 = vmatmul.mubr.f32.gmra.mrb[0].mxu0 %v1323
    %v1398 = vpop.f32.mrb[0].mxu0
    %v1399 = vadd.f32 0.0, %v1398
    %v1400 = vpop.f32.mrb[0].mxu0
    %1401 = vdwg.mxu0
    %v1402 = vsel %vm364, %v1304, -inf
    %1403 = vmax.xlane.f32.xlu0 %v1402
    %v1404 = vpop.xlane.xlu0 %1403
    %v1405 = vsel %vm364, %v1309, -inf
    %1406 = vmax.xlane.f32.xlu0 %v1405
    %v1407 = vpop.xlane.xlu0 %1406
    %v1408 = vsel %vm364, %v1394, -inf
    %1409 = vmax.xlane.f32.xlu0 %v1408
    %v1410 = vpop.xlane.xlu0 %1409
    %v1411 = vsel %vm364, %v1399, -inf
    %1412 = vmax.xlane.f32.xlu0 %v1411
    %v1413 = vpop.xlane.xlu0 %1412
    %v1414 = vsub.f32 -inf, %v1404
    %v1415 = vsub.f32 -inf, %v1407
    %v1416 = vsub.f32 -inf, %v1410
    %v1417 = vsub.f32 -inf, %v1413
    %v1418 = vmul.f32 %v1414, 1.442695
    %v1419 = vpow.pop %v1418
    %v1420 = vmul.f32 %v1415, 1.442695
    %v1421 = vpow.pop %v1420
    %v1422 = vmul.f32 %v1416, 1.442695
    %v1423 = vpow.pop %v1422
    %v1424 = vmul.f32 %v1417, 1.442695
    %v1425 = vpow.pop %v1424
    %v1426 = vsub.f32 %v1304, %v1404
    %v1427 = vsub.f32 %v1309, %v1407
    %v1428 = vsub.f32 %v1394, %v1410
    %v1429 = vsub.f32 %v1399, %v1413
    %v1430 = vmul.f32 %v1426, 1.442695
    %v1431 = vpow.pop %v1430
    %v1432 = vmul.f32 %v1427, 1.442695
    %v1433 = vpow.pop %v1432
    %v1434 = vmul.f32 %v1428, 1.442695
    %v1435 = vpow.pop %v1434
    %v1436 = vmul.f32 %v1429, 1.442695
    %v1437 = vpow.pop %v1436
    %v1438 = vsel %vm364, %v1431, 0.0
    %1439 = vadd.xlane.f32.xlu0 %v1438
    %v1440 = vpop.xlane.xlu0 %1439
    %v1441 = vsel %vm364, %v1433, 0.0
    %1442 = vadd.xlane.f32.xlu0 %v1441
    %v1443 = vpop.xlane.xlu0 %1442
    %v1444 = vsel %vm364, %v1435, 0.0
    %1445 = vadd.xlane.f32.xlu0 %v1444
    %v1446 = vpop.xlane.xlu0 %1445
    %v1447 = vsel %vm364, %v1437, 0.0
    %1448 = vadd.xlane.f32.xlu0 %v1447
    %v1449 = vpop.xlane.xlu0 %1448
    %v1450 = vmul.f32 %v1419, 0.0
    %v1451 = vmul.f32 %v1421, 0.0
    %v1452 = vmul.f32 %v1423, 0.0
    %v1453 = vmul.f32 %v1425, 0.0
    %v1454 = vadd.f32 %v1450, %v1440
    %v1455 = vadd.f32 %v1451, %v1443
    %v1456 = vadd.f32 %v1452, %v1446
    %v1457 = vadd.f32 %v1453, %v1449
    %1459 = vrot.lane.b32.xlu0 %v1220, 112
    %v1460 = vpop.permute.xlu0 %1459
    %v1463 = vsel %vm364, %v1431, 0
    %v1466 = vsel %vm364, %v1433, 0
    %1468 = vmatprep.subr.mxu0 0.0
    %1469 = vmatpush1.msra.mxu0 %v1460
    %1470 = vmatprep.subr.mxu0 0.0
    %1471 = vmatpush1.msra.mxu0 0.0
    %1472 = vmatprep.subr.mxu0 0.0
    %1473 = vmatpush1.msra.mxu0 0.0
    %1474 = vmatprep.subr.mxu0 0.0
    %1475 = vmatpush1.msra.mxu0 0.0
    %1476 = vmatprep.subr.mxu0 0.0
    %1477 = vmatpush1.msra.mxu0 0.0
    %1478 = vmatprep.subr.mxu0 0.0
    %1479 = vmatpush1.msra.mxu0 0.0
    %1480 = vmatprep.subr.mxu0 0.0
    %1481 = vmatpush1.msra.mxu0 0.0
    %1482 = vmatprep.subr.mxu0 0.0
    %1483 = vmatpush1.msra.mxu0 0.0
    %1484 = vmatprep.subr.mxu0 0.0
    %1485 = vmatpush1.msra.mxu0 0.0
    %1486 = vmatprep.subr.mxu0 0.0
    %1487 = vmatpush1.msra.mxu0 0.0
    %1488 = vmatprep.subr.mxu0 0.0
    %1489 = vmatpush1.msra.mxu0 0.0
    %1490 = vmatprep.subr.mxu0 0.0
    %1491 = vmatpush1.msra.mxu0 0.0
    %1492 = vmatprep.subr.mxu0 0.0
    %1493 = vmatpush1.msra.mxu0 0.0
    %1494 = vmatprep.subr.mxu0 0.0
    %1495 = vmatpush1.msra.mxu0 0.0
    %1496 = vmatprep.subr.mxu0 0.0
    %1497 = vmatpush1.msra.mxu0 0.0
    %1498 = vmatprep.subr.mxu0 0.0
    %1499 = vmatpush1.msra.mxu0 0.0
    %1500 = vmatprep.subr.mxu0 0.0
    %1501 = vmatpush1.msra.mxu0 0.0
    %1502 = vmatprep.subr.mxu0 0.0
    %1503 = vmatpush1.msra.mxu0 0.0
    %1504 = vmatprep.subr.mxu0 0.0
    %1505 = vmatpush1.msra.mxu0 0.0
    %1506 = vmatprep.subr.mxu0 0.0
    %1507 = vmatpush1.msra.mxu0 0.0
    %1508 = vmatprep.subr.mxu0 0.0
    %1509 = vmatpush1.msra.mxu0 0.0
    %1510 = vmatprep.subr.mxu0 0.0
    %1511 = vmatpush1.msra.mxu0 0.0
    %1512 = vmatprep.subr.mxu0 0.0
    %1513 = vmatpush1.msra.mxu0 0.0
    %1514 = vmatprep.subr.mxu0 0.0
    %1515 = vmatpush1.msra.mxu0 0.0
    %1516 = vmatprep.subr.mxu0 0.0
    %1517 = vmatpush1.msra.mxu0 0.0
    %1518 = vmatprep.subr.mxu0 0.0
    %1519 = vmatpush1.msra.mxu0 0.0
    %1520 = vmatprep.subr.mxu0 0.0
    %1521 = vmatpush1.msra.mxu0 0.0
    %1522 = vmatprep.subr.mxu0 0.0
    %1523 = vmatpush1.msra.mxu0 0.0
    %1524 = vmatprep.subr.mxu0 0.0
    %1525 = vmatpush1.msra.mxu0 0.0
    %1526 = vmatprep.subr.mxu0 0.0
    %1527 = vmatpush1.msra.mxu0 0.0
    %1528 = vmatprep.subr.mxu0 0.0
    %1529 = vmatpush1.msra.mxu0 0.0
    %1530 = vmatprep.subr.mxu0 0.0
    %1531 = vmatpush1.msra.mxu0 0.0
    %1532 = vmatprep.mubr.f32.mxu0 0.0
    %1533 = vmatmul.mubr.f32.gmra.mrb[0].mxu0 %v1463
    %v1534 = vpop.f32.mrb[0].mxu0
    %v1535 = vadd.f32 0.0, %v1534
    %v1536 = vpop.f32.mrb[0].mxu0
    %1537 = vmatprep.mubr.f32.mxu0 0.0
    %1538 = vmatmul.mubr.f32.gmra.mrb[0].mxu0 %v1466
    %v1539 = vpop.f32.mrb[0].mxu0
    %v1540 = vadd.f32 0.0, %v1539
    %v1541 = vpop.f32.mrb[0].mxu0
    %1542 = vdwg.mxu0
    %1544 = vrot.lane.b32.xlu0 %v1221, 112
    %v1545 = vpop.permute.xlu0 %1544
    %v1548 = vsel %vm364, %v1435, 0
    %v1551 = vsel %vm364, %v1437, 0
    %1553 = vmatprep.subr.mxu0 0.0
    %1554 = vmatpush1.msra.mxu0 %v1545
    %1555 = vmatprep.subr.mxu0 0.0
    %1556 = vmatpush1.msra.mxu0 0.0
    %1557 = vmatprep.subr.mxu0 0.0
    %1558 = vmatpush1.msra.mxu0 0.0
    %1559 = vmatprep.subr.mxu0 0.0
    %1560 = vmatpush1.msra.mxu0 0.0
    %1561 = vmatprep.subr.mxu0 0.0
    %1562 = vmatpush1.msra.mxu0 0.0
    %1563 = vmatprep.subr.mxu0 0.0
    %1564 = vmatpush1.msra.mxu0 0.0
    %1565 = vmatprep.subr.mxu0 0.0
    %1566 = vmatpush1.msra.mxu0 0.0
    %1567 = vmatprep.subr.mxu0 0.0
    %1568 = vmatpush1.msra.mxu0 0.0
    %1569 = vmatprep.subr.mxu0 0.0
    %1570 = vmatpush1.msra.mxu0 0.0
    %1571 = vmatprep.subr.mxu0 0.0
    %1572 = vmatpush1.msra.mxu0 0.0
    %1573 = vmatprep.subr.mxu0 0.0
    %1574 = vmatpush1.msra.mxu0 0.0
    %1575 = vmatprep.subr.mxu0 0.0
    %1576 = vmatpush1.msra.mxu0 0.0
    %1577 = vmatprep.subr.mxu0 0.0
    %1578 = vmatpush1.msra.mxu0 0.0
    %1579 = vmatprep.subr.mxu0 0.0
    %1580 = vmatpush1.msra.mxu0 0.0
    %1581 = vmatprep.subr.mxu0 0.0
    %1582 = vmatpush1.msra.mxu0 0.0
    %1583 = vmatprep.subr.mxu0 0.0
    %1584 = vmatpush1.msra.mxu0 0.0
    %1585 = vmatprep.subr.mxu0 0.0
    %1586 = vmatpush1.msra.mxu0 0.0
    %1587 = vmatprep.subr.mxu0 0.0
    %1588 = vmatpush1.msra.mxu0 0.0
    %1589 = vmatprep.subr.mxu0 0.0
    %1590 = vmatpush1.msra.mxu0 0.0
    %1591 = vmatprep.subr.mxu0 0.0
    %1592 = vmatpush1.msra.mxu0 0.0
    %1593 = vmatprep.subr.mxu0 0.0
    %1594 = vmatpush1.msra.mxu0 0.0
    %1595 = vmatprep.subr.mxu0 0.0
    %1596 = vmatpush1.msra.mxu0 0.0
    %1597 = vmatprep.subr.mxu0 0.0
    %1598 = vmatpush1.msra.mxu0 0.0
    %1599 = vmatprep.subr.mxu0 0.0
    %1600 = vmatpush1.msra.mxu0 0.0
    %1601 = vmatprep.subr.mxu0 0.0
    %1602 = vmatpush1.msra.mxu0 0.0
    %1603 = vmatprep.subr.mxu0 0.0
    %1604 = vmatpush1.msra.mxu0 0.0
    %1605 = vmatprep.subr.mxu0 0.0
    %1606 = vmatpush1.msra.mxu0 0.0
    %1607 = vmatprep.subr.mxu0 0.0
    %1608 = vmatpush1.msra.mxu0 0.0
    %1609 = vmatprep.subr.mxu0 0.0
    %1610 = vmatpush1.msra.mxu0 0.0
    %1611 = vmatprep.subr.mxu0 0.0
    %1612 = vmatpush1.msra.mxu0 0.0
    %1613 = vmatprep.subr.mxu0 0.0
    %1614 = vmatpush1.msra.mxu0 0.0
    %1615 = vmatprep.subr.mxu0 0.0
    %1616 = vmatpush1.msra.mxu0 0.0
    %1617 = vmatprep.mubr.f32.mxu0 0.0
    %1618 = vmatmul.mubr.f32.gmra.mrb[0].mxu0 %v1548
    %v1619 = vpop.f32.mrb[0].mxu0
    %v1620 = vadd.f32 0.0, %v1619
    %v1621 = vpop.f32.mrb[0].mxu0
    %1622 = vmatprep.mubr.f32.mxu0 0.0
    %1623 = vmatmul.mubr.f32.gmra.mrb[0].mxu0 %v1551
    %v1624 = vpop.f32.mrb[0].mxu0
    %v1625 = vadd.f32 0.0, %v1624
    %v1626 = vpop.f32.mrb[0].mxu0
    %1627 = vdwg.mxu0
    %v1628 = vadd.f32 %v1450, %v1535
    %v1629 = vadd.f32 %v1451, %v1540
    %v1630 = vadd.f32 %v1452, %v1620
    %v1631 = vadd.f32 %v1453, %v1625
    %v1632 = vrcp.pop %v1454
    %v1633 = vrcp.pop %v1455
    %v1634 = vrcp.pop %v1456
    %v1635 = vrcp.pop %v1457
    %v1636 = vmul.f32 %v1628, %v1632
    %v1637 = vmul.f32 %v1629, %v1633
    %v1638 = vmul.f32 %v1630, %v1634
    %v1639 = vmul.f32 %v1631, %v1635
    %1644 = vrot.lane.b32.xlu0 %v1636, 16
    %v1645 = vpop.permute.xlu0 %1644
    %1646 = vrot.lane.b32.xlu0 %v1637, 16
    %v1647 = vpop.permute.xlu0 %1646
    %1648 = vrot.lane.b32.xlu0 %v1638, 16
    %v1649 = vpop.permute.xlu0 %1648
    %1650 = vrot.lane.b32.xlu0 %v1639, 16
    %v1651 = vpop.permute.xlu0 %1650
    %vm1656 = vcmask 195712
    %1657 = vst.msk [vmem:[#allocation5] sm:$0xff] %vm1656, %v1645
    %1658 = vst.msk [vmem:[#allocation5 + $0x8] sm:$0xff] %vm1656, %v1647
    %1659 = vst.msk [vmem:[#allocation5 + $0x10] sm:$0xff] %vm1656, %v1649
    %1660 = vst.msk [vmem:[#allocation5 + $0x18] sm:$0xff] %vm1656, %v1651
    %v1661 = vld [vmem:[#allocation2] sm:$0xff]
    %v1662 = vld [vmem:[#allocation2 + $0x8] sm:$0xff]
    %v1663 = vld [vmem:[#allocation2 + $0x10] sm:$0xff]
    %v1664 = vld [vmem:[#allocation2 + $0x18] sm:$0xff]
    %v1665 = vld [vmem:[#allocation3] sm:$0xff]
    %v1666 = vld [vmem:[#allocation3 + $0x8] sm:$0xff]
    %v1667 = vld [vmem:[#allocation4] sm:$0xff]
    %v1668 = vld [vmem:[#allocation4 + $0x8] sm:$0xff]
    %1671 = vrot.lane.b32.xlu0 %v1661, 104
    %v1672 = vpop.permute.xlu0 %1671
    %1673 = vrot.lane.b32.xlu0 %v1662, 104
    %v1674 = vpop.permute.xlu0 %1673
    %1676 = vrot.lane.b32.xlu0 %v1665, 104
    %v1677 = vpop.permute.xlu0 %1676
    %v1678 = vsel %vm364, %v1672, 0
    %v1680 = vsel %vm364, %v1674, 0
    %v1682 = vsel %vm364, %v1677, 0
    %1684 = vmatprep.subr.mxu0 0.0
    %1685 = vmatpush1.xpose.msra.mxu0 %v1682
    %1686 = vmatprep.subr.mxu0 0.0
    %1687 = vmatpush1.xpose.msra.mxu0 0.0
    %1688 = vmatprep.subr.mxu0 0.0
    %1689 = vmatpush1.xpose.msra.mxu0 0.0
    %1690 = vmatprep.subr.mxu0 0.0
    %1691 = vmatpush1.xpose.msra.mxu0 0.0
    %1692 = vmatprep.subr.mxu0 0.0
    %1693 = vmatpush1.xpose.msra.mxu0 0.0
    %1694 = vmatprep.subr.mxu0 0.0
    %1695 = vmatpush1.xpose.msra.mxu0 0.0
    %1696 = vmatprep.subr.mxu0 0.0
    %1697 = vmatpush1.xpose.msra.mxu0 0.0
    %1698 = vmatprep.subr.mxu0 0.0
    %1699 = vmatpush1.xpose.msra.mxu0 0.0
    %1700 = vmatprep.subr.mxu0 0.0
    %1701 = vmatpush1.xpose.msra.mxu0 0.0
    %1702 = vmatprep.subr.mxu0 0.0
    %1703 = vmatpush1.xpose.msra.mxu0 0.0
    %1704 = vmatprep.subr.mxu0 0.0
    %1705 = vmatpush1.xpose.msra.mxu0 0.0
    %1706 = vmatprep.subr.mxu0 0.0
    %1707 = vmatpush1.xpose.msra.mxu0 0.0
    %1708 = vmatprep.subr.mxu0 0.0
    %1709 = vmatpush1.xpose.msra.mxu0 0.0
    %1710 = vmatprep.subr.mxu0 0.0
    %1711 = vmatpush1.xpose.msra.mxu0 0.0
    %1712 = vmatprep.subr.mxu0 0.0
    %1713 = vmatpush1.xpose.msra.mxu0 0.0
    %1714 = vmatprep.subr.mxu0 0.0
    %1715 = vmatpush1.xpose.msra.mxu0 0.0
    %1716 = vmatprep.subr.mxu0 0.0
    %1717 = vmatpush1.xpose.msra.mxu0 0.0
    %1718 = vmatprep.subr.mxu0 0.0
    %1719 = vmatpush1.xpose.msra.mxu0 0.0
    %1720 = vmatprep.subr.mxu0 0.0
    %1721 = vmatpush1.xpose.msra.mxu0 0.0
    %1722 = vmatprep.subr.mxu0 0.0
    %1723 = vmatpush1.xpose.msra.mxu0 0.0
    %1724 = vmatprep.subr.mxu0 0.0
    %1725 = vmatpush1.xpose.msra.mxu0 0.0
    %1726 = vmatprep.subr.mxu0 0.0
    %1727 = vmatpush1.xpose.msra.mxu0 0.0
    %1728 = vmatprep.subr.mxu0 0.0
    %1729 = vmatpush1.xpose.msra.mxu0 0.0
    %1730 = vmatprep.subr.mxu0 0.0
    %1731 = vmatpush1.xpose.msra.mxu0 0.0
    %1732 = vmatprep.subr.mxu0 0.0
    %1733 = vmatpush1.xpose.msra.mxu0 0.0
    %1734 = vmatprep.subr.mxu0 0.0
    %1735 = vmatpush1.xpose.msra.mxu0 0.0
    %1736 = vmatprep.subr.mxu0 0.0
    %1737 = vmatpush1.xpose.msra.mxu0 0.0
    %1738 = vmatprep.subr.mxu0 0.0
    %1739 = vmatpush1.xpose.msra.mxu0 0.0
    %1740 = vmatprep.subr.mxu0 0.0
    %1741 = vmatpush1.xpose.msra.mxu0 0.0
    %1742 = vmatprep.subr.mxu0 0.0
    %1743 = vmatpush1.xpose.msra.mxu0 0.0
    %1744 = vmatprep.subr.mxu0 0.0
    %1745 = vmatpush1.xpose.msra.mxu0 0.0
    %1746 = vmatprep.subr.mxu0 0.0
    %1747 = vmatpush1.xpose.msra.mxu0 0.0
    %1748 = vmatprep.mubr.f32.mxu0 0.0
    %1749 = vmatmul.mubr.f32.gmra.mrb[0].mxu0 %v1678
    %v1750 = vpop.f32.mrb[0].mxu0
    %v1751 = vadd.f32 0.0, %v1750
    %v1752 = vpop.f32.mrb[0].mxu0
    %1753 = vmatprep.mubr.f32.mxu0 0.0
    %1754 = vmatmul.mubr.f32.gmra.mrb[0].mxu0 %v1680
    %v1755 = vpop.f32.mrb[0].mxu0
    %v1756 = vadd.f32 0.0, %v1755
    %v1757 = vpop.f32.mrb[0].mxu0
    %1758 = vdwg.mxu0
    %1761 = vrot.lane.b32.xlu0 %v1663, 104
    %v1762 = vpop.permute.xlu0 %1761
    %1763 = vrot.lane.b32.xlu0 %v1664, 104
    %v1764 = vpop.permute.xlu0 %1763
    %1766 = vrot.lane.b32.xlu0 %v1666, 104
    %v1767 = vpop.permute.xlu0 %1766
    %v1768 = vsel %vm364, %v1762, 0
    %v1770 = vsel %vm364, %v1764, 0
    %v1772 = vsel %vm364, %v1767, 0
    %1774 = vmatprep.subr.mxu0 0.0
    %1775 = vmatpush1.xpose.msra.mxu0 %v1772
    %1776 = vmatprep.subr.mxu0 0.0
    %1777 = vmatpush1.xpose.msra.mxu0 0.0
    %1778 = vmatprep.subr.mxu0 0.0
    %1779 = vmatpush1.xpose.msra.mxu0 0.0
    %1780 = vmatprep.subr.mxu0 0.0
    %1781 = vmatpush1.xpose.msra.mxu0 0.0
    %1782 = vmatprep.subr.mxu0 0.0
    %1783 = vmatpush1.xpose.msra.mxu0 0.0
    %1784 = vmatprep.subr.mxu0 0.0
    %1785 = vmatpush1.xpose.msra.mxu0 0.0
    %1786 = vmatprep.subr.mxu0 0.0
    %1787 = vmatpush1.xpose.msra.mxu0 0.0
    %1788 = vmatprep.subr.mxu0 0.0
    %1789 = vmatpush1.xpose.msra.mxu0 0.0
    %1790 = vmatprep.subr.mxu0 0.0
    %1791 = vmatpush1.xpose.msra.mxu0 0.0
    %1792 = vmatprep.subr.mxu0 0.0
    %1793 = vmatpush1.xpose.msra.mxu0 0.0
    %1794 = vmatprep.subr.mxu0 0.0
    %1795 = vmatpush1.xpose.msra.mxu0 0.0
    %1796 = vmatprep.subr.mxu0 0.0
    %1797 = vmatpush1.xpose.msra.mxu0 0.0
    %1798 = vmatprep.subr.mxu0 0.0
    %1799 = vmatpush1.xpose.msra.mxu0 0.0
    %1800 = vmatprep.subr.mxu0 0.0
    %1801 = vmatpush1.xpose.msra.mxu0 0.0
    %1802 = vmatprep.subr.mxu0 0.0
    %1803 = vmatpush1.xpose.msra.mxu0 0.0
    %1804 = vmatprep.subr.mxu0 0.0
    %1805 = vmatpush1.xpose.msra.mxu0 0.0
    %1806 = vmatprep.subr.mxu0 0.0
    %1807 = vmatpush1.xpose.msra.mxu0 0.0
    %1808 = vmatprep.subr.mxu0 0.0
    %1809 = vmatpush1.xpose.msra.mxu0 0.0
    %1810 = vmatprep.subr.mxu0 0.0
    %1811 = vmatpush1.xpose.msra.mxu0 0.0
    %1812 = vmatprep.subr.mxu0 0.0
    %1813 = vmatpush1.xpose.msra.mxu0 0.0
    %1814 = vmatprep.subr.mxu0 0.0
    %1815 = vmatpush1.xpose.msra.mxu0 0.0
    %1816 = vmatprep.subr.mxu0 0.0
    %1817 = vmatpush1.xpose.msra.mxu0 0.0
    %1818 = vmatprep.subr.mxu0 0.0
    %1819 = vmatpush1.xpose.msra.mxu0 0.0
    %1820 = vmatprep.subr.mxu0 0.0
    %1821 = vmatpush1.xpose.msra.mxu0 0.0
    %1822 = vmatprep.subr.mxu0 0.0
    %1823 = vmatpush1.xpose.msra.mxu0 0.0
    %1824 = vmatprep.subr.mxu0 0.0
    %1825 = vmatpush1.xpose.msra.mxu0 0.0
    %1826 = vmatprep.subr.mxu0 0.0
    %1827 = vmatpush1.xpose.msra.mxu0 0.0
    %1828 = vmatprep.subr.mxu0 0.0
    %1829 = vmatpush1.xpose.msra.mxu0 0.0
    %1830 = vmatprep.subr.mxu0 0.0
    %1831 = vmatpush1.xpose.msra.mxu0 0.0
    %1832 = vmatprep.subr.mxu0 0.0
    %1833 = vmatpush1.xpose.msra.mxu0 0.0
    %1834 = vmatprep.subr.mxu0 0.0
    %1835 = vmatpush1.xpose.msra.mxu0 0.0
    %1836 = vmatprep.subr.mxu0 0.0
    %1837 = vmatpush1.xpose.msra.mxu0 0.0
    %1838 = vmatprep.mubr.f32.mxu0 0.0
    %1839 = vmatmul.mubr.f32.gmra.mrb[0].mxu0 %v1768
    %v1840 = vpop.f32.mrb[0].mxu0
    %v1841 = vadd.f32 0.0, %v1840
    %v1842 = vpop.f32.mrb[0].mxu0
    %1843 = vmatprep.mubr.f32.mxu0 0.0
    %1844 = vmatmul.mubr.f32.gmra.mrb[0].mxu0 %v1770
    %v1845 = vpop.f32.mrb[0].mxu0
    %v1846 = vadd.f32 0.0, %v1845
    %v1847 = vpop.f32.mrb[0].mxu0
    %1848 = vdwg.mxu0
    %v1849 = vsel %vm364, %v1751, -inf
    %1850 = vmax.xlane.f32.xlu0 %v1849
    %v1851 = vpop.xlane.xlu0 %1850
    %v1852 = vsel %vm364, %v1756, -inf
    %1853 = vmax.xlane.f32.xlu0 %v1852
    %v1854 = vpop.xlane.xlu0 %1853
    %v1855 = vsel %vm364, %v1841, -inf
    %1856 = vmax.xlane.f32.xlu0 %v1855
    %v1857 = vpop.xlane.xlu0 %1856
    %v1858 = vsel %vm364, %v1846, -inf
    %1859 = vmax.xlane.f32.xlu0 %v1858
    %v1860 = vpop.xlane.xlu0 %1859
    %v1861 = vsub.f32 -inf, %v1851
    %v1862 = vsub.f32 -inf, %v1854
    %v1863 = vsub.f32 -inf, %v1857
    %v1864 = vsub.f32 -inf, %v1860
    %v1865 = vmul.f32 %v1861, 1.442695
    %v1866 = vpow.pop %v1865
    %v1867 = vmul.f32 %v1862, 1.442695
    %v1868 = vpow.pop %v1867
    %v1869 = vmul.f32 %v1863, 1.442695
    %v1870 = vpow.pop %v1869
    %v1871 = vmul.f32 %v1864, 1.442695
    %v1872 = vpow.pop %v1871
    %v1873 = vsub.f32 %v1751, %v1851
    %v1874 = vsub.f32 %v1756, %v1854
    %v1875 = vsub.f32 %v1841, %v1857
    %v1876 = vsub.f32 %v1846, %v1860
    %v1877 = vmul.f32 %v1873, 1.442695
    %v1878 = vpow.pop %v1877
    %v1879 = vmul.f32 %v1874, 1.442695
    %v1880 = vpow.pop %v1879
    %v1881 = vmul.f32 %v1875, 1.442695
    %v1882 = vpow.pop %v1881
    %v1883 = vmul.f32 %v1876, 1.442695
    %v1884 = vpow.pop %v1883
    %v1885 = vsel %vm364, %v1878, 0.0
    %1886 = vadd.xlane.f32.xlu0 %v1885
    %v1887 = vpop.xlane.xlu0 %1886
    %v1888 = vsel %vm364, %v1880, 0.0
    %1889 = vadd.xlane.f32.xlu0 %v1888
    %v1890 = vpop.xlane.xlu0 %1889
    %v1891 = vsel %vm364, %v1882, 0.0
    %1892 = vadd.xlane.f32.xlu0 %v1891
    %v1893 = vpop.xlane.xlu0 %1892
    %v1894 = vsel %vm364, %v1884, 0.0
    %1895 = vadd.xlane.f32.xlu0 %v1894
    %v1896 = vpop.xlane.xlu0 %1895
    %v1897 = vmul.f32 %v1866, 0.0
    %v1898 = vmul.f32 %v1868, 0.0
    %v1899 = vmul.f32 %v1870, 0.0
    %v1900 = vmul.f32 %v1872, 0.0
    %v1901 = vadd.f32 %v1897, %v1887
    %v1902 = vadd.f32 %v1898, %v1890
    %v1903 = vadd.f32 %v1899, %v1893
    %v1904 = vadd.f32 %v1900, %v1896
    %1906 = vrot.lane.b32.xlu0 %v1667, 104
    %v1907 = vpop.permute.xlu0 %1906
    %v1910 = vsel %vm364, %v1878, 0
    %v1913 = vsel %vm364, %v1880, 0
    %1915 = vmatprep.subr.mxu0 0.0
    %1916 = vmatpush1.msra.mxu0 %v1907
    %1917 = vmatprep.subr.mxu0 0.0
    %1918 = vmatpush1.msra.mxu0 0.0
    %1919 = vmatprep.subr.mxu0 0.0
    %1920 = vmatpush1.msra.mxu0 0.0
    %1921 = vmatprep.subr.mxu0 0.0
    %1922 = vmatpush1.msra.mxu0 0.0
    %1923 = vmatprep.subr.mxu0 0.0
    %1924 = vmatpush1.msra.mxu0 0.0
    %1925 = vmatprep.subr.mxu0 0.0
    %1926 = vmatpush1.msra.mxu0 0.0
    %1927 = vmatprep.subr.mxu0 0.0
    %1928 = vmatpush1.msra.mxu0 0.0
    %1929 = vmatprep.subr.mxu0 0.0
    %1930 = vmatpush1.msra.mxu0 0.0
    %1931 = vmatprep.subr.mxu0 0.0
    %1932 = vmatpush1.msra.mxu0 0.0
    %1933 = vmatprep.subr.mxu0 0.0
    %1934 = vmatpush1.msra.mxu0 0.0
    %1935 = vmatprep.subr.mxu0 0.0
    %1936 = vmatpush1.msra.mxu0 0.0
    %1937 = vmatprep.subr.mxu0 0.0
    %1938 = vmatpush1.msra.mxu0 0.0
    %1939 = vmatprep.subr.mxu0 0.0
    %1940 = vmatpush1.msra.mxu0 0.0
    %1941 = vmatprep.subr.mxu0 0.0
    %1942 = vmatpush1.msra.mxu0 0.0
    %1943 = vmatprep.subr.mxu0 0.0
    %1944 = vmatpush1.msra.mxu0 0.0
    %1945 = vmatprep.subr.mxu0 0.0
    %1946 = vmatpush1.msra.mxu0 0.0
    %1947 = vmatprep.subr.mxu0 0.0
    %1948 = vmatpush1.msra.mxu0 0.0
    %1949 = vmatprep.subr.mxu0 0.0
    %1950 = vmatpush1.msra.mxu0 0.0
    %1951 = vmatprep.subr.mxu0 0.0
    %1952 = vmatpush1.msra.mxu0 0.0
    %1953 = vmatprep.subr.mxu0 0.0
    %1954 = vmatpush1.msra.mxu0 0.0
    %1955 = vmatprep.subr.mxu0 0.0
    %1956 = vmatpush1.msra.mxu0 0.0
    %1957 = vmatprep.subr.mxu0 0.0
    %1958 = vmatpush1.msra.mxu0 0.0
    %1959 = vmatprep.subr.mxu0 0.0
    %1960 = vmatpush1.msra.mxu0 0.0
    %1961 = vmatprep.subr.mxu0 0.0
    %1962 = vmatpush1.msra.mxu0 0.0
    %1963 = vmatprep.subr.mxu0 0.0
    %1964 = vmatpush1.msra.mxu0 0.0
    %1965 = vmatprep.subr.mxu0 0.0
    %1966 = vmatpush1.msra.mxu0 0.0
    %1967 = vmatprep.subr.mxu0 0.0
    %1968 = vmatpush1.msra.mxu0 0.0
    %1969 = vmatprep.subr.mxu0 0.0
    %1970 = vmatpush1.msra.mxu0 0.0
    %1971 = vmatprep.subr.mxu0 0.0
    %1972 = vmatpush1.msra.mxu0 0.0
    %1973 = vmatprep.subr.mxu0 0.0
    %1974 = vmatpush1.msra.mxu0 0.0
    %1975 = vmatprep.subr.mxu0 0.0
    %1976 = vmatpush1.msra.mxu0 0.0
    %1977 = vmatprep.subr.mxu0 0.0
    %1978 = vmatpush1.msra.mxu0 0.0
    %1979 = vmatprep.mubr.f32.mxu0 0.0
    %1980 = vmatmul.mubr.f32.gmra.mrb[0].mxu0 %v1910
    %v1981 = vpop.f32.mrb[0].mxu0
    %v1982 = vadd.f32 0.0, %v1981
    %v1983 = vpop.f32.mrb[0].mxu0
    %1984 = vmatprep.mubr.f32.mxu0 0.0
    %1985 = vmatmul.mubr.f32.gmra.mrb[0].mxu0 %v1913
    %v1986 = vpop.f32.mrb[0].mxu0
    %v1987 = vadd.f32 0.0, %v1986
    %v1988 = vpop.f32.mrb[0].mxu0
    %1989 = vdwg.mxu0
    %1991 = vrot.lane.b32.xlu0 %v1668, 104
    %v1992 = vpop.permute.xlu0 %1991
    %v1995 = vsel %vm364, %v1882, 0
    %v1998 = vsel %vm364, %v1884, 0
    %2000 = vmatprep.subr.mxu0 0.0
    %2001 = vmatpush1.msra.mxu0 %v1992
    %2002 = vmatprep.subr.mxu0 0.0
    %2003 = vmatpush1.msra.mxu0 0.0
    %2004 = vmatprep.subr.mxu0 0.0
    %2005 = vmatpush1.msra.mxu0 0.0
    %2006 = vmatprep.subr.mxu0 0.0
    %2007 = vmatpush1.msra.mxu0 0.0
    %2008 = vmatprep.subr.mxu0 0.0
    %2009 = vmatpush1.msra.mxu0 0.0
    %2010 = vmatprep.subr.mxu0 0.0
    %2011 = vmatpush1.msra.mxu0 0.0
    %2012 = vmatprep.subr.mxu0 0.0
    %2013 = vmatpush1.msra.mxu0 0.0
    %2014 = vmatprep.subr.mxu0 0.0
    %2015 = vmatpush1.msra.mxu0 0.0
    %2016 = vmatprep.subr.mxu0 0.0
    %2017 = vmatpush1.msra.mxu0 0.0
    %2018 = vmatprep.subr.mxu0 0.0
    %2019 = vmatpush1.msra.mxu0 0.0
    %2020 = vmatprep.subr.mxu0 0.0
    %2021 = vmatpush1.msra.mxu0 0.0
    %2022 = vmatprep.subr.mxu0 0.0
    %2023 = vmatpush1.msra.mxu0 0.0
    %2024 = vmatprep.subr.mxu0 0.0
    %2025 = vmatpush1.msra.mxu0 0.0
    %2026 = vmatprep.subr.mxu0 0.0
    %2027 = vmatpush1.msra.mxu0 0.0
    %2028 = vmatprep.subr.mxu0 0.0
    %2029 = vmatpush1.msra.mxu0 0.0
    %2030 = vmatprep.subr.mxu0 0.0
    %2031 = vmatpush1.msra.mxu0 0.0
    %2032 = vmatprep.subr.mxu0 0.0
    %2033 = vmatpush1.msra.mxu0 0.0
    %2034 = vmatprep.subr.mxu0 0.0
    %2035 = vmatpush1.msra.mxu0 0.0
    %2036 = vmatprep.subr.mxu0 0.0
    %2037 = vmatpush1.msra.mxu0 0.0
    %2038 = vmatprep.subr.mxu0 0.0
    %2039 = vmatpush1.msra.mxu0 0.0
    %2040 = vmatprep.subr.mxu0 0.0
    %2041 = vmatpush1.msra.mxu0 0.0
    %2042 = vmatprep.subr.mxu0 0.0
    %2043 = vmatpush1.msra.mxu0 0.0
    %2044 = vmatprep.subr.mxu0 0.0
    %2045 = vmatpush1.msra.mxu0 0.0
    %2046 = vmatprep.subr.mxu0 0.0
    %2047 = vmatpush1.msra.mxu0 0.0
    %2048 = vmatprep.subr.mxu0 0.0
    %2049 = vmatpush1.msra.mxu0 0.0
    %2050 = vmatprep.subr.mxu0 0.0
    %2051 = vmatpush1.msra.mxu0 0.0
    %2052 = vmatprep.subr.mxu0 0.0
    %2053 = vmatpush1.msra.mxu0 0.0
    %2054 = vmatprep.subr.mxu0 0.0
    %2055 = vmatpush1.msra.mxu0 0.0
    %2056 = vmatprep.subr.mxu0 0.0
    %2057 = vmatpush1.msra.mxu0 0.0
    %2058 = vmatprep.subr.mxu0 0.0
    %2059 = vmatpush1.msra.mxu0 0.0
    %2060 = vmatprep.subr.mxu0 0.0
    %2061 = vmatpush1.msra.mxu0 0.0
    %2062 = vmatprep.subr.mxu0 0.0
    %2063 = vmatpush1.msra.mxu0 0.0
    %2064 = vmatprep.mubr.f32.mxu0 0.0
    %2065 = vmatmul.mubr.f32.gmra.mrb[0].mxu0 %v1995
    %v2066 = vpop.f32.mrb[0].mxu0
    %v2067 = vadd.f32 0.0, %v2066
    %v2068 = vpop.f32.mrb[0].mxu0
    %2069 = vmatprep.mubr.f32.mxu0 0.0
    %2070 = vmatmul.mubr.f32.gmra.mrb[0].mxu0 %v1998
    %v2071 = vpop.f32.mrb[0].mxu0
    %v2072 = vadd.f32 0.0, %v2071
    %v2073 = vpop.f32.mrb[0].mxu0
    %2074 = vdwg.mxu0
    %v2075 = vadd.f32 %v1897, %v1982
    %v2076 = vadd.f32 %v1898, %v1987
    %v2077 = vadd.f32 %v1899, %v2067
    %v2078 = vadd.f32 %v1900, %v2072
    %v2079 = vrcp.pop %v1901
    %v2080 = vrcp.pop %v1902
    %v2081 = vrcp.pop %v1903
    %v2082 = vrcp.pop %v1904
    %v2083 = vmul.f32 %v2075, %v2079
    %v2084 = vmul.f32 %v2076, %v2080
    %v2085 = vmul.f32 %v2077, %v2081
    %v2086 = vmul.f32 %v2078, %v2082
    %2091 = vrot.lane.b32.xlu0 %v2083, 24
    %v2092 = vpop.permute.xlu0 %2091
    %2093 = vrot.lane.b32.xlu0 %v2084, 24
    %v2094 = vpop.permute.xlu0 %2093
    %2095 = vrot.lane.b32.xlu0 %v2085, 24
    %v2096 = vpop.permute.xlu0 %2095
    %2097 = vrot.lane.b32.xlu0 %v2086, 24
    %v2098 = vpop.permute.xlu0 %2097
    %vm2103 = vcmask 261312
    %2104 = vst.msk [vmem:[#allocation5] sm:$0xff] %vm2103, %v2092
    %2105 = vst.msk [vmem:[#allocation5 + $0x8] sm:$0xff] %vm2103, %v2094
    %2106 = vst.msk [vmem:[#allocation5 + $0x10] sm:$0xff] %vm2103, %v2096
    %2107 = vst.msk [vmem:[#allocation5 + $0x18] sm:$0xff] %vm2103, %v2098
    %v2108 = vld [vmem:[#allocation5] sm:$0xff]
    %v2109 = vld [vmem:[#allocation5 + $0x8] sm:$0xff]
    %v2110 = vld [vmem:[#allocation5 + $0x10] sm:$0xff]
    %v2111 = vld [vmem:[#allocation5 + $0x18] sm:$0xff]
    %v2112 = vld [vmem:[#allocation17] sm:$0xff]
    %v2113 = vld [vmem:[#allocation17 + $0x8] sm:$0xff]
    %v2114 = vld [vmem:[#allocation17 + $0x10] sm:$0xff]
    %v2115 = vld [vmem:[#allocation17 + $0x18] sm:$0xff]
    %v2116 = vld [vmem:[#allocation18] sm:$0x1]
    %v2118 = vlaneseq
    %v2119 = vshrl.u32 %v2118, 7
    %v2120 = vsub.s32 0, %v2119
    %v2121 = vrot.slane %v2116, %v2120
    %v2124 = vsel %vm150, %v2108, 0
    %v2127 = vsel %vm150, %v2109, 0
    %v2130 = vsel %vm150, %v2110, 0
    %v2133 = vsel %vm150, %v2111, 0
    %2135 = vmatprep.subr.mxu0 0.0
    %2136 = vmatpush1.msra.mxu0 %v2112
    %2137 = vmatprep.subr.mxu0 0.0
    %2138 = vmatpush1.msra.mxu0 %v2113
    %2139 = vmatprep.subr.mxu0 0.0
    %2140 = vmatpush1.msra.mxu0 %v2114
    %2141 = vmatprep.subr.mxu0 0.0
    %2142 = vmatpush1.msra.mxu0 %v2115
    %2143 = vmatprep.subr.mxu0 0.0
    %2144 = vmatpush1.msra.mxu0 0.0
    %2145 = vmatprep.subr.mxu0 0.0
    %2146 = vmatpush1.msra.mxu0 0.0
    %2147 = vmatprep.subr.mxu0 0.0
    %2148 = vmatpush1.msra.mxu0 0.0
    %2149 = vmatprep.subr.mxu0 0.0
    %2150 = vmatpush1.msra.mxu0 0.0
    %2151 = vmatprep.subr.mxu0 0.0
    %2152 = vmatpush1.msra.mxu0 0.0
    %2153 = vmatprep.subr.mxu0 0.0
    %2154 = vmatpush1.msra.mxu0 0.0
    %2155 = vmatprep.subr.mxu0 0.0
    %2156 = vmatpush1.msra.mxu0 0.0
    %2157 = vmatprep.subr.mxu0 0.0
    %2158 = vmatpush1.msra.mxu0 0.0
    %2159 = vmatprep.subr.mxu0 0.0
    %2160 = vmatpush1.msra.mxu0 0.0
    %2161 = vmatprep.subr.mxu0 0.0
    %2162 = vmatpush1.msra.mxu0 0.0
    %2163 = vmatprep.subr.mxu0 0.0
    %2164 = vmatpush1.msra.mxu0 0.0
    %2165 = vmatprep.subr.mxu0 0.0
    %2166 = vmatpush1.msra.mxu0 0.0
    %2167 = vmatprep.subr.mxu0 0.0
    %2168 = vmatpush1.msra.mxu0 0.0
    %2169 = vmatprep.subr.mxu0 0.0
    %2170 = vmatpush1.msra.mxu0 0.0
    %2171 = vmatprep.subr.mxu0 0.0
    %2172 = vmatpush1.msra.mxu0 0.0
    %2173 = vmatprep.subr.mxu0 0.0
    %2174 = vmatpush1.msra.mxu0 0.0
    %2175 = vmatprep.subr.mxu0 0.0
    %2176 = vmatpush1.msra.mxu0 0.0
    %2177 = vmatprep.subr.mxu0 0.0
    %2178 = vmatpush1.msra.mxu0 0.0
    %2179 = vmatprep.subr.mxu0 0.0
    %2180 = vmatpush1.msra.mxu0 0.0
    %2181 = vmatprep.subr.mxu0 0.0
    %2182 = vmatpush1.msra.mxu0 0.0
    %2183 = vmatprep.subr.mxu0 0.0
    %2184 = vmatpush1.msra.mxu0 0.0
    %2185 = vmatprep.subr.mxu0 0.0
    %2186 = vmatpush1.msra.mxu0 0.0
    %2187 = vmatprep.subr.mxu0 0.0
    %2188 = vmatpush1.msra.mxu0 0.0
    %2189 = vmatprep.subr.mxu0 0.0
    %2190 = vmatpush1.msra.mxu0 0.0
    %2191 = vmatprep.subr.mxu0 0.0
    %2192 = vmatpush1.msra.mxu0 0.0
    %2193 = vmatprep.subr.mxu0 0.0
    %2194 = vmatpush1.msra.mxu0 0.0
    %2195 = vmatprep.subr.mxu0 0.0
    %2196 = vmatpush1.msra.mxu0 0.0
    %2197 = vmatprep.subr.mxu0 0.0
    %2198 = vmatpush1.msra.mxu0 0.0
    %2199 = vmatprep.mubr.f32.mxu0 0.0
    %2200 = vmatmul.mubr.f32.gmra.mrb[0].mxu0 %v2124
    %v2201 = vpop.f32.mrb[0].mxu0
    %v2202 = vadd.f32 %v2121, %v2201
    %v2203 = vpop.f32.mrb[0].mxu0
    %2204 = vmatprep.mubr.f32.mxu0 0.0
    %2205 = vmatmul.mubr.f32.gmra.mrb[0].mxu0 %v2127
    %v2206 = vpop.f32.mrb[0].mxu0
    %v2207 = vadd.f32 %v2121, %v2206
    %v2208 = vpop.f32.mrb[0].mxu0
    %2209 = vmatprep.mubr.f32.mxu0 0.0
    %2210 = vmatmul.mubr.f32.gmra.mrb[0].mxu0 %v2130
    %v2211 = vpop.f32.mrb[0].mxu0
    %v2212 = vadd.f32 %v2121, %v2211
    %v2213 = vpop.f32.mrb[0].mxu0
    %2214 = vmatprep.mubr.f32.mxu0 0.0
    %2215 = vmatmul.mubr.f32.gmra.mrb[0].mxu0 %v2133
    %v2216 = vpop.f32.mrb[0].mxu0
    %v2217 = vadd.f32 %v2121, %v2216
    %v2218 = vpop.f32.mrb[0].mxu0
    %2219 = vdwg.mxu0
    %2220 = vst.msk [vmem:[#allocation20] sm:$0xff] %vm150, %v2202
    %2221 = vst.msk [vmem:[#allocation20 + $0x8] sm:$0xff] %vm150, %v2207
    %2222 = vst.msk [vmem:[#allocation20 + $0x10] sm:$0xff] %vm150, %v2212
    %2223 = vst.msk [vmem:[#allocation20 + $0x18] sm:$0xff] %vm150, %v2217
    // Predicated region
    $region66: #{tpu_custom_call.1} parent=1 // pred_check
      _
    $region67: #{tpu_custom_call.1} parent=1 // pred_check_branch
      %2225 = sbr.rel (0) target = $region69
    $region68: #{tpu_custom_call.1} parent=1 // pred_region
      %s2227 = ssub.s32 512, 512
      %2228 = vsyncadd [#allocation8], %s2227
      %s2229 = sshll.u32 [#allocation20], 4
      %s2230 = int_to_ptr.vmem [resolvable:$true] %s2229
      %2235 = dma.vmem_to_hbm [thread:$0]  %s2230, 512, %s8, [#allocation8], 128, 128, 8
    $region69: #{tpu_custom_call.1} parent=1 // pred_fallthru
      _
    // Predicated region
    $region70: #{tpu_custom_call.1} parent=1 // pred_check
      _
    $region71: #{tpu_custom_call.1} parent=1 // pred_check_branch
      %2237 = sbr.rel (0) target = $region73
    $region72: #{tpu_custom_call.1} parent=1 // pred_region
      %2238 = dma.done [#allocation8], 512
    $region73: #{tpu_custom_call.1} parent=1 // pred_fallthru
      _
    %2239 = vsyncpa [#allocation7], 1
    %2240 = vsyncpa [#allocation10], 1
    %2241 = vsyncpa [#allocation13], 1
    %2242 = vsyncpa [#allocation16], 1
    %2243 = vsyncpa [#allocation19], 1
    %2244 = vsyncpa [#allocation8], 1

// kernel: tpu_custom_call.1
$region0: #{tpu_custom_call.1}
  #allocation0 [shape = 'u32[]', space=smem, size = 0x4, offset = 0x4, fixed_abs, tag = 'smem constant byte address 0x4 - core index']
  #allocation1 [shape = 'u32[144,128]{1,0:T(1,128)}', space=vmem, size = 0x12000, scoped, tag = 'internal scratch']
  #allocation2 [shape = 'f32[2,16,32]{2,1,0:T(8,128)}', space=vmem, size = 0x4000, scoped, tag = 'scratch operand']
  #allocation3 [shape = 'f32[2,8,32]{2,1,0:T(8,128)}', space=vmem, size = 0x2000, scoped, tag = 'scratch operand']
  #allocation4 [shape = 'f32[2,8,32]{2,1,0:T(8,128)}', space=vmem, size = 0x2000, scoped, tag = 'scratch operand']
  #allocation5 [shape = 'f32[2,16,32]{2,1,0:T(8,128)}', space=vmem, size = 0x4000, scoped, tag = 'scratch operand']
  %s0 = inlined_call_operand.hbm [shape: f32[2,16,32], index: 0, kind: input, shape index: {}]
  %s1 = inlined_call_operand.hbm [shape: f32[2,8,32], index: 1, kind: input, shape index: {}]
  %s2 = inlined_call_operand.hbm [shape: f32[32,32], index: 2, kind: input, shape index: {}]
  %s3 = inlined_call_operand.hbm [shape: f32[1,32], index: 3, kind: input, shape index: {}]
  %s4 = inlined_call_operand.hbm [shape: f32[32,64], index: 4, kind: input, shape index: {}]
  %s5 = inlined_call_operand.hbm [shape: f32[1,64], index: 5, kind: input, shape index: {}]
  %s6 = inlined_call_operand.hbm [shape: f32[32,32], index: 6, kind: input, shape index: {}]
  %s7 = inlined_call_operand.hbm [shape: f32[1,32], index: 7, kind: input, shape index: {}]
  %s8 = inlined_call_operand.hbm [shape: f32[2,16,32], index: 8, kind: output, shape index: {}]
  %s9 = sld [smem:[#allocation0]]
  $region74: #{tpu_custom_call.1} parent=0
    _
  %s11 = ssub.s32 1, %s9
  %s12 = scalar_select 0, %s11, %s9
  $region1: #{tpu_custom_call.1} parent=0
    #allocation6 [shape = 'u8[16384]{0}', space=vmem, size = 0x4000, scoped, tag = 'input window, operand 0, single buffered']
    #allocation7 [shape = 's32[1]{0}', space=sflag, size = 0x4, scoped, tag = 'scoped memory for tpu_custom_call.1']
    #allocation8 [shape = 's32[1]{0}', space=sflag, size = 0x4, scoped, tag = 'scoped memory for tpu_custom_call.1']
    #allocation9 [shape = 'u8[8192]{0}', space=vmem, size = 0x2000, scoped, tag = 'input window, operand 1, single buffered']
    #allocation10 [shape = 's32[1]{0}', space=sflag, size = 0x4, scoped, tag = 'scoped memory for tpu_custom_call.1']
    #allocation11 [shape = 'u8[16384]{0}', space=vmem, size = 0x4000, scoped, tag = 'input window, operand 2, single buffered']
    #allocation12 [shape = 'u8[512]{0}', space=vmem, size = 0x400, scoped, tag = 'input window, operand 3, single buffered']
    #allocation13 [shape = 's32[1]{0}', space=sflag, size = 0x4, scoped, tag = 'scoped memory for tpu_custom_call.1']
    #allocation14 [shape = 'u8[16384]{0}', space=vmem, size = 0x4000, scoped, tag = 'input window, operand 4, single buffered']
    #allocation15 [shape = 'u8[512]{0}', space=vmem, size = 0x400, scoped, tag = 'input window, operand 5, single buffered']
    #allocation16 [shape = 's32[1]{0}', space=sflag, size = 0x4, scoped, tag = 'scoped memory for tpu_custom_call.1']
    #allocation17 [shape = 'u8[16384]{0}', space=vmem, size = 0x4000, scoped, tag = 'input window, operand 6, single buffered']
    #allocation18 [shape = 'u8[512]{0}', space=vmem, size = 0x400, scoped, tag = 'input window, operand 7, single buffered']
    #allocation19 [shape = 's32[1]{0}', space=sflag, size = 0x4, scoped, tag = 'scoped memory for tpu_custom_call.1']
    #allocation20 [shape = 'u8[16384]{0}', space=vmem, size = 0x4000, scoped, tag = 'output window, operand 0, single buffered']
    %13 = vsyncpa [#allocation7], 0
    %14 = vsyncpa [#allocation10], 0
    %15 = vsyncpa [#allocation13], 0
    %16 = vsyncpa [#allocation16], 0
    %17 = vsyncpa [#allocation19], 0
    %18 = vsyncpa [#allocation8], 0
    // Predicated region
    $region2: #{tpu_custom_call.1} parent=1 // pred_check
      _
    $region3: #{tpu_custom_call.1} parent=1 // pred_check_branch
      %20 = sbr.rel (0) target = $region5
    $region4: #{tpu_custom_call.1} parent=1 // pred_region
      %s22 = ssub.s32 512, 512
      %23 = vsyncadd [#allocation7], %s22
      %s24 = sshll.u32 [#allocation6], 4
      %s25 = int_to_ptr.vmem [resolvable:$true] %s24
      %30 = dma.hbm_to_vmem [thread:$0]  %s0, 512, %s25, [#allocation7], 128, 128, 8
    $region5: #{tpu_custom_call.1} parent=1 // pred_fallthru
      _
    // Predicated region
    $region6: #{tpu_custom_call.1} parent=1 // pred_check
      _
    $region7: #{tpu_custom_call.1} parent=1 // pred_check_branch
      %32 = sbr.rel (0) target = $region9
    $region8: #{tpu_custom_call.1} parent=1 // pred_region
      %s34 = ssub.s32 256, 256
      %35 = vsyncadd [#allocation10], %s34
      %s36 = sshll.u32 [#allocation9], 4
      %s37 = int_to_ptr.vmem [resolvable:$true] %s36
      %42 = dma.hbm_to_vmem [thread:$0]  %s1, 256, %s37, [#allocation10], 128, 128, 8
    $region9: #{tpu_custom_call.1} parent=1 // pred_fallthru
      _
    // Predicated region
    $region10: #{tpu_custom_call.1} parent=1 // pred_check
      _
    $region11: #{tpu_custom_call.1} parent=1 // pred_check_branch
      %44 = sbr.rel (0) target = $region13
    $region12: #{tpu_custom_call.1} parent=1 // pred_region
      %s46 = ssub.s32 512, 512
      %47 = vsyncadd [#allocation10], %s46
      %s48 = sshll.u32 [#allocation11], 4
      %s49 = int_to_ptr.vmem [resolvable:$true] %s48
      %54 = dma.hbm_to_vmem [thread:$0]  %s2, 512, %s49, [#allocation10], 128, 128, 8
    $region13: #{tpu_custom_call.1} parent=1 // pred_fallthru
      _
    // Predicated region
    $region14: #{tpu_custom_call.1} parent=1 // pred_check
      _
    $region15: #{tpu_custom_call.1} parent=1 // pred_check_branch
      %56 = sbr.rel (0) target = $region17
    $region16: #{tpu_custom_call.1} parent=1 // pred_region
      %s58 = ssub.s32 16, 16
      %59 = vsyncadd [#allocation13], %s58
      %s61 = sshll.u32 [#allocation12], 4
      %s62 = int_to_ptr.vmem [resolvable:$true] %s61
      %64 = dma.hbm_to_vmem [thread:$0]  %s3, 16, %s62, [#allocation13]
    $region17: #{tpu_custom_call.1} parent=1 // pred_fallthru
      _
    // Predicated region
    $region18: #{tpu_custom_call.1} parent=1 // pred_check
      _
    $region19: #{tpu_custom_call.1} parent=1 // pred_check_branch
      %66 = sbr.rel (0) target = $region21
    $region20: #{tpu_custom_call.1} parent=1 // pred_region
      %s68 = ssub.s32 512, 512
      %69 = vsyncadd [#allocation13], %s68
      %s70 = sshll.u32 [#allocation14], 4
      %s71 = int_to_ptr.vmem [resolvable:$true] %s70
      %76 = dma.hbm_to_vmem [thread:$0]  %s4, 512, %s71, [#allocation13], 128, 128, 8
    $region21: #{tpu_custom_call.1} parent=1 // pred_fallthru
      _
    // Predicated region
    $region22: #{tpu_custom_call.1} parent=1 // pred_check
      _
    $region23: #{tpu_custom_call.1} parent=1 // pred_check_branch
      %78 = sbr.rel (0) target = $region25
    $region24: #{tpu_custom_call.1} parent=1 // pred_region
      %s80 = ssub.s32 16, 16
      %81 = vsyncadd [#allocation16], %s80
      %s83 = sshll.u32 [#allocation15], 4
      %s84 = int_to_ptr.vmem [resolvable:$true] %s83
      %86 = dma.hbm_to_vmem [thread:$0]  %s5, 16, %s84, [#allocation16]
    $region25: #{tpu_custom_call.1} parent=1 // pred_fallthru
      _
    // Predicated region
    $region26: #{tpu_custom_call.1} parent=1 // pred_check
      _
    $region27: #{tpu_custom_call.1} parent=1 // pred_check_branch
      %88 = sbr.rel (0) target = $region29
    $region28: #{tpu_custom_call.1} parent=1 // pred_region
      %s90 = ssub.s32 512, 512
      %91 = vsyncadd [#allocation16], %s90
      %s92 = sshll.u32 [#allocation17], 4
      %s93 = int_to_ptr.vmem [resolvable:$true] %s92
      %98 = dma.hbm_to_vmem [thread:$0]  %s6, 512, %s93, [#allocation16], 128, 128, 8
    $region29: #{tpu_custom_call.1} parent=1 // pred_fallthru
      _
    // Predicated region
    $region30: #{tpu_custom_call.1} parent=1 // pred_check
      _
    $region31: #{tpu_custom_call.1} parent=1 // pred_check_branch
      %100 = sbr.rel (0) target = $region33
    $region32: #{tpu_custom_call.1} parent=1 // pred_region
      %s102 = ssub.s32 16, 16
      %103 = vsyncadd [#allocation19], %s102
      %s105 = sshll.u32 [#allocation18], 4
      %s106 = int_to_ptr.vmem [resolvable:$true] %s105
      %108 = dma.hbm_to_vmem [thread:$0]  %s7, 16, %s106, [#allocation19]
    $region33: #{tpu_custom_call.1} parent=1 // pred_fallthru
      _
    // Predicated region
    $region34: #{tpu_custom_call.1} parent=1 // pred_check
      _
    $region35: #{tpu_custom_call.1} parent=1 // pred_check_branch
      %110 = sbr.rel (0) target = $region37
    $region36: #{tpu_custom_call.1} parent=1 // pred_region
      %111 = dma.done [#allocation7], 512
    $region37: #{tpu_custom_call.1} parent=1 // pred_fallthru
      _
    // Predicated region
    $region38: #{tpu_custom_call.1} parent=1 // pred_check
      _
    $region39: #{tpu_custom_call.1} parent=1 // pred_check_branch
      %113 = sbr.rel (0) target = $region41
    $region40: #{tpu_custom_call.1} parent=1 // pred_region
      %114 = dma.done [#allocation10], 256
    $region41: #{tpu_custom_call.1} parent=1 // pred_fallthru
      _
    // Predicated region
    $region42: #{tpu_custom_call.1} parent=1 // pred_check
      _
    $region43: #{tpu_custom_call.1} parent=1 // pred_check_branch
      %116 = sbr.rel (0) target = $region45
    $region44: #{tpu_custom_call.1} parent=1 // pred_region
      %117 = dma.done [#allocation10], 512
    $region45: #{tpu_custom_call.1} parent=1 // pred_fallthru
      _
    // Predicated region
    $region46: #{tpu_custom_call.1} parent=1 // pred_check
      _
    $region47: #{tpu_custom_call.1} parent=1 // pred_check_branch
      %119 = sbr.rel (0) target = $region49
    $region48: #{tpu_custom_call.1} parent=1 // pred_region
      %120 = dma.done [#allocation13], 16
    $region49: #{tpu_custom_call.1} parent=1 // pred_fallthru
      _
    // Predicated region
    $region50: #{tpu_custom_call.1} parent=1 // pred_check
      _
    $region51: #{tpu_custom_call.1} parent=1 // pred_check_branch
      %122 = sbr.rel (0) target = $region53
    $region52: #{tpu_custom_call.1} parent=1 // pred_region
      %123 = dma.done [#allocation13], 512
    $region53: #{tpu_custom_call.1} parent=1 // pred_fallthru
      _
    // Predicated region
    $region54: #{tpu_custom_call.1} parent=1 // pred_check
      _
    $region55: #{tpu_custom_call.1} parent=1 // pred_check_branch
      %125 = sbr.rel (0) target = $region57
    $region56: #{tpu_custom_call.1} parent=1 // pred_region
      %126 = dma.done [#allocation16], 16
    $region57: #{tpu_custom_call.1} parent=1 // pred_fallthru
      _
    // Predicated region
    $region58: #{tpu_custom_call.1} parent=1 // pred_check
      _
    $region59: #{tpu_custom_call.1} parent=1 // pred_check_branch
      %128 = sbr.rel (0) target = $region61
    $region60: #{tpu_custom_call.1} parent=1 // pred_region
      %129 = dma.done [#allocation16], 512
    $region61: #{tpu_custom_call.1} parent=1 // pred_fallthru
      _
    // Predicated region
    $region62: #{tpu_custom_call.1} parent=1 // pred_check
      _
    $region63: #{tpu_custom_call.1} parent=1 // pred_check_branch
      %131 = sbr.rel (0) target = $region65
    $region64: #{tpu_custom_call.1} parent=1 // pred_region
      %132 = dma.done [#allocation19], 16
    $region65: #{tpu_custom_call.1} parent=1 // pred_fallthru
      _
    %v133 = vld [vmem:[#allocation6] sm:$0xff]
    %v134 = vld [vmem:[#allocation6 + $0x8] sm:$0xff]
    %v135 = vld [vmem:[#allocation6 + $0x10] sm:$0xff]
    %v136 = vld [vmem:[#allocation6 + $0x18] sm:$0xff]
    %v137 = vld [vmem:[#allocation9] sm:$0xff]
    %v138 = vld [vmem:[#allocation9 + $0x8] sm:$0xff]
    %v139 = vld [vmem:[#allocation11] sm:$0xff]
    %v140 = vld [vmem:[#allocation11 + $0x8] sm:$0xff]
    %v141 = vld [vmem:[#allocation11 + $0x10] sm:$0xff]
    %v142 = vld [vmem:[#allocation11 + $0x18] sm:$0xff]
    %v143 = vld [vmem:[#allocation12] sm:$0x1]
    %v145 = vlaneseq
    %v146 = vshrl.u32 %v145, 7
    %v147 = vsub.s32 0, %v146
    %v148 = vrot.slane %v143, %v147
    %vm150 = vcmask 261120
    %v152 = vsel %vm150, %v133, 0
    %v155 = vsel %vm150, %v134, 0
    %v158 = vsel %vm150, %v135, 0
    %v161 = vsel %vm150, %v136, 0
    %163 = vmatprep.subr.mxu0 0.0
    %164 = vmatpush1.msra.mxu0 %v139
    %165 = vmatprep.subr.mxu0 0.0
    %166 = vmatpush1.msra.mxu0 %v140
    %167 = vmatprep.subr.mxu0 0.0
    %168 = vmatpush1.msra.mxu0 %v141
    %169 = vmatprep.subr.mxu0 0.0
    %170 = vmatpush1.msra.mxu0 %v142
    %171 = vmatprep.subr.mxu0 0.0
    %172 = vmatpush1.msra.mxu0 0.0
    %173 = vmatprep.subr.mxu0 0.0
    %174 = vmatpush1.msra.mxu0 0.0
    %175 = vmatprep.subr.mxu0 0.0
    %176 = vmatpush1.msra.mxu0 0.0
    %177 = vmatprep.subr.mxu0 0.0
    %178 = vmatpush1.msra.mxu0 0.0
    %179 = vmatprep.subr.mxu0 0.0
    %180 = vmatpush1.msra.mxu0 0.0
    %181 = vmatprep.subr.mxu0 0.0
    %182 = vmatpush1.msra.mxu0 0.0
    %183 = vmatprep.subr.mxu0 0.0
    %184 = vmatpush1.msra.mxu0 0.0
    %185 = vmatprep.subr.mxu0 0.0
    %186 = vmatpush1.msra.mxu0 0.0
    %187 = vmatprep.subr.mxu0 0.0
    %188 = vmatpush1.msra.mxu0 0.0
    %189 = vmatprep.subr.mxu0 0.0
    %190 = vmatpush1.msra.mxu0 0.0
    %191 = vmatprep.subr.mxu0 0.0
    %192 = vmatpush1.msra.mxu0 0.0
    %193 = vmatprep.subr.mxu0 0.0
    %194 = vmatpush1.msra.mxu0 0.0
    %195 = vmatprep.subr.mxu0 0.0
    %196 = vmatpush1.msra.mxu0 0.0
    %197 = vmatprep.subr.mxu0 0.0
    %198 = vmatpush1.msra.mxu0 0.0
    %199 = vmatprep.subr.mxu0 0.0
    %200 = vmatpush1.msra.mxu0 0.0
    %201 = vmatprep.subr.mxu0 0.0
    %202 = vmatpush1.msra.mxu0 0.0
    %203 = vmatprep.subr.mxu0 0.0
    %204 = vmatpush1.msra.mxu0 0.0
    %205 = vmatprep.subr.mxu0 0.0
    %206 = vmatpush1.msra.mxu0 0.0
    %207 = vmatprep.subr.mxu0 0.0
    %208 = vmatpush1.msra.mxu0 0.0
    %209 = vmatprep.subr.mxu0 0.0
    %210 = vmatpush1.msra.mxu0 0.0
    %211 = vmatprep.subr.mxu0 0.0
    %212 = vmatpush1.msra.mxu0 0.0
    %213 = vmatprep.subr.mxu0 0.0
    %214 = vmatpush1.msra.mxu0 0.0
    %215 = vmatprep.subr.mxu0 0.0
    %216 = vmatpush1.msra.mxu0 0.0
    %217 = vmatprep.subr.mxu0 0.0
    %218 = vmatpush1.msra.mxu0 0.0
    %219 = vmatprep.subr.mxu0 0.0
    %220 = vmatpush1.msra.mxu0 0.0
    %221 = vmatprep.subr.mxu0 0.0
    %222 = vmatpush1.msra.mxu0 0.0
    %223 = vmatprep.subr.mxu0 0.0
    %224 = vmatpush1.msra.mxu0 0.0
    %225 = vmatprep.subr.mxu0 0.0
    %226 = vmatpush1.msra.mxu0 0.0
    %227 = vmatprep.mubr.f32.mxu0 0.0
    %228 = vmatmul.mubr.f32.gmra.mrb[0].mxu0 %v152
    %v229 = vpop.f32.mrb[0].mxu0
    %v230 = vadd.f32 %v148, %v229
    %v231 = vpop.f32.mrb[0].mxu0
    %232 = vmatprep.mubr.f32.mxu0 0.0
    %233 = vmatmul.mubr.f32.gmra.mrb[0].mxu0 %v155
    %v234 = vpop.f32.mrb[0].mxu0
    %v235 = vadd.f32 %v148, %v234
    %v236 = vpop.f32.mrb[0].mxu0
    %237 = vmatprep.mubr.f32.mxu0 0.0
    %238 = vmatmul.mubr.f32.gmra.mrb[0].mxu0 %v158
    %v239 = vpop.f32.mrb[0].mxu0
    %v240 = vadd.f32 %v148, %v239
    %v241 = vpop.f32.mrb[0].mxu0
    %242 = vmatprep.mubr.f32.mxu0 0.0
    %243 = vmatmul.mubr.f32.gmra.mrb[0].mxu0 %v161
    %v244 = vpop.f32.mrb[0].mxu0
    %v245 = vadd.f32 %v148, %v244
    %v246 = vpop.f32.mrb[0].mxu0
    %247 = vdwg.mxu0
    %v248 = vld [vmem:[#allocation14] sm:$0xff]
    %v249 = vld [vmem:[#allocation14 + $0x8] sm:$0xff]
    %v250 = vld [vmem:[#allocation14 + $0x10] sm:$0xff]
    %v251 = vld [vmem:[#allocation14 + $0x18] sm:$0xff]
    %v252 = vld [vmem:[#allocation15] sm:$0x1]
    %v254 = vlaneseq
    %v255 = vshrl.u32 %v254, 7
    %v256 = vsub.s32 0, %v255
    %v257 = vrot.slane %v252, %v256
    %v260 = vsel %vm150, %v137, 0
    %v263 = vsel %vm150, %v138, 0
    %265 = vmatprep.subr.mxu0 0.0
    %266 = vmatpush1.msra.mxu0 %v248
    %267 = vmatprep.subr.mxu0 0.0
    %268 = vmatpush1.msra.mxu0 %v249
    %269 = vmatprep.subr.mxu0 0.0
    %270 = vmatpush1.msra.mxu0 %v250
    %271 = vmatprep.subr.mxu0 0.0
    %272 = vmatpush1.msra.mxu0 %v251
    %273 = vmatprep.subr.mxu0 0.0
    %274 = vmatpush1.msra.mxu0 0.0
    %275 = vmatprep.subr.mxu0 0.0
    %276 = vmatpush1.msra.mxu0 0.0
    %277 = vmatprep.subr.mxu0 0.0
    %278 = vmatpush1.msra.mxu0 0.0
    %279 = vmatprep.subr.mxu0 0.0
    %280 = vmatpush1.msra.mxu0 0.0
    %281 = vmatprep.subr.mxu0 0.0
    %282 = vmatpush1.msra.mxu0 0.0
    %283 = vmatprep.subr.mxu0 0.0
    %284 = vmatpush1.msra.mxu0 0.0
    %285 = vmatprep.subr.mxu0 0.0
    %286 = vmatpush1.msra.mxu0 0.0
    %287 = vmatprep.subr.mxu0 0.0
    %288 = vmatpush1.msra.mxu0 0.0
    %289 = vmatprep.subr.mxu0 0.0
    %290 = vmatpush1.msra.mxu0 0.0
    %291 = vmatprep.subr.mxu0 0.0
    %292 = vmatpush1.msra.mxu0 0.0
    %293 = vmatprep.subr.mxu0 0.0
    %294 = vmatpush1.msra.mxu0 0.0
    %295 = vmatprep.subr.mxu0 0.0
    %296 = vmatpush1.msra.mxu0 0.0
    %297 = vmatprep.subr.mxu0 0.0
    %298 = vmatpush1.msra.mxu0 0.0
    %299 = vmatprep.subr.mxu0 0.0
    %300 = vmatpush1.msra.mxu0 0.0
    %301 = vmatprep.subr.mxu0 0.0
    %302 = vmatpush1.msra.mxu0 0.0
    %303 = vmatprep.subr.mxu0 0.0
    %304 = vmatpush1.msra.mxu0 0.0
    %305 = vmatprep.subr.mxu0 0.0
    %306 = vmatpush1.msra.mxu0 0.0
    %307 = vmatprep.subr.mxu0 0.0
    %308 = vmatpush1.msra.mxu0 0.0
    %309 = vmatprep.subr.mxu0 0.0
    %310 = vmatpush1.msra.mxu0 0.0
    %311 = vmatprep.subr.mxu0 0.0
    %312 = vmatpush1.msra.mxu0 0.0
    %313 = vmatprep.subr.mxu0 0.0
    %314 = vmatpush1.msra.mxu0 0.0
    %315 = vmatprep.subr.mxu0 0.0
    %316 = vmatpush1.msra.mxu0 0.0
    %317 = vmatprep.subr.mxu0 0.0
    %318 = vmatpush1.msra.mxu0 0.0
    %319 = vmatprep.subr.mxu0 0.0
    %320 = vmatpush1.msra.mxu0 0.0
    %321 = vmatprep.subr.mxu0 0.0
    %322 = vmatpush1.msra.mxu0 0.0
    %323 = vmatprep.subr.mxu0 0.0
    %324 = vmatpush1.msra.mxu0 0.0
    %325 = vmatprep.subr.mxu0 0.0
    %326 = vmatpush1.msra.mxu0 0.0
    %327 = vmatprep.subr.mxu0 0.0
    %328 = vmatpush1.msra.mxu0 0.0
    %329 = vmatprep.mubr.f32.mxu0 0.0
    %330 = vmatmul.mubr.f32.gmra.mrb[0].mxu0 %v260
    %v331 = vpop.f32.mrb[0].mxu0
    %v332 = vadd.f32 %v257, %v331
    %v333 = vpop.f32.mrb[0].mxu0
    %334 = vmatprep.mubr.f32.mxu0 0.0
    %335 = vmatmul.mubr.f32.gmra.mrb[0].mxu0 %v263
    %v336 = vpop.f32.mrb[0].mxu0
    %v337 = vadd.f32 %v257, %v336
    %v338 = vpop.f32.mrb[0].mxu0
    %339 = vdwg.mxu0
    %340 = vst.msk [vmem:[#allocation2] sm:$0xff] %vm150, %v230
    %341 = vst.msk [vmem:[#allocation2 + $0x8] sm:$0xff] %vm150, %v235
    %342 = vst.msk [vmem:[#allocation2 + $0x10] sm:$0xff] %vm150, %v240
    %343 = vst.msk [vmem:[#allocation2 + $0x18] sm:$0xff] %vm150, %v245
    %344 = vst.msk [vmem:[#allocation3] sm:$0xff] %vm150, %v332
    %345 = vst.msk [vmem:[#allocation3 + $0x8] sm:$0xff] %vm150, %v337
    %348 = vrot.lane.b32.xlu0 %v332, 96
    %v349 = vpop.permute.xlu0 %348
    %350 = vrot.lane.b32.xlu0 %v337, 96
    %v351 = vpop.permute.xlu0 %350
    %354 = vst.msk [vmem:[#allocation4] sm:$0xff] %vm150, %v349
    %355 = vst.msk [vmem:[#allocation4 + $0x8] sm:$0xff] %vm150, %v351
    %v356 = vld [vmem:[#allocation2] sm:$0xff]
    %v357 = vld [vmem:[#allocation2 + $0x8] sm:$0xff]
    %v358 = vld [vmem:[#allocation2 + $0x10] sm:$0xff]
    %v359 = vld [vmem:[#allocation2 + $0x18] sm:$0xff]
    %v360 = vld [vmem:[#allocation3] sm:$0xff]
    %v361 = vld [vmem:[#allocation3 + $0x8] sm:$0xff]
    %v362 = vld [vmem:[#allocation4] sm:$0xff]
    %v363 = vld [vmem:[#allocation4 + $0x8] sm:$0xff]
    %vm364 = vcmask 64512
    %v366 = vsel %vm364, %v356, 0
    %v369 = vsel %vm364, %v357, 0
    %v372 = vsel %vm364, %v360, 0
    %374 = vmatprep.subr.mxu0 0.0
    %375 = vmatpush1.xpose.msra.mxu0 %v372
    %376 = vmatprep.subr.mxu0 0.0
    %377 = vmatpush1.xpose.msra.mxu0 0.0
    %378 = vmatprep.subr.mxu0 0.0
    %379 = vmatpush1.xpose.msra.mxu0 0.0
    %380 = vmatprep.subr.mxu0 0.0
    %381 = vmatpush1.xpose.msra.mxu0 0.0
    %382 = vmatprep.subr.mxu0 0.0
    %383 = vmatpush1.xpose.msra.mxu0 0.0
    %384 = vmatprep.subr.mxu0 0.0
    %385 = vmatpush1.xpose.msra.mxu0 0.0
    %386 = vmatprep.subr.mxu0 0.0
    %387 = vmatpush1.xpose.msra.mxu0 0.0
    %388 = vmatprep.subr.mxu0 0.0
    %389 = vmatpush1.xpose.msra.mxu0 0.0
    %390 = vmatprep.subr.mxu0 0.0
    %391 = vmatpush1.xpose.msra.mxu0 0.0
    %392 = vmatprep.subr.mxu0 0.0
    %393 = vmatpush1.xpose.msra.mxu0 0.0
    %394 = vmatprep.subr.mxu0 0.0
    %395 = vmatpush1.xpose.msra.mxu0 0.0
    %396 = vmatprep.subr.mxu0 0.0
    %397 = vmatpush1.xpose.msra.mxu0 0.0
    %398 = vmatprep.subr.mxu0 0.0
    %399 = vmatpush1.xpose.msra.mxu0 0.0
    %400 = vmatprep.subr.mxu0 0.0
    %401 = vmatpush1.xpose.msra.mxu0 0.0
    %402 = vmatprep.subr.mxu0 0.0
    %403 = vmatpush1.xpose.msra.mxu0 0.0
    %404 = vmatprep.subr.mxu0 0.0
    %405 = vmatpush1.xpose.msra.mxu0 0.0
    %406 = vmatprep.subr.mxu0 0.0
    %407 = vmatpush1.xpose.msra.mxu0 0.0
    %408 = vmatprep.subr.mxu0 0.0
    %409 = vmatpush1.xpose.msra.mxu0 0.0
    %410 = vmatprep.subr.mxu0 0.0
    %411 = vmatpush1.xpose.msra.mxu0 0.0
    %412 = vmatprep.subr.mxu0 0.0
    %413 = vmatpush1.xpose.msra.mxu0 0.0
    %414 = vmatprep.subr.mxu0 0.0
    %415 = vmatpush1.xpose.msra.mxu0 0.0
    %416 = vmatprep.subr.mxu0 0.0
    %417 = vmatpush1.xpose.msra.mxu0 0.0
    %418 = vmatprep.subr.mxu0 0.0
    %419 = vmatpush1.xpose.msra.mxu0 0.0
    %420 = vmatprep.subr.mxu0 0.0
    %421 = vmatpush1.xpose.msra.mxu0 0.0
    %422 = vmatprep.subr.mxu0 0.0
    %423 = vmatpush1.xpose.msra.mxu0 0.0
    %424 = vmatprep.subr.mxu0 0.0
    %425 = vmatpush1.xpose.msra.mxu0 0.0
    %426 = vmatprep.subr.mxu0 0.0
    %427 = vmatpush1.xpose.msra.mxu0 0.0
    %428 = vmatprep.subr.mxu0 0.0
    %429 = vmatpush1.xpose.msra.mxu0 0.0
    %430 = vmatprep.subr.mxu0 0.0
    %431 = vmatpush1.xpose.msra.mxu0 0.0
    %432 = vmatprep.subr.mxu0 0.0
    %433 = vmatpush1.xpose.msra.mxu0 0.0
    %434 = vmatprep.subr.mxu0 0.0
    %435 = vmatpush1.xpose.msra.mxu0 0.0
    %436 = vmatprep.subr.mxu0 0.0
    %437 = vmatpush1.xpose.msra.mxu0 0.0
    %438 = vmatprep.mubr.f32.mxu0 0.0
    %439 = vmatmul.mubr.f32.gmra.mrb[0].mxu0 %v366
    %v440 = vpop.f32.mrb[0].mxu0
    %v441 = vadd.f32 0.0, %v440
    %v442 = vpop.f32.mrb[0].mxu0
    %443 = vmatprep.mubr.f32.mxu0 0.0
    %444 = vmatmul.mubr.f32.gmra.mrb[0].mxu0 %v369
    %v445 = vpop.f32.mrb[0].mxu0
    %v446 = vadd.f32 0.0, %v445
    %v447 = vpop.f32.mrb[0].mxu0
    %448 = vdwg.mxu0
    %v450 = vsel %vm364, %v358, 0
    %v453 = vsel %vm364, %v359, 0
    %v456 = vsel %vm364, %v361, 0
    %458 = vmatprep.subr.mxu0 0.0
    %459 = vmatpush1.xpose.msra.mxu0 %v456
    %460 = vmatprep.subr.mxu0 0.0
    %461 = vmatpush1.xpose.msra.mxu0 0.0
    %462 = vmatprep.subr.mxu0 0.0
    %463 = vmatpush1.xpose.msra.mxu0 0.0
    %464 = vmatprep.subr.mxu0 0.0
    %465 = vmatpush1.xpose.msra.mxu0 0.0
    %466 = vmatprep.subr.mxu0 0.0
    %467 = vmatpush1.xpose.msra.mxu0 0.0
    %468 = vmatprep.subr.mxu0 0.0
    %469 = vmatpush1.xpose.msra.mxu0 0.0
    %470 = vmatprep.subr.mxu0 0.0
    %471 = vmatpush1.xpose.msra.mxu0 0.0
    %472 = vmatprep.subr.mxu0 0.0
    %473 = vmatpush1.xpose.msra.mxu0 0.0
    %474 = vmatprep.subr.mxu0 0.0
    %475 = vmatpush1.xpose.msra.mxu0 0.0
    %476 = vmatprep.subr.mxu0 0.0
    %477 = vmatpush1.xpose.msra.mxu0 0.0
    %478 = vmatprep.subr.mxu0 0.0
    %479 = vmatpush1.xpose.msra.mxu0 0.0
    %480 = vmatprep.subr.mxu0 0.0
    %481 = vmatpush1.xpose.msra.mxu0 0.0
    %482 = vmatprep.subr.mxu0 0.0
    %483 = vmatpush1.xpose.msra.mxu0 0.0
    %484 = vmatprep.subr.mxu0 0.0
    %485 = vmatpush1.xpose.msra.mxu0 0.0
    %486 = vmatprep.subr.mxu0 0.0
    %487 = vmatpush1.xpose.msra.mxu0 0.0
    %488 = vmatprep.subr.mxu0 0.0
    %489 = vmatpush1.xpose.msra.mxu0 0.0
    %490 = vmatprep.subr.mxu0 0.0
    %491 = vmatpush1.xpose.msra.mxu0 0.0
    %492 = vmatprep.subr.mxu0 0.0
    %493 = vmatpush1.xpose.msra.mxu0 0.0
    %494 = vmatprep.subr.mxu0 0.0
    %495 = vmatpush1.xpose.msra.mxu0 0.0
    %496 = vmatprep.subr.mxu0 0.0
    %497 = vmatpush1.xpose.msra.mxu0 0.0
    %498 = vmatprep.subr.mxu0 0.0
    %499 = vmatpush1.xpose.msra.mxu0 0.0
    %500 = vmatprep.subr.mxu0 0.0
    %501 = vmatpush1.xpose.msra.mxu0 0.0
    %502 = vmatprep.subr.mxu0 0.0
    %503 = vmatpush1.xpose.msra.mxu0 0.0
    %504 = vmatprep.subr.mxu0 0.0
    %505 = vmatpush1.xpose.msra.mxu0 0.0
    %506 = vmatprep.subr.mxu0 0.0
    %507 = vmatpush1.xpose.msra.mxu0 0.0
    %508 = vmatprep.subr.mxu0 0.0
    %509 = vmatpush1.xpose.msra.mxu0 0.0
    %510 = vmatprep.subr.mxu0 0.0
    %511 = vmatpush1.xpose.msra.mxu0 0.0
    %512 = vmatprep.subr.mxu0 0.0
    %513 = vmatpush1.xpose.msra.mxu0 0.0
    %514 = vmatprep.subr.mxu0 0.0
    %515 = vmatpush1.xpose.msra.mxu0 0.0
    %516 = vmatprep.subr.mxu0 0.0
    %517 = vmatpush1.xpose.msra.mxu0 0.0
    %518 = vmatprep.subr.mxu0 0.0
    %519 = vmatpush1.xpose.msra.mxu0 0.0
    %520 = vmatprep.subr.mxu0 0.0
    %521 = vmatpush1.xpose.msra.mxu0 0.0
    %522 = vmatprep.mubr.f32.mxu0 0.0
    %523 = vmatmul.mubr.f32.gmra.mrb[0].mxu0 %v450
    %v524 = vpop.f32.mrb[0].mxu0
    %v525 = vadd.f32 0.0, %v524
    %v526 = vpop.f32.mrb[0].mxu0
    %527 = vmatprep.mubr.f32.mxu0 0.0
    %528 = vmatmul.mubr.f32.gmra.mrb[0].mxu0 %v453
    %v529 = vpop.f32.mrb[0].mxu0
    %v530 = vadd.f32 0.0, %v529
    %v531 = vpop.f32.mrb[0].mxu0
    %532 = vdwg.mxu0
    %v533 = vsel %vm364, %v441, -inf
    %534 = vmax.xlane.f32.xlu0 %v533
    %v535 = vpop.xlane.xlu0 %534
    %v536 = vsel %vm364, %v446, -inf
    %537 = vmax.xlane.f32.xlu0 %v536
    %v538 = vpop.xlane.xlu0 %537
    %v539 = vsel %vm364, %v525, -inf
    %540 = vmax.xlane.f32.xlu0 %v539
    %v541 = vpop.xlane.xlu0 %540
    %v542 = vsel %vm364, %v530, -inf
    %543 = vmax.xlane.f32.xlu0 %v542
    %v544 = vpop.xlane.xlu0 %543
    %v545 = vsub.f32 -inf, %v535
    %v546 = vsub.f32 -inf, %v538
    %v547 = vsub.f32 -inf, %v541
    %v548 = vsub.f32 -inf, %v544
    %v549 = vmul.f32 %v545, 1.442695
    %v550 = vpow.pop %v549
    %v551 = vmul.f32 %v546, 1.442695
    %v552 = vpow.pop %v551
    %v553 = vmul.f32 %v547, 1.442695
    %v554 = vpow.pop %v553
    %v555 = vmul.f32 %v548, 1.442695
    %v556 = vpow.pop %v555
    %v557 = vsub.f32 %v441, %v535
    %v558 = vsub.f32 %v446, %v538
    %v559 = vsub.f32 %v525, %v541
    %v560 = vsub.f32 %v530, %v544
    %v561 = vmul.f32 %v557, 1.442695
    %v562 = vpow.pop %v561
    %v563 = vmul.f32 %v558, 1.442695
    %v564 = vpow.pop %v563
    %v565 = vmul.f32 %v559, 1.442695
    %v566 = vpow.pop %v565
    %v567 = vmul.f32 %v560, 1.442695
    %v568 = vpow.pop %v567
    %v569 = vsel %vm364, %v562, 0.0
    %570 = vadd.xlane.f32.xlu0 %v569
    %v571 = vpop.xlane.xlu0 %570
    %v572 = vsel %vm364, %v564, 0.0
    %573 = vadd.xlane.f32.xlu0 %v572
    %v574 = vpop.xlane.xlu0 %573
    %v575 = vsel %vm364, %v566, 0.0
    %576 = vadd.xlane.f32.xlu0 %v575
    %v577 = vpop.xlane.xlu0 %576
    %v578 = vsel %vm364, %v568, 0.0
    %579 = vadd.xlane.f32.xlu0 %v578
    %v580 = vpop.xlane.xlu0 %579
    %v581 = vmul.f32 %v550, 0.0
    %v582 = vmul.f32 %v552, 0.0
    %v583 = vmul.f32 %v554, 0.0
    %v584 = vmul.f32 %v556, 0.0
    %v585 = vadd.f32 %v581, %v571
    %v586 = vadd.f32 %v582, %v574
    %v587 = vadd.f32 %v583, %v577
    %v588 = vadd.f32 %v584, %v580
    %v590 = vsel %vm364, %v562, 0
    %v593 = vsel %vm364, %v564, 0
    %595 = vmatprep.subr.mxu0 0.0
    %596 = vmatpush1.msra.mxu0 %v362
    %597 = vmatprep.subr.mxu0 0.0
    %598 = vmatpush1.msra.mxu0 0.0
    %599 = vmatprep.subr.mxu0 0.0
    %600 = vmatpush1.msra.mxu0 0.0
    %601 = vmatprep.subr.mxu0 0.0
    %602 = vmatpush1.msra.mxu0 0.0
    %603 = vmatprep.subr.mxu0 0.0
    %604 = vmatpush1.msra.mxu0 0.0
    %605 = vmatprep.subr.mxu0 0.0
    %606 = vmatpush1.msra.mxu0 0.0
    %607 = vmatprep.subr.mxu0 0.0
    %608 = vmatpush1.msra.mxu0 0.0
    %609 = vmatprep.subr.mxu0 0.0
    %610 = vmatpush1.msra.mxu0 0.0
    %611 = vmatprep.subr.mxu0 0.0
    %612 = vmatpush1.msra.mxu0 0.0
    %613 = vmatprep.subr.mxu0 0.0
    %614 = vmatpush1.msra.mxu0 0.0
    %615 = vmatprep.subr.mxu0 0.0
    %616 = vmatpush1.msra.mxu0 0.0
    %617 = vmatprep.subr.mxu0 0.0
    %618 = vmatpush1.msra.mxu0 0.0
    %619 = vmatprep.subr.mxu0 0.0
    %620 = vmatpush1.msra.mxu0 0.0
    %621 = vmatprep.subr.mxu0 0.0
    %622 = vmatpush1.msra.mxu0 0.0
    %623 = vmatprep.subr.mxu0 0.0
    %624 = vmatpush1.msra.mxu0 0.0
    %625 = vmatprep.subr.mxu0 0.0
    %626 = vmatpush1.msra.mxu0 0.0
    %627 = vmatprep.subr.mxu0 0.0
    %628 = vmatpush1.msra.mxu0 0.0
    %629 = vmatprep.subr.mxu0 0.0
    %630 = vmatpush1.msra.mxu0 0.0
    %631 = vmatprep.subr.mxu0 0.0
    %632 = vmatpush1.msra.mxu0 0.0
    %633 = vmatprep.subr.mxu0 0.0
    %634 = vmatpush1.msra.mxu0 0.0
    %635 = vmatprep.subr.mxu0 0.0
    %636 = vmatpush1.msra.mxu0 0.0
    %637 = vmatprep.subr.mxu0 0.0
    %638 = vmatpush1.msra.mxu0 0.0
    %639 = vmatprep.subr.mxu0 0.0
    %640 = vmatpush1.msra.mxu0 0.0
    %641 = vmatprep.subr.mxu0 0.0
    %642 = vmatpush1.msra.mxu0 0.0
    %643 = vmatprep.subr.mxu0 0.0
    %644 = vmatpush1.msra.mxu0 0.0
    %645 = vmatprep.subr.mxu0 0.0
    %646 = vmatpush1.msra.mxu0 0.0
    %647 = vmatprep.subr.mxu0 0.0
    %648 = vmatpush1.msra.mxu0 0.0
    %649 = vmatprep.subr.mxu0 0.0
    %650 = vmatpush1.msra.mxu0 0.0
    %651 = vmatprep.subr.mxu0 0.0
    %652 = vmatpush1.msra.mxu0 0.0
    %653 = vmatprep.subr.mxu0 0.0
    %654 = vmatpush1.msra.mxu0 0.0
    %655 = vmatprep.subr.mxu0 0.0
    %656 = vmatpush1.msra.mxu0 0.0
    %657 = vmatprep.subr.mxu0 0.0
    %658 = vmatpush1.msra.mxu0 0.0
    %659 = vmatprep.mubr.f32.mxu0 0.0
    %660 = vmatmul.mubr.f32.gmra.mrb[0].mxu0 %v590
    %v661 = vpop.f32.mrb[0].mxu0
    %v662 = vadd.f32 0.0, %v661
    %v663 = vpop.f32.mrb[0].mxu0
    %664 = vmatprep.mubr.f32.mxu0 0.0
    %665 = vmatmul.mubr.f32.gmra.mrb[0].mxu0 %v593
    %v666 = vpop.f32.mrb[0].mxu0
    %v667 = vadd.f32 0.0, %v666
    %v668 = vpop.f32.mrb[0].mxu0
    %669 = vdwg.mxu0
    %v671 = vsel %vm364, %v566, 0
    %v674 = vsel %vm364, %v568, 0
    %676 = vmatprep.subr.mxu0 0.0
    %677 = vmatpush1.msra.mxu0 %v363
    %678 = vmatprep.subr.mxu0 0.0
    %679 = vmatpush1.msra.mxu0 0.0
    %680 = vmatprep.subr.mxu0 0.0
    %681 = vmatpush1.msra.mxu0 0.0
    %682 = vmatprep.subr.mxu0 0.0
    %683 = vmatpush1.msra.mxu0 0.0
    %684 = vmatprep.subr.mxu0 0.0
    %685 = vmatpush1.msra.mxu0 0.0
    %686 = vmatprep.subr.mxu0 0.0
    %687 = vmatpush1.msra.mxu0 0.0
    %688 = vmatprep.subr.mxu0 0.0
    %689 = vmatpush1.msra.mxu0 0.0
    %690 = vmatprep.subr.mxu0 0.0
    %691 = vmatpush1.msra.mxu0 0.0
    %692 = vmatprep.subr.mxu0 0.0
    %693 = vmatpush1.msra.mxu0 0.0
    %694 = vmatprep.subr.mxu0 0.0
    %695 = vmatpush1.msra.mxu0 0.0
    %696 = vmatprep.subr.mxu0 0.0
    %697 = vmatpush1.msra.mxu0 0.0
    %698 = vmatprep.subr.mxu0 0.0
    %699 = vmatpush1.msra.mxu0 0.0
    %700 = vmatprep.subr.mxu0 0.0
    %701 = vmatpush1.msra.mxu0 0.0
    %702 = vmatprep.subr.mxu0 0.0
    %703 = vmatpush1.msra.mxu0 0.0
    %704 = vmatprep.subr.mxu0 0.0
    %705 = vmatpush1.msra.mxu0 0.0
    %706 = vmatprep.subr.mxu0 0.0
    %707 = vmatpush1.msra.mxu0 0.0
    %708 = vmatprep.subr.mxu0 0.0
    %709 = vmatpush1.msra.mxu0 0.0
    %710 = vmatprep.subr.mxu0 0.0
    %711 = vmatpush1.msra.mxu0 0.0
    %712 = vmatprep.subr.mxu0 0.0
    %713 = vmatpush1.msra.mxu0 0.0
    %714 = vmatprep.subr.mxu0 0.0
    %715 = vmatpush1.msra.mxu0 0.0
    %716 = vmatprep.subr.mxu0 0.0
    %717 = vmatpush1.msra.mxu0 0.0
    %718 = vmatprep.subr.mxu0 0.0
    %719 = vmatpush1.msra.mxu0 0.0
    %720 = vmatprep.subr.mxu0 0.0
    %721 = vmatpush1.msra.mxu0 0.0
    %722 = vmatprep.subr.mxu0 0.0
    %723 = vmatpush1.msra.mxu0 0.0
    %724 = vmatprep.subr.mxu0 0.0
    %725 = vmatpush1.msra.mxu0 0.0
    %726 = vmatprep.subr.mxu0 0.0
    %727 = vmatpush1.msra.mxu0 0.0
    %728 = vmatprep.subr.mxu0 0.0
    %729 = vmatpush1.msra.mxu0 0.0
    %730 = vmatprep.subr.mxu0 0.0
    %731 = vmatpush1.msra.mxu0 0.0
    %732 = vmatprep.subr.mxu0 0.0
    %733 = vmatpush1.msra.mxu0 0.0
    %734 = vmatprep.subr.mxu0 0.0
    %735 = vmatpush1.msra.mxu0 0.0
    %736 = vmatprep.subr.mxu0 0.0
    %737 = vmatpush1.msra.mxu0 0.0
    %738 = vmatprep.subr.mxu0 0.0
    %739 = vmatpush1.msra.mxu0 0.0
    %740 = vmatprep.mubr.f32.mxu0 0.0
    %741 = vmatmul.mubr.f32.gmra.mrb[0].mxu0 %v671
    %v742 = vpop.f32.mrb[0].mxu0
    %v743 = vadd.f32 0.0, %v742
    %v744 = vpop.f32.mrb[0].mxu0
    %745 = vmatprep.mubr.f32.mxu0 0.0
    %746 = vmatmul.mubr.f32.gmra.mrb[0].mxu0 %v674
    %v747 = vpop.f32.mrb[0].mxu0
    %v748 = vadd.f32 0.0, %v747
    %v749 = vpop.f32.mrb[0].mxu0
    %750 = vdwg.mxu0
    %v751 = vadd.f32 %v581, %v662
    %v752 = vadd.f32 %v582, %v667
    %v753 = vadd.f32 %v583, %v743
    %v754 = vadd.f32 %v584, %v748
    %v755 = vrcp.pop %v585
    %v756 = vrcp.pop %v586
    %v757 = vrcp.pop %v587
    %v758 = vrcp.pop %v588
    %v759 = vmul.f32 %v751, %v755
    %v760 = vmul.f32 %v752, %v756
    %v761 = vmul.f32 %v753, %v757
    %v762 = vmul.f32 %v754, %v758
    %763 = vst.msk [vmem:[#allocation5] sm:$0xff] %vm364, %v759
    %764 = vst.msk [vmem:[#allocation5 + $0x8] sm:$0xff] %vm364, %v760
    %765 = vst.msk [vmem:[#allocation5 + $0x10] sm:$0xff] %vm364, %v761
    %766 = vst.msk [vmem:[#allocation5 + $0x18] sm:$0xff] %vm364, %v762
    %v767 = vld [vmem:[#allocation2] sm:$0xff]
    %v768 = vld [vmem:[#allocation2 + $0x8] sm:$0xff]
    %v769 = vld [vmem:[#allocation2 + $0x10] sm:$0xff]
    %v770 = vld [vmem:[#allocation2 + $0x18] sm:$0xff]
    %v771 = vld [vmem:[#allocation3] sm:$0xff]
    %v772 = vld [vmem:[#allocation3 + $0x8] sm:$0xff]
    %v773 = vld [vmem:[#allocation4] sm:$0xff]
    %v774 = vld [vmem:[#allocation4 + $0x8] sm:$0xff]
    %777 = vrot.lane.b32.xlu0 %v767, 120
    %v778 = vpop.permute.xlu0 %777
    %779 = vrot.lane.b32.xlu0 %v768, 120
    %v780 = vpop.permute.xlu0 %779
    %782 = vrot.lane.b32.xlu0 %v771, 120
    %v783 = vpop.permute.xlu0 %782
    %v784 = vsel %vm364, %v778, 0
    %v786 = vsel %vm364, %v780, 0
    %v788 = vsel %vm364, %v783, 0
    %790 = vmatprep.subr.mxu0 0.0
    %791 = vmatpush1.xpose.msra.mxu0 %v788
    %792 = vmatprep.subr.mxu0 0.0
    %793 = vmatpush1.xpose.msra.mxu0 0.0
    %794 = vmatprep.subr.mxu0 0.0
    %795 = vmatpush1.xpose.msra.mxu0 0.0
    %796 = vmatprep.subr.mxu0 0.0
    %797 = vmatpush1.xpose.msra.mxu0 0.0
    %798 = vmatprep.subr.mxu0 0.0
    %799 = vmatpush1.xpose.msra.mxu0 0.0
    %800 = vmatprep.subr.mxu0 0.0
    %801 = vmatpush1.xpose.msra.mxu0 0.0
    %802 = vmatprep.subr.mxu0 0.0
    %803 = vmatpush1.xpose.msra.mxu0 0.0
    %804 = vmatprep.subr.mxu0 0.0
    %805 = vmatpush1.xpose.msra.mxu0 0.0
    %806 = vmatprep.subr.mxu0 0.0
    %807 = vmatpush1.xpose.msra.mxu0 0.0
    %808 = vmatprep.subr.mxu0 0.0
    %809 = vmatpush1.xpose.msra.mxu0 0.0
    %810 = vmatprep.subr.mxu0 0.0
    %811 = vmatpush1.xpose.msra.mxu0 0.0
    %812 = vmatprep.subr.mxu0 0.0
    %813 = vmatpush1.xpose.msra.mxu0 0.0
    %814 = vmatprep.subr.mxu0 0.0
    %815 = vmatpush1.xpose.msra.mxu0 0.0
    %816 = vmatprep.subr.mxu0 0.0
    %817 = vmatpush1.xpose.msra.mxu0 0.0
    %818 = vmatprep.subr.mxu0 0.0
    %819 = vmatpush1.xpose.msra.mxu0 0.0
    %820 = vmatprep.subr.mxu0 0.0
    %821 = vmatpush1.xpose.msra.mxu0 0.0
    %822 = vmatprep.subr.mxu0 0.0
    %823 = vmatpush1.xpose.msra.mxu0 0.0
    %824 = vmatprep.subr.mxu0 0.0
    %825 = vmatpush1.xpose.msra.mxu0 0.0
    %826 = vmatprep.subr.mxu0 0.0
    %827 = vmatpush1.xpose.msra.mxu0 0.0
    %828 = vmatprep.subr.mxu0 0.0
    %829 = vmatpush1.xpose.msra.mxu0 0.0
    %830 = vmatprep.subr.mxu0 0.0
    %831 = vmatpush1.xpose.msra.mxu0 0.0
    %832 = vmatprep.subr.mxu0 0.0
    %833 = vmatpush1.xpose.msra.mxu0 0.0
    %834 = vmatprep.subr.mxu0 0.0
    %835 = vmatpush1.xpose.msra.mxu0 0.0
    %836 = vmatprep.subr.mxu0 0.0
    %837 = vmatpush1.xpose.msra.mxu0 0.0
    %838 = vmatprep.subr.mxu0 0.0
    %839 = vmatpush1.xpose.msra.mxu0 0.0
    %840 = vmatprep.subr.mxu0 0.0
    %841 = vmatpush1.xpose.msra.mxu0 0.0
    %842 = vmatprep.subr.mxu0 0.0
    %843 = vmatpush1.xpose.msra.mxu0 0.0
    %844 = vmatprep.subr.mxu0 0.0
    %845 = vmatpush1.xpose.msra.mxu0 0.0
    %846 = vmatprep.subr.mxu0 0.0
    %847 = vmatpush1.xpose.msra.mxu0 0.0
    %848 = vmatprep.subr.mxu0 0.0
    %849 = vmatpush1.xpose.msra.mxu0 0.0
    %850 = vmatprep.subr.mxu0 0.0
    %851 = vmatpush1.xpose.msra.mxu0 0.0
    %852 = vmatprep.subr.mxu0 0.0
    %853 = vmatpush1.xpose.msra.mxu0 0.0
    %854 = vmatprep.mubr.f32.mxu0 0.0
    %855 = vmatmul.mubr.f32.gmra.mrb[0].mxu0 %v784
    %v856 = vpop.f32.mrb[0].mxu0
    %v857 = vadd.f32 0.0, %v856
    %v858 = vpop.f32.mrb[0].mxu0
    %859 = vmatprep.mubr.f32.mxu0 0.0
    %860 = vmatmul.mubr.f32.gmra.mrb[0].mxu0 %v786
    %v861 = vpop.f32.mrb[0].mxu0
    %v862 = vadd.f32 0.0, %v861
    %v863 = vpop.f32.mrb[0].mxu0
    %864 = vdwg.mxu0
    %867 = vrot.lane.b32.xlu0 %v769, 120
    %v868 = vpop.permute.xlu0 %867
    %869 = vrot.lane.b32.xlu0 %v770, 120
    %v870 = vpop.permute.xlu0 %869
    %872 = vrot.lane.b32.xlu0 %v772, 120
    %v873 = vpop.permute.xlu0 %872
    %v874 = vsel %vm364, %v868, 0
    %v876 = vsel %vm364, %v870, 0
    %v878 = vsel %vm364, %v873, 0
    %880 = vmatprep.subr.mxu0 0.0
    %881 = vmatpush1.xpose.msra.mxu0 %v878
    %882 = vmatprep.subr.mxu0 0.0
    %883 = vmatpush1.xpose.msra.mxu0 0.0
    %884 = vmatprep.subr.mxu0 0.0
    %885 = vmatpush1.xpose.msra.mxu0 0.0
    %886 = vmatprep.subr.mxu0 0.0
    %887 = vmatpush1.xpose.msra.mxu0 0.0
    %888 = vmatprep.subr.mxu0 0.0
    %889 = vmatpush1.xpose.msra.mxu0 0.0
    %890 = vmatprep.subr.mxu0 0.0
    %891 = vmatpush1.xpose.msra.mxu0 0.0
    %892 = vmatprep.subr.mxu0 0.0
    %893 = vmatpush1.xpose.msra.mxu0 0.0
    %894 = vmatprep.subr.mxu0 0.0
    %895 = vmatpush1.xpose.msra.mxu0 0.0
    %896 = vmatprep.subr.mxu0 0.0
    %897 = vmatpush1.xpose.msra.mxu0 0.0
    %898 = vmatprep.subr.mxu0 0.0
    %899 = vmatpush1.xpose.msra.mxu0 0.0
    %900 = vmatprep.subr.mxu0 0.0
    %901 = vmatpush1.xpose.msra.mxu0 0.0
    %902 = vmatprep.subr.mxu0 0.0
    %903 = vmatpush1.xpose.msra.mxu0 0.0
    %904 = vmatprep.subr.mxu0 0.0
    %905 = vmatpush1.xpose.msra.mxu0 0.0
    %906 = vmatprep.subr.mxu0 0.0
    %907 = vmatpush1.xpose.msra.mxu0 0.0
    %908 = vmatprep.subr.mxu0 0.0
    %909 = vmatpush1.xpose.msra.mxu0 0.0
    %910 = vmatprep.subr.mxu0 0.0
    %911 = vmatpush1.xpose.msra.mxu0 0.0
    %912 = vmatprep.subr.mxu0 0.0
    %913 = vmatpush1.xpose.msra.mxu0 0.0
    %914 = vmatprep.subr.mxu0 0.0
    %915 = vmatpush1.xpose.msra.mxu0 0.0
    %916 = vmatprep.subr.mxu0 0.0
    %917 = vmatpush1.xpose.msra.mxu0 0.0
    %918 = vmatprep.subr.mxu0 0.0
    %919 = vmatpush1.xpose.msra.mxu0 0.0
    %920 = vmatprep.subr.mxu0 0.0
    %921 = vmatpush1.xpose.msra.mxu0 0.0
    %922 = vmatprep.subr.mxu0 0.0
    %923 = vmatpush1.xpose.msra.mxu0 0.0
    %924 = vmatprep.subr.mxu0 0.0
    %925 = vmatpush1.xpose.msra.mxu0 0.0
    %926 = vmatprep.subr.mxu0 0.0
    %927 = vmatpush1.xpose.msra.mxu0 0.0
    %928 = vmatprep.subr.mxu0 0.0
    %929 = vmatpush1.xpose.msra.mxu0 0.0
    %930 = vmatprep.subr.mxu0 0.0
    %931 = vmatpush1.xpose.msra.mxu0 0.0
    %932 = vmatprep.subr.mxu0 0.0
    %933 = vmatpush1.xpose.msra.mxu0 0.0
    %934 = vmatprep.subr.mxu0 0.0
    %935 = vmatpush1.xpose.msra.mxu0 0.0
    %936 = vmatprep.subr.mxu0 0.0
    %937 = vmatpush1.xpose.msra.mxu0 0.0
    %938 = vmatprep.subr.mxu0 0.0
    %939 = vmatpush1.xpose.msra.mxu0 0.0
    %940 = vmatprep.subr.mxu0 0.0
    %941 = vmatpush1.xpose.msra.mxu0 0.0
    %942 = vmatprep.subr.mxu0 0.0
    %943 = vmatpush1.xpose.msra.mxu0 0.0
    %944 = vmatprep.mubr.f32.mxu0 0.0
    %945 = vmatmul.mubr.f32.gmra.mrb[0].mxu0 %v874
    %v946 = vpop.f32.mrb[0].mxu0
    %v947 = vadd.f32 0.0, %v946
    %v948 = vpop.f32.mrb[0].mxu0
    %949 = vmatprep.mubr.f32.mxu0 0.0
    %950 = vmatmul.mubr.f32.gmra.mrb[0].mxu0 %v876
    %v951 = vpop.f32.mrb[0].mxu0
    %v952 = vadd.f32 0.0, %v951
    %v953 = vpop.f32.mrb[0].mxu0
    %954 = vdwg.mxu0
    %v955 = vsel %vm364, %v857, -inf
    %956 = vmax.xlane.f32.xlu0 %v955
    %v957 = vpop.xlane.xlu0 %956
    %v958 = vsel %vm364, %v862, -inf
    %959 = vmax.xlane.f32.xlu0 %v958
    %v960 = vpop.xlane.xlu0 %959
    %v961 = vsel %vm364, %v947, -inf
    %962 = vmax.xlane.f32.xlu0 %v961
    %v963 = vpop.xlane.xlu0 %962
    %v964 = vsel %vm364, %v952, -inf
    %965 = vmax.xlane.f32.xlu0 %v964
    %v966 = vpop.xlane.xlu0 %965
    %v967 = vsub.f32 -inf, %v957
    %v968 = vsub.f32 -inf, %v960
    %v969 = vsub.f32 -inf, %v963
    %v970 = vsub.f32 -inf, %v966
    %v971 = vmul.f32 %v967, 1.442695
    %v972 = vpow.pop %v971
    %v973 = vmul.f32 %v968, 1.442695
    %v974 = vpow.pop %v973
    %v975 = vmul.f32 %v969, 1.442695
    %v976 = vpow.pop %v975
    %v977 = vmul.f32 %v970, 1.442695
    %v978 = vpow.pop %v977
    %v979 = vsub.f32 %v857, %v957
    %v980 = vsub.f32 %v862, %v960
    %v981 = vsub.f32 %v947, %v963
    %v982 = vsub.f32 %v952, %v966
    %v983 = vmul.f32 %v979, 1.442695
    %v984 = vpow.pop %v983
    %v985 = vmul.f32 %v980, 1.442695
    %v986 = vpow.pop %v985
    %v987 = vmul.f32 %v981, 1.442695
    %v988 = vpow.pop %v987
    %v989 = vmul.f32 %v982, 1.442695
    %v990 = vpow.pop %v989
    %v991 = vsel %vm364, %v984, 0.0
    %992 = vadd.xlane.f32.xlu0 %v991
    %v993 = vpop.xlane.xlu0 %992
    %v994 = vsel %vm364, %v986, 0.0
    %995 = vadd.xlane.f32.xlu0 %v994
    %v996 = vpop.xlane.xlu0 %995
    %v997 = vsel %vm364, %v988, 0.0
    %998 = vadd.xlane.f32.xlu0 %v997
    %v999 = vpop.xlane.xlu0 %998
    %v1000 = vsel %vm364, %v990, 0.0
    %1001 = vadd.xlane.f32.xlu0 %v1000
    %v1002 = vpop.xlane.xlu0 %1001
    %v1003 = vmul.f32 %v972, 0.0
    %v1004 = vmul.f32 %v974, 0.0
    %v1005 = vmul.f32 %v976, 0.0
    %v1006 = vmul.f32 %v978, 0.0
    %v1007 = vadd.f32 %v1003, %v993
    %v1008 = vadd.f32 %v1004, %v996
    %v1009 = vadd.f32 %v1005, %v999
    %v1010 = vadd.f32 %v1006, %v1002
    %1012 = vrot.lane.b32.xlu0 %v773, 120
    %v1013 = vpop.permute.xlu0 %1012
    %v1016 = vsel %vm364, %v984, 0
    %v1019 = vsel %vm364, %v986, 0
    %1021 = vmatprep.subr.mxu0 0.0
    %1022 = vmatpush1.msra.mxu0 %v1013
    %1023 = vmatprep.subr.mxu0 0.0
    %1024 = vmatpush1.msra.mxu0 0.0
    %1025 = vmatprep.subr.mxu0 0.0
    %1026 = vmatpush1.msra.mxu0 0.0
    %1027 = vmatprep.subr.mxu0 0.0
    %1028 = vmatpush1.msra.mxu0 0.0
    %1029 = vmatprep.subr.mxu0 0.0
    %1030 = vmatpush1.msra.mxu0 0.0
    %1031 = vmatprep.subr.mxu0 0.0
    %1032 = vmatpush1.msra.mxu0 0.0
    %1033 = vmatprep.subr.mxu0 0.0
    %1034 = vmatpush1.msra.mxu0 0.0
    %1035 = vmatprep.subr.mxu0 0.0
    %1036 = vmatpush1.msra.mxu0 0.0
    %1037 = vmatprep.subr.mxu0 0.0
    %1038 = vmatpush1.msra.mxu0 0.0
    %1039 = vmatprep.subr.mxu0 0.0
    %1040 = vmatpush1.msra.mxu0 0.0
    %1041 = vmatprep.subr.mxu0 0.0
    %1042 = vmatpush1.msra.mxu0 0.0
    %1043 = vmatprep.subr.mxu0 0.0
    %1044 = vmatpush1.msra.mxu0 0.0
    %1045 = vmatprep.subr.mxu0 0.0
    %1046 = vmatpush1.msra.mxu0 0.0
    %1047 = vmatprep.subr.mxu0 0.0
    %1048 = vmatpush1.msra.mxu0 0.0
    %1049 = vmatprep.subr.mxu0 0.0
    %1050 = vmatpush1.msra.mxu0 0.0
    %1051 = vmatprep.subr.mxu0 0.0
    %1052 = vmatpush1.msra.mxu0 0.0
    %1053 = vmatprep.subr.mxu0 0.0
    %1054 = vmatpush1.msra.mxu0 0.0
    %1055 = vmatprep.subr.mxu0 0.0
    %1056 = vmatpush1.msra.mxu0 0.0
    %1057 = vmatprep.subr.mxu0 0.0
    %1058 = vmatpush1.msra.mxu0 0.0
    %1059 = vmatprep.subr.mxu0 0.0
    %1060 = vmatpush1.msra.mxu0 0.0
    %1061 = vmatprep.subr.mxu0 0.0
    %1062 = vmatpush1.msra.mxu0 0.0
    %1063 = vmatprep.subr.mxu0 0.0
    %1064 = vmatpush1.msra.mxu0 0.0
    %1065 = vmatprep.subr.mxu0 0.0
    %1066 = vmatpush1.msra.mxu0 0.0
    %1067 = vmatprep.subr.mxu0 0.0
    %1068 = vmatpush1.msra.mxu0 0.0
    %1069 = vmatprep.subr.mxu0 0.0
    %1070 = vmatpush1.msra.mxu0 0.0
    %1071 = vmatprep.subr.mxu0 0.0
    %1072 = vmatpush1.msra.mxu0 0.0
    %1073 = vmatprep.subr.mxu0 0.0
    %1074 = vmatpush1.msra.mxu0 0.0
    %1075 = vmatprep.subr.mxu0 0.0
    %1076 = vmatpush1.msra.mxu0 0.0
    %1077 = vmatprep.subr.mxu0 0.0
    %1078 = vmatpush1.msra.mxu0 0.0
    %1079 = vmatprep.subr.mxu0 0.0
    %1080 = vmatpush1.msra.mxu0 0.0
    %1081 = vmatprep.subr.mxu0 0.0
    %1082 = vmatpush1.msra.mxu0 0.0
    %1083 = vmatprep.subr.mxu0 0.0
    %1084 = vmatpush1.msra.mxu0 0.0
    %1085 = vmatprep.mubr.f32.mxu0 0.0
    %1086 = vmatmul.mubr.f32.gmra.mrb[0].mxu0 %v1016
    %v1087 = vpop.f32.mrb[0].mxu0
    %v1088 = vadd.f32 0.0, %v1087
    %v1089 = vpop.f32.mrb[0].mxu0
    %1090 = vmatprep.mubr.f32.mxu0 0.0
    %1091 = vmatmul.mubr.f32.gmra.mrb[0].mxu0 %v1019
    %v1092 = vpop.f32.mrb[0].mxu0
    %v1093 = vadd.f32 0.0, %v1092
    %v1094 = vpop.f32.mrb[0].mxu0
    %1095 = vdwg.mxu0
    %1097 = vrot.lane.b32.xlu0 %v774, 120
    %v1098 = vpop.permute.xlu0 %1097
    %v1101 = vsel %vm364, %v988, 0
    %v1104 = vsel %vm364, %v990, 0
    %1106 = vmatprep.subr.mxu0 0.0
    %1107 = vmatpush1.msra.mxu0 %v1098
    %1108 = vmatprep.subr.mxu0 0.0
    %1109 = vmatpush1.msra.mxu0 0.0
    %1110 = vmatprep.subr.mxu0 0.0
    %1111 = vmatpush1.msra.mxu0 0.0
    %1112 = vmatprep.subr.mxu0 0.0
    %1113 = vmatpush1.msra.mxu0 0.0
    %1114 = vmatprep.subr.mxu0 0.0
    %1115 = vmatpush1.msra.mxu0 0.0
    %1116 = vmatprep.subr.mxu0 0.0
    %1117 = vmatpush1.msra.mxu0 0.0
    %1118 = vmatprep.subr.mxu0 0.0
    %1119 = vmatpush1.msra.mxu0 0.0
    %1120 = vmatprep.subr.mxu0 0.0
    %1121 = vmatpush1.msra.mxu0 0.0
    %1122 = vmatprep.subr.mxu0 0.0
    %1123 = vmatpush1.msra.mxu0 0.0
    %1124 = vmatprep.subr.mxu0 0.0
    %1125 = vmatpush1.msra.mxu0 0.0
    %1126 = vmatprep.subr.mxu0 0.0
    %1127 = vmatpush1.msra.mxu0 0.0
    %1128 = vmatprep.subr.mxu0 0.0
    %1129 = vmatpush1.msra.mxu0 0.0
    %1130 = vmatprep.subr.mxu0 0.0
    %1131 = vmatpush1.msra.mxu0 0.0
    %1132 = vmatprep.subr.mxu0 0.0
    %1133 = vmatpush1.msra.mxu0 0.0
    %1134 = vmatprep.subr.mxu0 0.0
    %1135 = vmatpush1.msra.mxu0 0.0
    %1136 = vmatprep.subr.mxu0 0.0
    %1137 = vmatpush1.msra.mxu0 0.0
    %1138 = vmatprep.subr.mxu0 0.0
    %1139 = vmatpush1.msra.mxu0 0.0
    %1140 = vmatprep.subr.mxu0 0.0
    %1141 = vmatpush1.msra.mxu0 0.0
    %1142 = vmatprep.subr.mxu0 0.0
    %1143 = vmatpush1.msra.mxu0 0.0
    %1144 = vmatprep.subr.mxu0 0.0
    %1145 = vmatpush1.msra.mxu0 0.0
    %1146 = vmatprep.subr.mxu0 0.0
    %1147 = vmatpush1.msra.mxu0 0.0
    %1148 = vmatprep.subr.mxu0 0.0
    %1149 = vmatpush1.msra.mxu0 0.0
    %1150 = vmatprep.subr.mxu0 0.0
    %1151 = vmatpush1.msra.mxu0 0.0
    %1152 = vmatprep.subr.mxu0 0.0
    %1153 = vmatpush1.msra.mxu0 0.0
    %1154 = vmatprep.subr.mxu0 0.0
    %1155 = vmatpush1.msra.mxu0 0.0
    %1156 = vmatprep.subr.mxu0 0.0
    %1157 = vmatpush1.msra.mxu0 0.0
    %1158 = vmatprep.subr.mxu0 0.0
    %1159 = vmatpush1.msra.mxu0 0.0
    %1160 = vmatprep.subr.mxu0 0.0
    %1161 = vmatpush1.msra.mxu0 0.0
    %1162 = vmatprep.subr.mxu0 0.0
    %1163 = vmatpush1.msra.mxu0 0.0
    %1164 = vmatprep.subr.mxu0 0.0
    %1165 = vmatpush1.msra.mxu0 0.0
    %1166 = vmatprep.subr.mxu0 0.0
    %1167 = vmatpush1.msra.mxu0 0.0
    %1168 = vmatprep.subr.mxu0 0.0
    %1169 = vmatpush1.msra.mxu0 0.0
    %1170 = vmatprep.mubr.f32.mxu0 0.0
    %1171 = vmatmul.mubr.f32.gmra.mrb[0].mxu0 %v1101
    %v1172 = vpop.f32.mrb[0].mxu0
    %v1173 = vadd.f32 0.0, %v1172
    %v1174 = vpop.f32.mrb[0].mxu0
    %1175 = vmatprep.mubr.f32.mxu0 0.0
    %1176 = vmatmul.mubr.f32.gmra.mrb[0].mxu0 %v1104
    %v1177 = vpop.f32.mrb[0].mxu0
    %v1178 = vadd.f32 0.0, %v1177
    %v1179 = vpop.f32.mrb[0].mxu0
    %1180 = vdwg.mxu0
    %v1181 = vadd.f32 %v1003, %v1088
    %v1182 = vadd.f32 %v1004, %v1093
    %v1183 = vadd.f32 %v1005, %v1173
    %v1184 = vadd.f32 %v1006, %v1178
    %v1185 = vrcp.pop %v1007
    %v1186 = vrcp.pop %v1008
    %v1187 = vrcp.pop %v1009
    %v1188 = vrcp.pop %v1010
    %v1189 = vmul.f32 %v1181, %v1185
    %v1190 = vmul.f32 %v1182, %v1186
    %v1191 = vmul.f32 %v1183, %v1187
    %v1192 = vmul.f32 %v1184, %v1188
    %1197 = vrot.lane.b32.xlu0 %v1189, 8
    %v1198 = vpop.permute.xlu0 %1197
    %1199 = vrot.lane.b32.xlu0 %v1190, 8
    %v1200 = vpop.permute.xlu0 %1199
    %1201 = vrot.lane.b32.xlu0 %v1191, 8
    %v1202 = vpop.permute.xlu0 %1201
    %1203 = vrot.lane.b32.xlu0 %v1192, 8
    %v1204 = vpop.permute.xlu0 %1203
    %vm1209 = vcmask 130112
    %1210 = vst.msk [vmem:[#allocation5] sm:$0xff] %vm1209, %v1198
    %1211 = vst.msk [vmem:[#allocation5 + $0x8] sm:$0xff] %vm1209, %v1200
    %1212 = vst.msk [vmem:[#allocation5 + $0x10] sm:$0xff] %vm1209, %v1202
    %1213 = vst.msk [vmem:[#allocation5 + $0x18] sm:$0xff] %vm1209, %v1204
    %v1214 = vld [vmem:[#allocation2] sm:$0xff]
    %v1215 = vld [vmem:[#allocation2 + $0x8] sm:$0xff]
    %v1216 = vld [vmem:[#allocation2 + $0x10] sm:$0xff]
    %v1217 = vld [vmem:[#allocation2 + $0x18] sm:$0xff]
    %v1218 = vld [vmem:[#allocation3] sm:$0xff]
    %v1219 = vld [vmem:[#allocation3 + $0x8] sm:$0xff]
    %v1220 = vld [vmem:[#allocation4] sm:$0xff]
    %v1221 = vld [vmem:[#allocation4 + $0x8] sm:$0xff]
    %1224 = vrot.lane.b32.xlu0 %v1214, 112
    %v1225 = vpop.permute.xlu0 %1224
    %1226 = vrot.lane.b32.xlu0 %v1215, 112
    %v1227 = vpop.permute.xlu0 %1226
    %1229 = vrot.lane.b32.xlu0 %v1218, 112
    %v1230 = vpop.permute.xlu0 %1229
    %v1231 = vsel %vm364, %v1225, 0
    %v1233 = vsel %vm364, %v1227, 0
    %v1235 = vsel %vm364, %v1230, 0
    %1237 = vmatprep.subr.mxu0 0.0
    %1238 = vmatpush1.xpose.msra.mxu0 %v1235
    %1239 = vmatprep.subr.mxu0 0.0
    %1240 = vmatpush1.xpose.msra.mxu0 0.0
    %1241 = vmatprep.subr.mxu0 0.0
    %1242 = vmatpush1.xpose.msra.mxu0 0.0
    %1243 = vmatprep.subr.mxu0 0.0
    %1244 = vmatpush1.xpose.msra.mxu0 0.0
    %1245 = vmatprep.subr.mxu0 0.0
    %1246 = vmatpush1.xpose.msra.mxu0 0.0
    %1247 = vmatprep.subr.mxu0 0.0
    %1248 = vmatpush1.xpose.msra.mxu0 0.0
    %1249 = vmatprep.subr.mxu0 0.0
    %1250 = vmatpush1.xpose.msra.mxu0 0.0
    %1251 = vmatprep.subr.mxu0 0.0
    %1252 = vmatpush1.xpose.msra.mxu0 0.0
    %1253 = vmatprep.subr.mxu0 0.0
    %1254 = vmatpush1.xpose.msra.mxu0 0.0
    %1255 = vmatprep.subr.mxu0 0.0
    %1256 = vmatpush1.xpose.msra.mxu0 0.0
    %1257 = vmatprep.subr.mxu0 0.0
    %1258 = vmatpush1.xpose.msra.mxu0 0.0
    %1259 = vmatprep.subr.mxu0 0.0
    %1260 = vmatpush1.xpose.msra.mxu0 0.0
    %1261 = vmatprep.subr.mxu0 0.0
    %1262 = vmatpush1.xpose.msra.mxu0 0.0
    %1263 = vmatprep.subr.mxu0 0.0
    %1264 = vmatpush1.xpose.msra.mxu0 0.0
    %1265 = vmatprep.subr.mxu0 0.0
    %1266 = vmatpush1.xpose.msra.mxu0 0.0
    %1267 = vmatprep.subr.mxu0 0.0
    %1268 = vmatpush1.xpose.msra.mxu0 0.0
    %1269 = vmatprep.subr.mxu0 0.0
    %1270 = vmatpush1.xpose.msra.mxu0 0.0
    %1271 = vmatprep.subr.mxu0 0.0
    %1272 = vmatpush1.xpose.msra.mxu0 0.0
    %1273 = vmatprep.subr.mxu0 0.0
    %1274 = vmatpush1.xpose.msra.mxu0 0.0
    %1275 = vmatprep.subr.mxu0 0.0
    %1276 = vmatpush1.xpose.msra.mxu0 0.0
    %1277 = vmatprep.subr.mxu0 0.0
    %1278 = vmatpush1.xpose.msra.mxu0 0.0
    %1279 = vmatprep.subr.mxu0 0.0
    %1280 = vmatpush1.xpose.msra.mxu0 0.0
    %1281 = vmatprep.subr.mxu0 0.0
    %1282 = vmatpush1.xpose.msra.mxu0 0.0
    %1283 = vmatprep.subr.mxu0 0.0
    %1284 = vmatpush1.xpose.msra.mxu0 0.0
    %1285 = vmatprep.subr.mxu0 0.0
    %1286 = vmatpush1.xpose.msra.mxu0 0.0
    %1287 = vmatprep.subr.mxu0 0.0
    %1288 = vmatpush1.xpose.msra.mxu0 0.0
    %1289 = vmatprep.subr.mxu0 0.0
    %1290 = vmatpush1.xpose.msra.mxu0 0.0
    %1291 = vmatprep.subr.mxu0 0.0
    %1292 = vmatpush1.xpose.msra.mxu0 0.0
    %1293 = vmatprep.subr.mxu0 0.0
    %1294 = vmatpush1.xpose.msra.mxu0 0.0
    %1295 = vmatprep.subr.mxu0 0.0
    %1296 = vmatpush1.xpose.msra.mxu0 0.0
    %1297 = vmatprep.subr.mxu0 0.0
    %1298 = vmatpush1.xpose.msra.mxu0 0.0
    %1299 = vmatprep.subr.mxu0 0.0
    %1300 = vmatpush1.xpose.msra.mxu0 0.0
    %1301 = vmatprep.mubr.f32.mxu0 0.0
    %1302 = vmatmul.mubr.f32.gmra.mrb[0].mxu0 %v1231
    %v1303 = vpop.f32.mrb[0].mxu0
    %v1304 = vadd.f32 0.0, %v1303
    %v1305 = vpop.f32.mrb[0].mxu0
    %1306 = vmatprep.mubr.f32.mxu0 0.0
    %1307 = vmatmul.mubr.f32.gmra.mrb[0].mxu0 %v1233
    %v1308 = vpop.f32.mrb[0].mxu0
    %v1309 = vadd.f32 0.0, %v1308
    %v1310 = vpop.f32.mrb[0].mxu0
    %1311 = vdwg.mxu0
    %1314 = vrot.lane.b32.xlu0 %v1216, 112
    %v1315 = vpop.permute.xlu0 %1314
    %1316 = vrot.lane.b32.xlu0 %v1217, 112
    %v1317 = vpop.permute.xlu0 %1316
    %1319 = vrot.lane.b32.xlu0 %v1219, 112
    %v1320 = vpop.permute.xlu0 %1319
    %v1321 = vsel %vm364, %v1315, 0
    %v1323 = vsel %vm364, %v1317, 0
    %v1325 = vsel %vm364, %v1320, 0
    %1327 = vmatprep.subr.mxu0 0.0
    %1328 = vmatpush1.xpose.msra.mxu0 %v1325
    %1329 = vmatprep.subr.mxu0 0.0
    %1330 = vmatpush1.xpose.msra.mxu0 0.0
    %1331 = vmatprep.subr.mxu0 0.0
    %1332 = vmatpush1.xpose.msra.mxu0 0.0
    %1333 = vmatprep.subr.mxu0 0.0
    %1334 = vmatpush1.xpose.msra.mxu0 0.0
    %1335 = vmatprep.subr.mxu0 0.0
    %1336 = vmatpush1.xpose.msra.mxu0 0.0
    %1337 = vmatprep.subr.mxu0 0.0
    %1338 = vmatpush1.xpose.msra.mxu0 0.0
    %1339 = vmatprep.subr.mxu0 0.0
    %1340 = vmatpush1.xpose.msra.mxu0 0.0
    %1341 = vmatprep.subr.mxu0 0.0
    %1342 = vmatpush1.xpose.msra.mxu0 0.0
    %1343 = vmatprep.subr.mxu0 0.0
    %1344 = vmatpush1.xpose.msra.mxu0 0.0
    %1345 = vmatprep.subr.mxu0 0.0
    %1346 = vmatpush1.xpose.msra.mxu0 0.0
    %1347 = vmatprep.subr.mxu0 0.0
    %1348 = vmatpush1.xpose.msra.mxu0 0.0
    %1349 = vmatprep.subr.mxu0 0.0
    %1350 = vmatpush1.xpose.msra.mxu0 0.0
    %1351 = vmatprep.subr.mxu0 0.0
    %1352 = vmatpush1.xpose.msra.mxu0 0.0
    %1353 = vmatprep.subr.mxu0 0.0
    %1354 = vmatpush1.xpose.msra.mxu0 0.0
    %1355 = vmatprep.subr.mxu0 0.0
    %1356 = vmatpush1.xpose.msra.mxu0 0.0
    %1357 = vmatprep.subr.mxu0 0.0
    %1358 = vmatpush1.xpose.msra.mxu0 0.0
    %1359 = vmatprep.subr.mxu0 0.0
    %1360 = vmatpush1.xpose.msra.mxu0 0.0
    %1361 = vmatprep.subr.mxu0 0.0
    %1362 = vmatpush1.xpose.msra.mxu0 0.0
    %1363 = vmatprep.subr.mxu0 0.0
    %1364 = vmatpush1.xpose.msra.mxu0 0.0
    %1365 = vmatprep.subr.mxu0 0.0
    %1366 = vmatpush1.xpose.msra.mxu0 0.0
    %1367 = vmatprep.subr.mxu0 0.0
    %1368 = vmatpush1.xpose.msra.mxu0 0.0
    %1369 = vmatprep.subr.mxu0 0.0
    %1370 = vmatpush1.xpose.msra.mxu0 0.0
    %1371 = vmatprep.subr.mxu0 0.0
    %1372 = vmatpush1.xpose.msra.mxu0 0.0
    %1373 = vmatprep.subr.mxu0 0.0
    %1374 = vmatpush1.xpose.msra.mxu0 0.0
    %1375 = vmatprep.subr.mxu0 0.0
    %1376 = vmatpush1.xpose.msra.mxu0 0.0
    %1377 = vmatprep.subr.mxu0 0.0
    %1378 = vmatpush1.xpose.msra.mxu0 0.0
    %1379 = vmatprep.subr.mxu0 0.0
    %1380 = vmatpush1.xpose.msra.mxu0 0.0
    %1381 = vmatprep.subr.mxu0 0.0
    %1382 = vmatpush1.xpose.msra.mxu0 0.0
    %1383 = vmatprep.subr.mxu0 0.0
    %1384 = vmatpush1.xpose.msra.mxu0 0.0
    %1385 = vmatprep.subr.mxu0 0.0
    %1386 = vmatpush1.xpose.msra.mxu0 0.0
    %1387 = vmatprep.subr.mxu0 0.0
    %1388 = vmatpush1.xpose.msra.mxu0 0.0
    %1389 = vmatprep.subr.mxu0 0.0
    %1390 = vmatpush1.xpose.msra.mxu0 0.0
    %1391 = vmatprep.mubr.f32.mxu0 0.0
    %1392 = vmatmul.mubr.f32.gmra.mrb[0].mxu0 %v1321
    %v1393 = vpop.f32.mrb[0].mxu0
    %v1394 = vadd.f32 0.0, %v1393
    %v1395 = vpop.f32.mrb[0].mxu0
    %1396 = vmatprep.mubr.f32.mxu0 0.0
    %1397 = vmatmul.mubr.f32.gmra.mrb[0].mxu0 %v1323
    %v1398 = vpop.f32.mrb[0].mxu0
    %v1399 = vadd.f32 0.0, %v1398
    %v1400 = vpop.f32.mrb[0].mxu0
    %1401 = vdwg.mxu0
    %v1402 = vsel %vm364, %v1304, -inf
    %1403 = vmax.xlane.f32.xlu0 %v1402
    %v1404 = vpop.xlane.xlu0 %1403
    %v1405 = vsel %vm364, %v1309, -inf
    %1406 = vmax.xlane.f32.xlu0 %v1405
    %v1407 = vpop.xlane.xlu0 %1406
    %v1408 = vsel %vm364, %v1394, -inf
    %1409 = vmax.xlane.f32.xlu0 %v1408
    %v1410 = vpop.xlane.xlu0 %1409
    %v1411 = vsel %vm364, %v1399, -inf
    %1412 = vmax.xlane.f32.xlu0 %v1411
    %v1413 = vpop.xlane.xlu0 %1412
    %v1414 = vsub.f32 -inf, %v1404
    %v1415 = vsub.f32 -inf, %v1407
    %v1416 = vsub.f32 -inf, %v1410
    %v1417 = vsub.f32 -inf, %v1413
    %v1418 = vmul.f32 %v1414, 1.442695
    %v1419 = vpow.pop %v1418
    %v1420 = vmul.f32 %v1415, 1.442695
    %v1421 = vpow.pop %v1420
    %v1422 = vmul.f32 %v1416, 1.442695
    %v1423 = vpow.pop %v1422
    %v1424 = vmul.f32 %v1417, 1.442695
    %v1425 = vpow.pop %v1424
    %v1426 = vsub.f32 %v1304, %v1404
    %v1427 = vsub.f32 %v1309, %v1407
    %v1428 = vsub.f32 %v1394, %v1410
    %v1429 = vsub.f32 %v1399, %v1413
    %v1430 = vmul.f32 %v1426, 1.442695
    %v1431 = vpow.pop %v1430
    %v1432 = vmul.f32 %v1427, 1.442695
    %v1433 = vpow.pop %v1432
    %v1434 = vmul.f32 %v1428, 1.442695
    %v1435 = vpow.pop %v1434
    %v1436 = vmul.f32 %v1429, 1.442695
    %v1437 = vpow.pop %v1436
    %v1438 = vsel %vm364, %v1431, 0.0
    %1439 = vadd.xlane.f32.xlu0 %v1438
    %v1440 = vpop.xlane.xlu0 %1439
    %v1441 = vsel %vm364, %v1433, 0.0
    %1442 = vadd.xlane.f32.xlu0 %v1441
    %v1443 = vpop.xlane.xlu0 %1442
    %v1444 = vsel %vm364, %v1435, 0.0
    %1445 = vadd.xlane.f32.xlu0 %v1444
    %v1446 = vpop.xlane.xlu0 %1445
    %v1447 = vsel %vm364, %v1437, 0.0
    %1448 = vadd.xlane.f32.xlu0 %v1447
    %v1449 = vpop.xlane.xlu0 %1448
    %v1450 = vmul.f32 %v1419, 0.0
    %v1451 = vmul.f32 %v1421, 0.0
    %v1452 = vmul.f32 %v1423, 0.0
    %v1453 = vmul.f32 %v1425, 0.0
    %v1454 = vadd.f32 %v1450, %v1440
    %v1455 = vadd.f32 %v1451, %v1443
    %v1456 = vadd.f32 %v1452, %v1446
    %v1457 = vadd.f32 %v1453, %v1449
    %1459 = vrot.lane.b32.xlu0 %v1220, 112
    %v1460 = vpop.permute.xlu0 %1459
    %v1463 = vsel %vm364, %v1431, 0
    %v1466 = vsel %vm364, %v1433, 0
    %1468 = vmatprep.subr.mxu0 0.0
    %1469 = vmatpush1.msra.mxu0 %v1460
    %1470 = vmatprep.subr.mxu0 0.0
    %1471 = vmatpush1.msra.mxu0 0.0
    %1472 = vmatprep.subr.mxu0 0.0
    %1473 = vmatpush1.msra.mxu0 0.0
    %1474 = vmatprep.subr.mxu0 0.0
    %1475 = vmatpush1.msra.mxu0 0.0
    %1476 = vmatprep.subr.mxu0 0.0
    %1477 = vmatpush1.msra.mxu0 0.0
    %1478 = vmatprep.subr.mxu0 0.0
    %1479 = vmatpush1.msra.mxu0 0.0
    %1480 = vmatprep.subr.mxu0 0.0
    %1481 = vmatpush1.msra.mxu0 0.0
    %1482 = vmatprep.subr.mxu0 0.0
    %1483 = vmatpush1.msra.mxu0 0.0
    %1484 = vmatprep.subr.mxu0 0.0
    %1485 = vmatpush1.msra.mxu0 0.0
    %1486 = vmatprep.subr.mxu0 0.0
    %1487 = vmatpush1.msra.mxu0 0.0
    %1488 = vmatprep.subr.mxu0 0.0
    %1489 = vmatpush1.msra.mxu0 0.0
    %1490 = vmatprep.subr.mxu0 0.0
    %1491 = vmatpush1.msra.mxu0 0.0
    %1492 = vmatprep.subr.mxu0 0.0
    %1493 = vmatpush1.msra.mxu0 0.0
    %1494 = vmatprep.subr.mxu0 0.0
    %1495 = vmatpush1.msra.mxu0 0.0
    %1496 = vmatprep.subr.mxu0 0.0
    %1497 = vmatpush1.msra.mxu0 0.0
    %1498 = vmatprep.subr.mxu0 0.0
    %1499 = vmatpush1.msra.mxu0 0.0
    %1500 = vmatprep.subr.mxu0 0.0
    %1501 = vmatpush1.msra.mxu0 0.0
    %1502 = vmatprep.subr.mxu0 0.0
    %1503 = vmatpush1.msra.mxu0 0.0
    %1504 = vmatprep.subr.mxu0 0.0
    %1505 = vmatpush1.msra.mxu0 0.0
    %1506 = vmatprep.subr.mxu0 0.0
    %1507 = vmatpush1.msra.mxu0 0.0
    %1508 = vmatprep.subr.mxu0 0.0
    %1509 = vmatpush1.msra.mxu0 0.0
    %1510 = vmatprep.subr.mxu0 0.0
    %1511 = vmatpush1.msra.mxu0 0.0
    %1512 = vmatprep.subr.mxu0 0.0
    %1513 = vmatpush1.msra.mxu0 0.0
    %1514 = vmatprep.subr.mxu0 0.0
    %1515 = vmatpush1.msra.mxu0 0.0
    %1516 = vmatprep.subr.mxu0 0.0
    %1517 = vmatpush1.msra.mxu0 0.0
    %1518 = vmatprep.subr.mxu0 0.0
    %1519 = vmatpush1.msra.mxu0 0.0
    %1520 = vmatprep.subr.mxu0 0.0
    %1521 = vmatpush1.msra.mxu0 0.0
    %1522 = vmatprep.subr.mxu0 0.0
    %1523 = vmatpush1.msra.mxu0 0.0
    %1524 = vmatprep.subr.mxu0 0.0
    %1525 = vmatpush1.msra.mxu0 0.0
    %1526 = vmatprep.subr.mxu0 0.0
    %1527 = vmatpush1.msra.mxu0 0.0
    %1528 = vmatprep.subr.mxu0 0.0
    %1529 = vmatpush1.msra.mxu0 0.0
    %1530 = vmatprep.subr.mxu0 0.0
    %1531 = vmatpush1.msra.mxu0 0.0
    %1532 = vmatprep.mubr.f32.mxu0 0.0
    %1533 = vmatmul.mubr.f32.gmra.mrb[0].mxu0 %v1463
    %v1534 = vpop.f32.mrb[0].mxu0
    %v1535 = vadd.f32 0.0, %v1534
    %v1536 = vpop.f32.mrb[0].mxu0
    %1537 = vmatprep.mubr.f32.mxu0 0.0
    %1538 = vmatmul.mubr.f32.gmra.mrb[0].mxu0 %v1466
    %v1539 = vpop.f32.mrb[0].mxu0
    %v1540 = vadd.f32 0.0, %v1539
    %v1541 = vpop.f32.mrb[0].mxu0
    %1542 = vdwg.mxu0
    %1544 = vrot.lane.b32.xlu0 %v1221, 112
    %v1545 = vpop.permute.xlu0 %1544
    %v1548 = vsel %vm364, %v1435, 0
    %v1551 = vsel %vm364, %v1437, 0
    %1553 = vmatprep.subr.mxu0 0.0
    %1554 = vmatpush1.msra.mxu0 %v1545
    %1555 = vmatprep.subr.mxu0 0.0
    %1556 = vmatpush1.msra.mxu0 0.0
    %1557 = vmatprep.subr.mxu0 0.0
    %1558 = vmatpush1.msra.mxu0 0.0
    %1559 = vmatprep.subr.mxu0 0.0
    %1560 = vmatpush1.msra.mxu0 0.0
    %1561 = vmatprep.subr.mxu0 0.0
    %1562 = vmatpush1.msra.mxu0 0.0
    %1563 = vmatprep.subr.mxu0 0.0
    %1564 = vmatpush1.msra.mxu0 0.0
    %1565 = vmatprep.subr.mxu0 0.0
    %1566 = vmatpush1.msra.mxu0 0.0
    %1567 = vmatprep.subr.mxu0 0.0
    %1568 = vmatpush1.msra.mxu0 0.0
    %1569 = vmatprep.subr.mxu0 0.0
    %1570 = vmatpush1.msra.mxu0 0.0
    %1571 = vmatprep.subr.mxu0 0.0
    %1572 = vmatpush1.msra.mxu0 0.0
    %1573 = vmatprep.subr.mxu0 0.0
    %1574 = vmatpush1.msra.mxu0 0.0
    %1575 = vmatprep.subr.mxu0 0.0
    %1576 = vmatpush1.msra.mxu0 0.0
    %1577 = vmatprep.subr.mxu0 0.0
    %1578 = vmatpush1.msra.mxu0 0.0
    %1579 = vmatprep.subr.mxu0 0.0
    %1580 = vmatpush1.msra.mxu0 0.0
    %1581 = vmatprep.subr.mxu0 0.0
    %1582 = vmatpush1.msra.mxu0 0.0
    %1583 = vmatprep.subr.mxu0 0.0
    %1584 = vmatpush1.msra.mxu0 0.0
    %1585 = vmatprep.subr.mxu0 0.0
    %1586 = vmatpush1.msra.mxu0 0.0
    %1587 = vmatprep.subr.mxu0 0.0
    %1588 = vmatpush1.msra.mxu0 0.0
    %1589 = vmatprep.subr.mxu0 0.0
    %1590 = vmatpush1.msra.mxu0 0.0
    %1591 = vmatprep.subr.mxu0 0.0
    %1592 = vmatpush1.msra.mxu0 0.0
    %1593 = vmatprep.subr.mxu0 0.0
    %1594 = vmatpush1.msra.mxu0 0.0
    %1595 = vmatprep.subr.mxu0 0.0
    %1596 = vmatpush1.msra.mxu0 0.0
    %1597 = vmatprep.subr.mxu0 0.0
    %1598 = vmatpush1.msra.mxu0 0.0
    %1599 = vmatprep.subr.mxu0 0.0
    %1600 = vmatpush1.msra.mxu0 0.0
    %1601 = vmatprep.subr.mxu0 0.0
    %1602 = vmatpush1.msra.mxu0 0.0
    %1603 = vmatprep.subr.mxu0 0.0
    %1604 = vmatpush1.msra.mxu0 0.0
    %1605 = vmatprep.subr.mxu0 0.0
    %1606 = vmatpush1.msra.mxu0 0.0
    %1607 = vmatprep.subr.mxu0 0.0
    %1608 = vmatpush1.msra.mxu0 0.0
    %1609 = vmatprep.subr.mxu0 0.0
    %1610 = vmatpush1.msra.mxu0 0.0
    %1611 = vmatprep.subr.mxu0 0.0
    %1612 = vmatpush1.msra.mxu0 0.0
    %1613 = vmatprep.subr.mxu0 0.0
    %1614 = vmatpush1.msra.mxu0 0.0
    %1615 = vmatprep.subr.mxu0 0.0
    %1616 = vmatpush1.msra.mxu0 0.0
    %1617 = vmatprep.mubr.f32.mxu0 0.0
    %1618 = vmatmul.mubr.f32.gmra.mrb[0].mxu0 %v1548
    %v1619 = vpop.f32.mrb[0].mxu0
    %v1620 = vadd.f32 0.0, %v1619
    %v1621 = vpop.f32.mrb[0].mxu0
    %1622 = vmatprep.mubr.f32.mxu0 0.0
    %1623 = vmatmul.mubr.f32.gmra.mrb[0].mxu0 %v1551
    %v1624 = vpop.f32.mrb[0].mxu0
    %v1625 = vadd.f32 0.0, %v1624
    %v1626 = vpop.f32.mrb[0].mxu0
    %1627 = vdwg.mxu0
    %v1628 = vadd.f32 %v1450, %v1535
    %v1629 = vadd.f32 %v1451, %v1540
    %v1630 = vadd.f32 %v1452, %v1620
    %v1631 = vadd.f32 %v1453, %v1625
    %v1632 = vrcp.pop %v1454
    %v1633 = vrcp.pop %v1455
    %v1634 = vrcp.pop %v1456
    %v1635 = vrcp.pop %v1457
    %v1636 = vmul.f32 %v1628, %v1632
    %v1637 = vmul.f32 %v1629, %v1633
    %v1638 = vmul.f32 %v1630, %v1634
    %v1639 = vmul.f32 %v1631, %v1635
    %1644 = vrot.lane.b32.xlu0 %v1636, 16
    %v1645 = vpop.permute.xlu0 %1644
    %1646 = vrot.lane.b32.xlu0 %v1637, 16
    %v1647 = vpop.permute.xlu0 %1646
    %1648 = vrot.lane.b32.xlu0 %v1638, 16
    %v1649 = vpop.permute.xlu0 %1648
    %1650 = vrot.lane.b32.xlu0 %v1639, 16
    %v1651 = vpop.permute.xlu0 %1650
    %vm1656 = vcmask 195712
    %1657 = vst.msk [vmem:[#allocation5] sm:$0xff] %vm1656, %v1645
    %1658 = vst.msk [vmem:[#allocation5 + $0x8] sm:$0xff] %vm1656, %v1647
    %1659 = vst.msk [vmem:[#allocation5 + $0x10] sm:$0xff] %vm1656, %v1649
    %1660 = vst.msk [vmem:[#allocation5 + $0x18] sm:$0xff] %vm1656, %v1651
    %v1661 = vld [vmem:[#allocation2] sm:$0xff]
    %v1662 = vld [vmem:[#allocation2 + $0x8] sm:$0xff]
    %v1663 = vld [vmem:[#allocation2 + $0x10] sm:$0xff]
    %v1664 = vld [vmem:[#allocation2 + $0x18] sm:$0xff]
    %v1665 = vld [vmem:[#allocation3] sm:$0xff]
    %v1666 = vld [vmem:[#allocation3 + $0x8] sm:$0xff]
    %v1667 = vld [vmem:[#allocation4] sm:$0xff]
    %v1668 = vld [vmem:[#allocation4 + $0x8] sm:$0xff]
    %1671 = vrot.lane.b32.xlu0 %v1661, 104
    %v1672 = vpop.permute.xlu0 %1671
    %1673 = vrot.lane.b32.xlu0 %v1662, 104
    %v1674 = vpop.permute.xlu0 %1673
    %1676 = vrot.lane.b32.xlu0 %v1665, 104
    %v1677 = vpop.permute.xlu0 %1676
    %v1678 = vsel %vm364, %v1672, 0
    %v1680 = vsel %vm364, %v1674, 0
    %v1682 = vsel %vm364, %v1677, 0
    %1684 = vmatprep.subr.mxu0 0.0
    %1685 = vmatpush1.xpose.msra.mxu0 %v1682
    %1686 = vmatprep.subr.mxu0 0.0
    %1687 = vmatpush1.xpose.msra.mxu0 0.0
    %1688 = vmatprep.subr.mxu0 0.0
    %1689 = vmatpush1.xpose.msra.mxu0 0.0
    %1690 = vmatprep.subr.mxu0 0.0
    %1691 = vmatpush1.xpose.msra.mxu0 0.0
    %1692 = vmatprep.subr.mxu0 0.0
    %1693 = vmatpush1.xpose.msra.mxu0 0.0
    %1694 = vmatprep.subr.mxu0 0.0
    %1695 = vmatpush1.xpose.msra.mxu0 0.0
    %1696 = vmatprep.subr.mxu0 0.0
    %1697 = vmatpush1.xpose.msra.mxu0 0.0
    %1698 = vmatprep.subr.mxu0 0.0
    %1699 = vmatpush1.xpose.msra.mxu0 0.0
    %1700 = vmatprep.subr.mxu0 0.0
    %1701 = vmatpush1.xpose.msra.mxu0 0.0
    %1702 = vmatprep.subr.mxu0 0.0
    %1703 = vmatpush1.xpose.msra.mxu0 0.0
    %1704 = vmatprep.subr.mxu0 0.0
    %1705 = vmatpush1.xpose.msra.mxu0 0.0
    %1706 = vmatprep.subr.mxu0 0.0
    %1707 = vmatpush1.xpose.msra.mxu0 0.0
    %1708 = vmatprep.subr.mxu0 0.0
    %1709 = vmatpush1.xpose.msra.mxu0 0.0
    %1710 = vmatprep.subr.mxu0 0.0
    %1711 = vmatpush1.xpose.msra.mxu0 0.0
    %1712 = vmatprep.subr.mxu0 0.0
    %1713 = vmatpush1.xpose.msra.mxu0 0.0
    %1714 = vmatprep.subr.mxu0 0.0
    %1715 = vmatpush1.xpose.msra.mxu0 0.0
    %1716 = vmatprep.subr.mxu0 0.0
    %1717 = vmatpush1.xpose.msra.mxu0 0.0
    %1718 = vmatprep.subr.mxu0 0.0
    %1719 = vmatpush1.xpose.msra.mxu0 0.0
    %1720 = vmatprep.subr.mxu0 0.0
    %1721 = vmatpush1.xpose.msra.mxu0 0.0
    %1722 = vmatprep.subr.mxu0 0.0
    %1723 = vmatpush1.xpose.msra.mxu0 0.0
    %1724 = vmatprep.subr.mxu0 0.0
    %1725 = vmatpush1.xpose.msra.mxu0 0.0
    %1726 = vmatprep.subr.mxu0 0.0
    %1727 = vmatpush1.xpose.msra.mxu0 0.0
    %1728 = vmatprep.subr.mxu0 0.0
    %1729 = vmatpush1.xpose.msra.mxu0 0.0
    %1730 = vmatprep.subr.mxu0 0.0
    %1731 = vmatpush1.xpose.msra.mxu0 0.0
    %1732 = vmatprep.subr.mxu0 0.0
    %1733 = vmatpush1.xpose.msra.mxu0 0.0
    %1734 = vmatprep.subr.mxu0 0.0
    %1735 = vmatpush1.xpose.msra.mxu0 0.0
    %1736 = vmatprep.subr.mxu0 0.0
    %1737 = vmatpush1.xpose.msra.mxu0 0.0
    %1738 = vmatprep.subr.mxu0 0.0
    %1739 = vmatpush1.xpose.msra.mxu0 0.0
    %1740 = vmatprep.subr.mxu0 0.0
    %1741 = vmatpush1.xpose.msra.mxu0 0.0
    %1742 = vmatprep.subr.mxu0 0.0
    %1743 = vmatpush1.xpose.msra.mxu0 0.0
    %1744 = vmatprep.subr.mxu0 0.0
    %1745 = vmatpush1.xpose.msra.mxu0 0.0
    %1746 = vmatprep.subr.mxu0 0.0
    %1747 = vmatpush1.xpose.msra.mxu0 0.0
    %1748 = vmatprep.mubr.f32.mxu0 0.0
    %1749 = vmatmul.mubr.f32.gmra.mrb[0].mxu0 %v1678
    %v1750 = vpop.f32.mrb[0].mxu0
    %v1751 = vadd.f32 0.0, %v1750
    %v1752 = vpop.f32.mrb[0].mxu0
    %1753 = vmatprep.mubr.f32.mxu0 0.0
    %1754 = vmatmul.mubr.f32.gmra.mrb[0].mxu0 %v1680
    %v1755 = vpop.f32.mrb[0].mxu0
    %v1756 = vadd.f32 0.0, %v1755
    %v1757 = vpop.f32.mrb[0].mxu0
    %1758 = vdwg.mxu0
    %1761 = vrot.lane.b32.xlu0 %v1663, 104
    %v1762 = vpop.permute.xlu0 %1761
    %1763 = vrot.lane.b32.xlu0 %v1664, 104
    %v1764 = vpop.permute.xlu0 %1763
    %1766 = vrot.lane.b32.xlu0 %v1666, 104
    %v1767 = vpop.permute.xlu0 %1766
    %v1768 = vsel %vm364, %v1762, 0
    %v1770 = vsel %vm364, %v1764, 0
    %v1772 = vsel %vm364, %v1767, 0
    %1774 = vmatprep.subr.mxu0 0.0
    %1775 = vmatpush1.xpose.msra.mxu0 %v1772
    %1776 = vmatprep.subr.mxu0 0.0
    %1777 = vmatpush1.xpose.msra.mxu0 0.0
    %1778 = vmatprep.subr.mxu0 0.0
    %1779 = vmatpush1.xpose.msra.mxu0 0.0
    %1780 = vmatprep.subr.mxu0 0.0
    %1781 = vmatpush1.xpose.msra.mxu0 0.0
    %1782 = vmatprep.subr.mxu0 0.0
    %1783 = vmatpush1.xpose.msra.mxu0 0.0
    %1784 = vmatprep.subr.mxu0 0.0
    %1785 = vmatpush1.xpose.msra.mxu0 0.0
    %1786 = vmatprep.subr.mxu0 0.0
    %1787 = vmatpush1.xpose.msra.mxu0 0.0
    %1788 = vmatprep.subr.mxu0 0.0
    %1789 = vmatpush1.xpose.msra.mxu0 0.0
    %1790 = vmatprep.subr.mxu0 0.0
    %1791 = vmatpush1.xpose.msra.mxu0 0.0
    %1792 = vmatprep.subr.mxu0 0.0
    %1793 = vmatpush1.xpose.msra.mxu0 0.0
    %1794 = vmatprep.subr.mxu0 0.0
    %1795 = vmatpush1.xpose.msra.mxu0 0.0
    %1796 = vmatprep.subr.mxu0 0.0
    %1797 = vmatpush1.xpose.msra.mxu0 0.0
    %1798 = vmatprep.subr.mxu0 0.0
    %1799 = vmatpush1.xpose.msra.mxu0 0.0
    %1800 = vmatprep.subr.mxu0 0.0
    %1801 = vmatpush1.xpose.msra.mxu0 0.0
    %1802 = vmatprep.subr.mxu0 0.0
    %1803 = vmatpush1.xpose.msra.mxu0 0.0
    %1804 = vmatprep.subr.mxu0 0.0
    %1805 = vmatpush1.xpose.msra.mxu0 0.0
    %1806 = vmatprep.subr.mxu0 0.0
    %1807 = vmatpush1.xpose.msra.mxu0 0.0
    %1808 = vmatprep.subr.mxu0 0.0
    %1809 = vmatpush1.xpose.msra.mxu0 0.0
    %1810 = vmatprep.subr.mxu0 0.0
    %1811 = vmatpush1.xpose.msra.mxu0 0.0
    %1812 = vmatprep.subr.mxu0 0.0
    %1813 = vmatpush1.xpose.msra.mxu0 0.0
    %1814 = vmatprep.subr.mxu0 0.0
    %1815 = vmatpush1.xpose.msra.mxu0 0.0
    %1816 = vmatprep.subr.mxu0 0.0
    %1817 = vmatpush1.xpose.msra.mxu0 0.0
    %1818 = vmatprep.subr.mxu0 0.0
    %1819 = vmatpush1.xpose.msra.mxu0 0.0
    %1820 = vmatprep.subr.mxu0 0.0
    %1821 = vmatpush1.xpose.msra.mxu0 0.0
    %1822 = vmatprep.subr.mxu0 0.0
    %1823 = vmatpush1.xpose.msra.mxu0 0.0
    %1824 = vmatprep.subr.mxu0 0.0
    %1825 = vmatpush1.xpose.msra.mxu0 0.0
    %1826 = vmatprep.subr.mxu0 0.0
    %1827 = vmatpush1.xpose.msra.mxu0 0.0
    %1828 = vmatprep.subr.mxu0 0.0
    %1829 = vmatpush1.xpose.msra.mxu0 0.0
    %1830 = vmatprep.subr.mxu0 0.0
    %1831 = vmatpush1.xpose.msra.mxu0 0.0
    %1832 = vmatprep.subr.mxu0 0.0
    %1833 = vmatpush1.xpose.msra.mxu0 0.0
    %1834 = vmatprep.subr.mxu0 0.0
    %1835 = vmatpush1.xpose.msra.mxu0 0.0
    %1836 = vmatprep.subr.mxu0 0.0
    %1837 = vmatpush1.xpose.msra.mxu0 0.0
    %1838 = vmatprep.mubr.f32.mxu0 0.0
    %1839 = vmatmul.mubr.f32.gmra.mrb[0].mxu0 %v1768
    %v1840 = vpop.f32.mrb[0].mxu0
    %v1841 = vadd.f32 0.0, %v1840
    %v1842 = vpop.f32.mrb[0].mxu0
    %1843 = vmatprep.mubr.f32.mxu0 0.0
    %1844 = vmatmul.mubr.f32.gmra.mrb[0].mxu0 %v1770
    %v1845 = vpop.f32.mrb[0].mxu0
    %v1846 = vadd.f32 0.0, %v1845
    %v1847 = vpop.f32.mrb[0].mxu0
    %1848 = vdwg.mxu0
    %v1849 = vsel %vm364, %v1751, -inf
    %1850 = vmax.xlane.f32.xlu0 %v1849
    %v1851 = vpop.xlane.xlu0 %1850
    %v1852 = vsel %vm364, %v1756, -inf
    %1853 = vmax.xlane.f32.xlu0 %v1852
    %v1854 = vpop.xlane.xlu0 %1853
    %v1855 = vsel %vm364, %v1841, -inf
    %1856 = vmax.xlane.f32.xlu0 %v1855
    %v1857 = vpop.xlane.xlu0 %1856
    %v1858 = vsel %vm364, %v1846, -inf
    %1859 = vmax.xlane.f32.xlu0 %v1858
    %v1860 = vpop.xlane.xlu0 %1859
    %v1861 = vsub.f32 -inf, %v1851
    %v1862 = vsub.f32 -inf, %v1854
    %v1863 = vsub.f32 -inf, %v1857
    %v1864 = vsub.f32 -inf, %v1860
    %v1865 = vmul.f32 %v1861, 1.442695
    %v1866 = vpow.pop %v1865
    %v1867 = vmul.f32 %v1862, 1.442695
    %v1868 = vpow.pop %v1867
    %v1869 = vmul.f32 %v1863, 1.442695
    %v1870 = vpow.pop %v1869
    %v1871 = vmul.f32 %v1864, 1.442695
    %v1872 = vpow.pop %v1871
    %v1873 = vsub.f32 %v1751, %v1851
    %v1874 = vsub.f32 %v1756, %v1854
    %v1875 = vsub.f32 %v1841, %v1857
    %v1876 = vsub.f32 %v1846, %v1860
    %v1877 = vmul.f32 %v1873, 1.442695
    %v1878 = vpow.pop %v1877
    %v1879 = vmul.f32 %v1874, 1.442695
    %v1880 = vpow.pop %v1879
    %v1881 = vmul.f32 %v1875, 1.442695
    %v1882 = vpow.pop %v1881
    %v1883 = vmul.f32 %v1876, 1.442695
    %v1884 = vpow.pop %v1883
    %v1885 = vsel %vm364, %v1878, 0.0
    %1886 = vadd.xlane.f32.xlu0 %v1885
    %v1887 = vpop.xlane.xlu0 %1886
    %v1888 = vsel %vm364, %v1880, 0.0
    %1889 = vadd.xlane.f32.xlu0 %v1888
    %v1890 = vpop.xlane.xlu0 %1889
    %v1891 = vsel %vm364, %v1882, 0.0
    %1892 = vadd.xlane.f32.xlu0 %v1891
    %v1893 = vpop.xlane.xlu0 %1892
    %v1894 = vsel %vm364, %v1884, 0.0
    %1895 = vadd.xlane.f32.xlu0 %v1894
    %v1896 = vpop.xlane.xlu0 %1895
    %v1897 = vmul.f32 %v1866, 0.0
    %v1898 = vmul.f32 %v1868, 0.0
    %v1899 = vmul.f32 %v1870, 0.0
    %v1900 = vmul.f32 %v1872, 0.0
    %v1901 = vadd.f32 %v1897, %v1887
    %v1902 = vadd.f32 %v1898, %v1890
    %v1903 = vadd.f32 %v1899, %v1893
    %v1904 = vadd.f32 %v1900, %v1896
    %1906 = vrot.lane.b32.xlu0 %v1667, 104
    %v1907 = vpop.permute.xlu0 %1906
    %v1910 = vsel %vm364, %v1878, 0
    %v1913 = vsel %vm364, %v1880, 0
    %1915 = vmatprep.subr.mxu0 0.0
    %1916 = vmatpush1.msra.mxu0 %v1907
    %1917 = vmatprep.subr.mxu0 0.0
    %1918 = vmatpush1.msra.mxu0 0.0
    %1919 = vmatprep.subr.mxu0 0.0
    %1920 = vmatpush1.msra.mxu0 0.0
    %1921 = vmatprep.subr.mxu0 0.0
    %1922 = vmatpush1.msra.mxu0 0.0
    %1923 = vmatprep.subr.mxu0 0.0
    %1924 = vmatpush1.msra.mxu0 0.0
    %1925 = vmatprep.subr.mxu0 0.0
    %1926 = vmatpush1.msra.mxu0 0.0
    %1927 = vmatprep.subr.mxu0 0.0
    %1928 = vmatpush1.msra.mxu0 0.0
    %1929 = vmatprep.subr.mxu0 0.0
    %1930 = vmatpush1.msra.mxu0 0.0
    %1931 = vmatprep.subr.mxu0 0.0
    %1932 = vmatpush1.msra.mxu0 0.0
    %1933 = vmatprep.subr.mxu0 0.0
    %1934 = vmatpush1.msra.mxu0 0.0
    %1935 = vmatprep.subr.mxu0 0.0
    %1936 = vmatpush1.msra.mxu0 0.0
    %1937 = vmatprep.subr.mxu0 0.0
    %1938 = vmatpush1.msra.mxu0 0.0
    %1939 = vmatprep.subr.mxu0 0.0
    %1940 = vmatpush1.msra.mxu0 0.0
    %1941 = vmatprep.subr.mxu0 0.0
    %1942 = vmatpush1.msra.mxu0 0.0
    %1943 = vmatprep.subr.mxu0 0.0
    %1944 = vmatpush1.msra.mxu0 0.0
    %1945 = vmatprep.subr.mxu0 0.0
    %1946 = vmatpush1.msra.mxu0 0.0
    %1947 = vmatprep.subr.mxu0 0.0
    %1948 = vmatpush1.msra.mxu0 0.0
    %1949 = vmatprep.subr.mxu0 0.0
    %1950 = vmatpush1.msra.mxu0 0.0
    %1951 = vmatprep.subr.mxu0 0.0
    %1952 = vmatpush1.msra.mxu0 0.0
    %1953 = vmatprep.subr.mxu0 0.0
    %1954 = vmatpush1.msra.mxu0 0.0
    %1955 = vmatprep.subr.mxu0 0.0
    %1956 = vmatpush1.msra.mxu0 0.0
    %1957 = vmatprep.subr.mxu0 0.0
    %1958 = vmatpush1.msra.mxu0 0.0
    %1959 = vmatprep.subr.mxu0 0.0
    %1960 = vmatpush1.msra.mxu0 0.0
    %1961 = vmatprep.subr.mxu0 0.0
    %1962 = vmatpush1.msra.mxu0 0.0
    %1963 = vmatprep.subr.mxu0 0.0
    %1964 = vmatpush1.msra.mxu0 0.0
    %1965 = vmatprep.subr.mxu0 0.0
    %1966 = vmatpush1.msra.mxu0 0.0
    %1967 = vmatprep.subr.mxu0 0.0
    %1968 = vmatpush1.msra.mxu0 0.0
    %1969 = vmatprep.subr.mxu0 0.0
    %1970 = vmatpush1.msra.mxu0 0.0
    %1971 = vmatprep.subr.mxu0 0.0
    %1972 = vmatpush1.msra.mxu0 0.0
    %1973 = vmatprep.subr.mxu0 0.0
    %1974 = vmatpush1.msra.mxu0 0.0
    %1975 = vmatprep.subr.mxu0 0.0
    %1976 = vmatpush1.msra.mxu0 0.0
    %1977 = vmatprep.subr.mxu0 0.0
    %1978 = vmatpush1.msra.mxu0 0.0
    %1979 = vmatprep.mubr.f32.mxu0 0.0
    %1980 = vmatmul.mubr.f32.gmra.mrb[0].mxu0 %v1910
    %v1981 = vpop.f32.mrb[0].mxu0
    %v1982 = vadd.f32 0.0, %v1981
    %v1983 = vpop.f32.mrb[0].mxu0
    %1984 = vmatprep.mubr.f32.mxu0 0.0
    %1985 = vmatmul.mubr.f32.gmra.mrb[0].mxu0 %v1913
    %v1986 = vpop.f32.mrb[0].mxu0
    %v1987 = vadd.f32 0.0, %v1986
    %v1988 = vpop.f32.mrb[0].mxu0
    %1989 = vdwg.mxu0
    %1991 = vrot.lane.b32.xlu0 %v1668, 104
    %v1992 = vpop.permute.xlu0 %1991
    %v1995 = vsel %vm364, %v1882, 0
    %v1998 = vsel %vm364, %v1884, 0
    %2000 = vmatprep.subr.mxu0 0.0
    %2001 = vmatpush1.msra.mxu0 %v1992
    %2002 = vmatprep.subr.mxu0 0.0
    %2003 = vmatpush1.msra.mxu0 0.0
    %2004 = vmatprep.subr.mxu0 0.0
    %2005 = vmatpush1.msra.mxu0 0.0
    %2006 = vmatprep.subr.mxu0 0.0
    %2007 = vmatpush1.msra.mxu0 0.0
    %2008 = vmatprep.subr.mxu0 0.0
    %2009 = vmatpush1.msra.mxu0 0.0
    %2010 = vmatprep.subr.mxu0 0.0
    %2011 = vmatpush1.msra.mxu0 0.0
    %2012 = vmatprep.subr.mxu0 0.0
    %2013 = vmatpush1.msra.mxu0 0.0
    %2014 = vmatprep.subr.mxu0 0.0
    %2015 = vmatpush1.msra.mxu0 0.0
    %2016 = vmatprep.subr.mxu0 0.0
    %2017 = vmatpush1.msra.mxu0 0.0
    %2018 = vmatprep.subr.mxu0 0.0
    %2019 = vmatpush1.msra.mxu0 0.0
    %2020 = vmatprep.subr.mxu0 0.0
    %2021 = vmatpush1.msra.mxu0 0.0
    %2022 = vmatprep.subr.mxu0 0.0
    %2023 = vmatpush1.msra.mxu0 0.0
    %2024 = vmatprep.subr.mxu0 0.0
    %2025 = vmatpush1.msra.mxu0 0.0
    %2026 = vmatprep.subr.mxu0 0.0
    %2027 = vmatpush1.msra.mxu0 0.0
    %2028 = vmatprep.subr.mxu0 0.0
    %2029 = vmatpush1.msra.mxu0 0.0
    %2030 = vmatprep.subr.mxu0 0.0
    %2031 = vmatpush1.msra.mxu0 0.0
    %2032 = vmatprep.subr.mxu0 0.0
    %2033 = vmatpush1.msra.mxu0 0.0
    %2034 = vmatprep.subr.mxu0 0.0
    %2035 = vmatpush1.msra.mxu0 0.0
    %2036 = vmatprep.subr.mxu0 0.0
    %2037 = vmatpush1.msra.mxu0 0.0
    %2038 = vmatprep.subr.mxu0 0.0
    %2039 = vmatpush1.msra.mxu0 0.0
    %2040 = vmatprep.subr.mxu0 0.0
    %2041 = vmatpush1.msra.mxu0 0.0
    %2042 = vmatprep.subr.mxu0 0.0
    %2043 = vmatpush1.msra.mxu0 0.0
    %2044 = vmatprep.subr.mxu0 0.0
    %2045 = vmatpush1.msra.mxu0 0.0
    %2046 = vmatprep.subr.mxu0 0.0
    %2047 = vmatpush1.msra.mxu0 0.0
    %2048 = vmatprep.subr.mxu0 0.0
    %2049 = vmatpush1.msra.mxu0 0.0
    %2050 = vmatprep.subr.mxu0 0.0
    %2051 = vmatpush1.msra.mxu0 0.0
    %2052 = vmatprep.subr.mxu0 0.0
    %2053 = vmatpush1.msra.mxu0 0.0
    %2054 = vmatprep.subr.mxu0 0.0
    %2055 = vmatpush1.msra.mxu0 0.0
    %2056 = vmatprep.subr.mxu0 0.0
    %2057 = vmatpush1.msra.mxu0 0.0
    %2058 = vmatprep.subr.mxu0 0.0
    %2059 = vmatpush1.msra.mxu0 0.0
    %2060 = vmatprep.subr.mxu0 0.0
    %2061 = vmatpush1.msra.mxu0 0.0
    %2062 = vmatprep.subr.mxu0 0.0
    %2063 = vmatpush1.msra.mxu0 0.0
    %2064 = vmatprep.mubr.f32.mxu0 0.0
    %2065 = vmatmul.mubr.f32.gmra.mrb[0].mxu0 %v1995
    %v2066 = vpop.f32.mrb[0].mxu0
    %v2067 = vadd.f32 0.0, %v2066
    %v2068 = vpop.f32.mrb[0].mxu0
    %2069 = vmatprep.mubr.f32.mxu0 0.0
    %2070 = vmatmul.mubr.f32.gmra.mrb[0].mxu0 %v1998
    %v2071 = vpop.f32.mrb[0].mxu0
    %v2072 = vadd.f32 0.0, %v2071
    %v2073 = vpop.f32.mrb[0].mxu0
    %2074 = vdwg.mxu0
    %v2075 = vadd.f32 %v1897, %v1982
    %v2076 = vadd.f32 %v1898, %v1987
    %v2077 = vadd.f32 %v1899, %v2067
    %v2078 = vadd.f32 %v1900, %v2072
    %v2079 = vrcp.pop %v1901
    %v2080 = vrcp.pop %v1902
    %v2081 = vrcp.pop %v1903
    %v2082 = vrcp.pop %v1904
    %v2083 = vmul.f32 %v2075, %v2079
    %v2084 = vmul.f32 %v2076, %v2080
    %v2085 = vmul.f32 %v2077, %v2081
    %v2086 = vmul.f32 %v2078, %v2082
    %2091 = vrot.lane.b32.xlu0 %v2083, 24
    %v2092 = vpop.permute.xlu0 %2091
    %2093 = vrot.lane.b32.xlu0 %v2084, 24
    %v2094 = vpop.permute.xlu0 %2093
    %2095 = vrot.lane.b32.xlu0 %v2085, 24
    %v2096 = vpop.permute.xlu0 %2095
    %2097 = vrot.lane.b32.xlu0 %v2086, 24
    %v2098 = vpop.permute.xlu0 %2097
    %vm2103 = vcmask 261312
    %2104 = vst.msk [vmem:[#allocation5] sm:$0xff] %vm2103, %v2092
    %2105 = vst.msk [vmem:[#allocation5 + $0x8] sm:$0xff] %vm2103, %v2094
    %2106 = vst.msk [vmem:[#allocation5 + $0x10] sm:$0xff] %vm2103, %v2096
    %2107 = vst.msk [vmem:[#allocation5 + $0x18] sm:$0xff] %vm2103, %v2098
    %v2108 = vld [vmem:[#allocation5] sm:$0xff]
    %v2109 = vld [vmem:[#allocation5 + $0x8] sm:$0xff]
    %v2110 = vld [vmem:[#allocation5 + $0x10] sm:$0xff]
    %v2111 = vld [vmem:[#allocation5 + $0x18] sm:$0xff]
    %v2112 = vld [vmem:[#allocation17] sm:$0xff]
    %v2113 = vld [vmem:[#allocation17 + $0x8] sm:$0xff]
    %v2114 = vld [vmem:[#allocation17 + $0x10] sm:$0xff]
    %v2115 = vld [vmem:[#allocation17 + $0x18] sm:$0xff]
    %v2116 = vld [vmem:[#allocation18] sm:$0x1]
    %v2118 = vlaneseq
    %v2119 = vshrl.u32 %v2118, 7
    %v2120 = vsub.s32 0, %v2119
    %v2121 = vrot.slane %v2116, %v2120
    %v2124 = vsel %vm150, %v2108, 0
    %v2127 = vsel %vm150, %v2109, 0
    %v2130 = vsel %vm150, %v2110, 0
    %v2133 = vsel %vm150, %v2111, 0
    %2135 = vmatprep.subr.mxu0 0.0
    %2136 = vmatpush1.msra.mxu0 %v2112
    %2137 = vmatprep.subr.mxu0 0.0
    %2138 = vmatpush1.msra.mxu0 %v2113
    %2139 = vmatprep.subr.mxu0 0.0
    %2140 = vmatpush1.msra.mxu0 %v2114
    %2141 = vmatprep.subr.mxu0 0.0
    %2142 = vmatpush1.msra.mxu0 %v2115
    %2143 = vmatprep.subr.mxu0 0.0
    %2144 = vmatpush1.msra.mxu0 0.0
    %2145 = vmatprep.subr.mxu0 0.0
    %2146 = vmatpush1.msra.mxu0 0.0
    %2147 = vmatprep.subr.mxu0 0.0
    %2148 = vmatpush1.msra.mxu0 0.0
    %2149 = vmatprep.subr.mxu0 0.0
    %2150 = vmatpush1.msra.mxu0 0.0
    %2151 = vmatprep.subr.mxu0 0.0
    %2152 = vmatpush1.msra.mxu0 0.0
    %2153 = vmatprep.subr.mxu0 0.0
    %2154 = vmatpush1.msra.mxu0 0.0
    %2155 = vmatprep.subr.mxu0 0.0
    %2156 = vmatpush1.msra.mxu0 0.0
    %2157 = vmatprep.subr.mxu0 0.0
    %2158 = vmatpush1.msra.mxu0 0.0
    %2159 = vmatprep.subr.mxu0 0.0
    %2160 = vmatpush1.msra.mxu0 0.0
    %2161 = vmatprep.subr.mxu0 0.0
    %2162 = vmatpush1.msra.mxu0 0.0
    %2163 = vmatprep.subr.mxu0 0.0
    %2164 = vmatpush1.msra.mxu0 0.0
    %2165 = vmatprep.subr.mxu0 0.0
    %2166 = vmatpush1.msra.mxu0 0.0
    %2167 = vmatprep.subr.mxu0 0.0
    %2168 = vmatpush1.msra.mxu0 0.0
    %2169 = vmatprep.subr.mxu0 0.0
    %2170 = vmatpush1.msra.mxu0 0.0
    %2171 = vmatprep.subr.mxu0 0.0
    %2172 = vmatpush1.msra.mxu0 0.0
    %2173 = vmatprep.subr.mxu0 0.0
    %2174 = vmatpush1.msra.mxu0 0.0
    %2175 = vmatprep.subr.mxu0 0.0
    %2176 = vmatpush1.msra.mxu0 0.0
    %2177 = vmatprep.subr.mxu0 0.0
    %2178 = vmatpush1.msra.mxu0 0.0
    %2179 = vmatprep.subr.mxu0 0.0
    %2180 = vmatpush1.msra.mxu0 0.0
    %2181 = vmatprep.subr.mxu0 0.0
    %2182 = vmatpush1.msra.mxu0 0.0
    %2183 = vmatprep.subr.mxu0 0.0
    %2184 = vmatpush1.msra.mxu0 0.0
    %2185 = vmatprep.subr.mxu0 0.0
    %2186 = vmatpush1.msra.mxu0 0.0
    %2187 = vmatprep.subr.mxu0 0.0
    %2188 = vmatpush1.msra.mxu0 0.0
    %2189 = vmatprep.subr.mxu0 0.0
    %2190 = vmatpush1.msra.mxu0 0.0
    %2191 = vmatprep.subr.mxu0 0.0
    %2192 = vmatpush1.msra.mxu0 0.0
    %2193 = vmatprep.subr.mxu0 0.0
    %2194 = vmatpush1.msra.mxu0 0.0
    %2195 = vmatprep.subr.mxu0 0.0
    %2196 = vmatpush1.msra.mxu0 0.0
    %2197 = vmatprep.subr.mxu0 0.0
    %2198 = vmatpush1.msra.mxu0 0.0
    %2199 = vmatprep.mubr.f32.mxu0 0.0
    %2200 = vmatmul.mubr.f32.gmra.mrb[0].mxu0 %v2124
    %v2201 = vpop.f32.mrb[0].mxu0
    %v2202 = vadd.f32 %v2121, %v2201
    %v2203 = vpop.f32.mrb[0].mxu0
    %2204 = vmatprep.mubr.f32.mxu0 0.0
    %2205 = vmatmul.mubr.f32.gmra.mrb[0].mxu0 %v2127
    %v2206 = vpop.f32.mrb[0].mxu0
    %v2207 = vadd.f32 %v2121, %v2206
    %v2208 = vpop.f32.mrb[0].mxu0
    %2209 = vmatprep.mubr.f32.mxu0 0.0
    %2210 = vmatmul.mubr.f32.gmra.mrb[0].mxu0 %v2130
    %v2211 = vpop.f32.mrb[0].mxu0
    %v2212 = vadd.f32 %v2121, %v2211
    %v2213 = vpop.f32.mrb[0].mxu0
    %2214 = vmatprep.mubr.f32.mxu0 0.0
    %2215 = vmatmul.mubr.f32.gmra.mrb[0].mxu0 %v2133
    %v2216 = vpop.f32.mrb[0].mxu0
    %v2217 = vadd.f32 %v2121, %v2216
    %v2218 = vpop.f32.mrb[0].mxu0
    %2219 = vdwg.mxu0
    %2220 = vst.msk [vmem:[#allocation20] sm:$0xff] %vm150, %v2202
    %2221 = vst.msk [vmem:[#allocation20 + $0x8] sm:$0xff] %vm150, %v2207
    %2222 = vst.msk [vmem:[#allocation20 + $0x10] sm:$0xff] %vm150, %v2212
    %2223 = vst.msk [vmem:[#allocation20 + $0x18] sm:$0xff] %vm150, %v2217
    // Predicated region
    $region66: #{tpu_custom_call.1} parent=1 // pred_check
      _
    $region67: #{tpu_custom_call.1} parent=1 // pred_check_branch
      %2225 = sbr.rel (0) target = $region69
    $region68: #{tpu_custom_call.1} parent=1 // pred_region
      %s2227 = ssub.s32 512, 512
      %2228 = vsyncadd [#allocation8], %s2227
      %s2229 = sshll.u32 [#allocation20], 4
      %s2230 = int_to_ptr.vmem [resolvable:$true] %s2229
      %2235 = dma.vmem_to_hbm [thread:$0]  %s2230, 512, %s8, [#allocation8], 128, 128, 8
    $region69: #{tpu_custom_call.1} parent=1 // pred_fallthru
      _
    // Predicated region
    $region70: #{tpu_custom_call.1} parent=1 // pred_check
      _
    $region71: #{tpu_custom_call.1} parent=1 // pred_check_branch
      %2237 = sbr.rel (0) target = $region73
    $region72: #{tpu_custom_call.1} parent=1 // pred_region
      %2238 = dma.done [#allocation8], 512
    $region73: #{tpu_custom_call.1} parent=1 // pred_fallthru
      _
    %2239 = vsyncpa [#allocation7], 1
    %2240 = vsyncpa [#allocation10], 1
    %2241 = vsyncpa [#allocation13], 1
    %2242 = vsyncpa [#allocation16], 1
    %2243 = vsyncpa [#allocation19], 1
    %2244 = vsyncpa [#allocation8], 1

</llo_original>
